<compile_context>
chip_gen: v6e
topology: v6e:2x2x1
jax: 0.10.0
libtpu: 0.0.40
codegen_flags: <defaults>
</compile_context>

<pallas_src>
import jax
import jax.numpy as jnp
from jax.experimental import pallas as pl
from jax.experimental.pallas import tpu as pltpu

# ----------------------- configuration (mirrors myxLSTM.__init__) -----------------------
NUM_CLASSES = 5
NUM_CHANNELS = 4       # input leads / channels
PATCH_SIZE = 4         # config.patch_size
EMB = 32               # config.embedding_size
NUM_BLOCKS = 2         # config.xlstm_config -> number of xLSTM blocks
SEQ_LEN = 16           # raw signal length per segment -> 4 patches each
BATCH = 2
NP = SEQ_LEN // PATCH_SIZE        # patches per segment
S = 2 * NP + 2                    # [ctx patches | sep | x patches | cls]
HID = EMB // 2
FUSED_W = 256                     # lane-padded fused projection width
# fused weight column layout: [q 0:E | k E:2E | v 2E:3E | og 3E:4E | ig 4E | fg 4E+1 | pad]


# ------------------------------------ fused Pallas kernel ------------------------------------
def _fused_forward_kernel(patches_ref, pw_ref, pb_ref, sep_ref, cls_ref,
                          lng_ref, lnb_ref, wfused_ref, bfused_ref, wp_ref,
                          hw1_ref, hb1_ref, hw2_ref, hb2_ref,
                          o_logits_ref, o_cls_ref,
                          xbuf, hbuf, clsbuf):
    f32 = jnp.float32
    B, Np, E, NB = BATCH, NP, EMB, NUM_BLOCKS

    # ---- patch embedding: one (2*B*Np, P*C) @ (P*C, E) matmul for ctx AND x ----
    emb = jnp.dot(patches_ref[...], pw_ref[...], preferred_element_type=f32) + pb_ref[...]

    # ---- assemble token sequence directly into the residual-stream VMEM scratch ----
    sep = sep_ref[...]   # (1, E)
    cls = cls_ref[...]   # (1, E)
    for b in range(B):
        base = b * S
        xbuf[base:base + Np, :] = emb[b * Np:(b + 1) * Np]
        xbuf[base + Np:base + Np + 1, :] = sep
        xbuf[base + Np + 1:base + 2 * Np + 1, :] = emb[B * Np + b * Np:B * Np + (b + 1) * Np]
        xbuf[base + S - 1:base + S, :] = cls

    # ---- causal mask: built once, reused by every block and every batch row ----
    t_idx = jax.lax.broadcasted_iota(jnp.int32, (S, S), 0)
    s_idx = jax.lax.broadcasted_iota(jnp.int32, (S, S), 1)
    causal = s_idx <= t_idx
    inv_sqrt_e = float(E) ** -0.5

    # ---- simplified mLSTM blocks (unrolled; residual stream stays in VMEM) ----
    for blk in range(NB):
        lng = lng_ref[blk]          # (1, E)
        lnb = lnb_ref[blk]          # (1, E)
        wfu = wfused_ref[blk]       # (E, 256)
        bfu = bfused_ref[blk]       # (1, 256)
        wp = wp_ref[blk]            # (E, E)

        xf = xbuf[...]              # (B*S, E)

        # pre-LayerNorm over the flattened batch of tokens
        mu = jnp.mean(xf, axis=-1, keepdims=True)
        var = jnp.mean(jnp.square(xf - mu), axis=-1, keepdims=True)
        xn = (xf - mu) * jax.lax.rsqrt(var + 1e-6) * lng + lnb

        # single fused lane-dense projection: q | k | v | og | ig | fg
        proj = jnp.dot(xn, wfu, preferred_element_type=f32) + bfu     # (B*S, 256)
        q = proj[:, 0:E]
        k = proj[:, E:2 * E] * inv_sqrt_e
        v = proj[:, 2 * E:3 * E]
        og = jax.nn.sigmoid(proj[:, 3 * E:4 * E])
        ig = proj[:, 4 * E:4 * E + 1]
        logf = jax.nn.log_sigmoid(proj[:, 4 * E + 1:4 * E + 2])       # (B*S, 1)

        # per-batch (S,S) stabilized gated linear attention (B tiny & static -> unrolled)
        for b in range(B):
            sl = slice(b * S, (b + 1) * S)
            qb, kb, vb = q[sl], k[sl], v[sl]
            igb, logfb = ig[sl], logf[sl]
            fcum = jnp.sum(jnp.where(causal, logfb.T, 0.0), axis=-1, keepdims=True)  # (S,1)
            dtilde = jnp.where(causal, fcum - fcum.T + igb.T, -1e30)                 # (S,S)
            m = jnp.max(dtilde, axis=-1, keepdims=True)
            dmat = jnp.exp(dtilde - m)
            scores = jnp.dot(qb, kb.T, preferred_element_type=f32) * dmat
            denom = jnp.maximum(jnp.abs(jnp.sum(scores, axis=-1, keepdims=True)),
                                jnp.exp(-m))
            hb = jnp.dot(scores * pl.reciprocal(denom, approx=True), vb,
                         preferred_element_type=f32)                                 # (S,E)
            hbuf[sl, :] = hb

        # output gate, output projection, residual (one (B*S,E)@(E,E) matmul)
        h = hbuf[...]
        xbuf[...] = xf + jnp.dot(h * og, wp, preferred_element_type=f32)

    # ---- gather cls token (last position of each batch row) ----
    for b in range(B):
        clsbuf[b:b + 1, :] = xbuf[b * S + S - 1:b * S + S, :]
    cls_emb = clsbuf[...]                                             # (B, E)

    # ---- classification head: Linear -> GELU -> Linear ----
    hh = jnp.dot(cls_emb, hw1_ref[...], preferred_element_type=f32) + hb1_ref[...]
    hh = jax.nn.gelu(hh, approximate=True)
    logits = jnp.dot(hh, hw2_ref[...], preferred_element_type=f32) + hb2_ref[...]

    o_logits_ref[...] = logits
    o_cls_ref[...] = cls_emb


# ------------------------------------ wrapper ------------------------------------
@jax.jit
def forward(ctx_sig, x_sig, params):
    """myxLSTM.forward(ctx, x, tab_data=None) -> (logits, cls_token)."""
    B, L, C = ctx_sig.shape
    Np = L // PATCH_SIZE
    ctx_p = ctx_sig.reshape(B * Np, PATCH_SIZE * C)
    x_p = x_sig.reshape(B * Np, PATCH_SIZE * C)
    patches = jnp.concatenate([ctx_p, x_p], axis=0)       # (2*B*Np, P*C)

    logits, cls_emb = pl.pallas_call(
        _fused_forward_kernel,
        out_shape=(jax.ShapeDtypeStruct((B, NUM_CLASSES), jnp.float32),
                   jax.ShapeDtypeStruct((B, EMB), jnp.float32)),
        scratch_shapes=[
            pltpu.VMEM((B * S, EMB), jnp.float32),   # residual stream
            pltpu.VMEM((B * S, EMB), jnp.float32),   # attention output assembly
            pltpu.VMEM((B, EMB), jnp.float32),       # cls gather
        ],
    )(patches,
      params["patch_w"], params["patch_b"],
      params["sep_token"], params["cls_token"],
      params["blk_ln_g"], params["blk_ln_b"],
      params["blk_w_fused"], params["blk_b_fused"], params["blk_wp"],
      params["head_w1"], params["head_b1"], params["head_w2"], params["head_b2"])
    return logits, cls_emb


# ------------------------------------ parameter init ------------------------------------
def init_params(key):
    ks = jax.random.split(key, 8 + NUM_BLOCKS)

    def nrm(k, shape, scale):
        return jax.random.normal(k, shape, jnp.float32) * scale

    p = {
        "patch_w": nrm(ks[0], (PATCH_SIZE * NUM_CHANNELS, EMB), 0.1),
        "patch_b": jnp.zeros((1, EMB), jnp.float32),
        "sep_token": jax.random.normal(ks[1], (1, EMB), jnp.float32),
        "cls_token": jax.random.normal(ks[2], (1, EMB), jnp.float32),
        "head_w1": nrm(ks[3], (EMB, HID), 0.1),
        "head_b1": jnp.zeros((1, HID), jnp.float32),
        "head_w2": nrm(ks[4], (HID, NUM_CLASSES), 0.1),
        "head_b2": jnp.zeros((1, NUM_CLASSES), jnp.float32),
    }

    ln_g, ln_b, w_fused, b_fused, wp = [], [], [], [], []
    for i in range(NUM_BLOCKS):
        bk = jax.random.split(ks[5 + i], 7)
        wq = nrm(bk[0], (EMB, EMB), 0.05)
        wk = nrm(bk[1], (EMB, EMB), 0.05)
        wv = nrm(bk[2], (EMB, EMB), 0.05)
        wo = nrm(bk[3], (EMB, EMB), 0.05)
        wi = nrm(bk[4], (EMB, 1), 0.05)
        wf = nrm(bk[5], (EMB, 1), 0.05)

        wfu = jnp.zeros((EMB, FUSED_W), jnp.float32)
        wfu = wfu.at[:, 0:EMB].set(wq)
        wfu = wfu.at[:, EMB:2 * EMB].set(wk)
        wfu = wfu.at[:, 2 * EMB:3 * EMB].set(wv)
        wfu = wfu.at[:, 3 * EMB:4 * EMB].set(wo)
        wfu = wfu.at[:, 4 * EMB:4 * EMB + 1].set(wi)
        wfu = wfu.at[:, 4 * EMB + 1:4 * EMB + 2].set(wf)

        bfu = jnp.zeros((1, FUSED_W), jnp.float32)
        bfu = bfu.at[0, 4 * EMB + 1].set(2.0)     # positive forget-gate bias

        ln_g.append(jnp.ones((1, EMB), jnp.float32))
        ln_b.append(jnp.zeros((1, EMB), jnp.float32))
        w_fused.append(wfu)
        b_fused.append(bfu)
        wp.append(nrm(bk[6], (EMB, EMB), 0.05))

    p["blk_ln_g"] = jnp.stack(ln_g)        # (NB, 1, E)
    p["blk_ln_b"] = jnp.stack(ln_b)        # (NB, 1, E)
    p["blk_w_fused"] = jnp.stack(w_fused)  # (NB, E, 256)
    p["blk_b_fused"] = jnp.stack(b_fused)  # (NB, 1, 256)
    p["blk_wp"] = jnp.stack(wp)            # (NB, E, E)
    return p


# ------------------------------------ main ------------------------------------
if __name__ == "__main__":
    key = jax.random.PRNGKey(0)
    kp, kc, kx = jax.random.split(key, 3)
    params = init_params(kp)

    ctx_sig = jax.random.normal(kc, (BATCH, SEQ_LEN, NUM_CHANNELS), jnp.float32)
    x_sig = jax.random.normal(kx, (BATCH, SEQ_LEN, NUM_CHANNELS), jnp.float32)

    logits, cls_emb = forward(ctx_sig, x_sig, params)
    jax.block_until_ready((logits, cls_emb))

    assert logits.shape == (BATCH, NUM_CLASSES)
    assert cls_emb.shape == (BATCH, EMB)
    assert bool(jnp.all(jnp.isfinite(logits)))
    assert bool(jnp.all(jnp.isfinite(cls_emb)))
    print("KERNEL_OK")
</pallas_src>

<mosaic_0001>
module attributes {stable_mosaic.version = 11 : i64} {
  func.func @_fused_forward_kernel(%arg0: memref<16x16xf32, #tpu.memory_space<vmem>>, %arg1: memref<16x32xf32, #tpu.memory_space<vmem>>, %arg2: memref<1x32xf32, #tpu.memory_space<vmem>>, %arg3: memref<1x32xf32, #tpu.memory_space<vmem>>, %arg4: memref<1x32xf32, #tpu.memory_space<vmem>>, %arg5: memref<2x1x32xf32, #tpu.memory_space<vmem>>, %arg6: memref<2x1x32xf32, #tpu.memory_space<vmem>>, %arg7: memref<2x32x256xf32, #tpu.memory_space<vmem>>, %arg8: memref<2x1x256xf32, #tpu.memory_space<vmem>>, %arg9: memref<2x32x32xf32, #tpu.memory_space<vmem>>, %arg10: memref<32x16xf32, #tpu.memory_space<vmem>>, %arg11: memref<1x16xf32, #tpu.memory_space<vmem>>, %arg12: memref<16x5xf32, #tpu.memory_space<vmem>>, %arg13: memref<1x5xf32, #tpu.memory_space<vmem>>, %arg14: memref<2x5xf32, #tpu.memory_space<vmem>>, %arg15: memref<2x32xf32, #tpu.memory_space<vmem>>, %arg16: memref<20x32xf32, #tpu.memory_space<vmem>>, %arg17: memref<20x32xf32, #tpu.memory_space<vmem>>, %arg18: memref<2x32xf32, #tpu.memory_space<vmem>>) attributes {dimension_semantics = [], scalar_prefetch = 0 : i64, scratch_operands = 3 : i64, tpu.core_type = #tpu.core_type<tc>} {
    %c0 = arith.constant 0 : index
    %c0_0 = arith.constant 0 : index
    %0 = vector.load %arg0[%c0, %c0_0] : memref<16x16xf32, #tpu.memory_space<vmem>>, vector<16x16xf32>
    %c0_1 = arith.constant 0 : index
    %c0_2 = arith.constant 0 : index
    %1 = vector.load %arg1[%c0_1, %c0_2] : memref<16x32xf32, #tpu.memory_space<vmem>>, vector<16x32xf32>
    %cst = arith.constant dense<0.000000e+00> : vector<16x32xf32>
    %2 = tpu.matmul %0, %1, %cst {dimension_numbers = #tpu.dot_dimension_numbers<[1], [0], [0], [1], [0, 0, 1, 1], [], []>} : vector<16x16xf32>, vector<16x32xf32>, vector<16x32xf32> -> vector<16x32xf32>
    %c0_3 = arith.constant 0 : index
    %c0_4 = arith.constant 0 : index
    %3 = vector.load %arg2[%c0_3, %c0_4] : memref<1x32xf32, #tpu.memory_space<vmem>>, vector<1x32xf32>
    %4 = vector.broadcast %3 : vector<1x32xf32> to vector<16x32xf32>
    %5 = arith.addf %2, %4 : vector<16x32xf32>
    %c0_5 = arith.constant 0 : index
    %c0_6 = arith.constant 0 : index
    %6 = vector.load %arg3[%c0_5, %c0_6] : memref<1x32xf32, #tpu.memory_space<vmem>>, vector<1x32xf32>
    %c0_7 = arith.constant 0 : index
    %c0_8 = arith.constant 0 : index
    %7 = vector.load %arg4[%c0_7, %c0_8] : memref<1x32xf32, #tpu.memory_space<vmem>>, vector<1x32xf32>
    %8 = vector.extract_strided_slice %5 {offsets = [0, 0], sizes = [4, 32], strides = [1, 1]} : vector<16x32xf32> to vector<4x32xf32>
    %c0_9 = arith.constant 0 : index
    %c0_10 = arith.constant 0 : index
    %9 = vector.load %arg16[%c0_9, %c0_10] : memref<20x32xf32, #tpu.memory_space<vmem>>, vector<4x32xf32>
    tpu.vector_store %arg16[%c0_9, %c0_10], %8 {strides = array<i32>} : memref<20x32xf32, #tpu.memory_space<vmem>>, vector<4x32xf32>,
    %c4 = arith.constant 4 : index
    %c0_11 = arith.constant 0 : index
    %10 = vector.load %arg16[%c4, %c0_11] : memref<20x32xf32, #tpu.memory_space<vmem>>, vector<1x32xf32>
    tpu.vector_store %arg16[%c4, %c0_11], %6 {strides = array<i32>} : memref<20x32xf32, #tpu.memory_space<vmem>>, vector<1x32xf32>,
    %11 = vector.extract_strided_slice %5 {offsets = [8, 0], sizes = [4, 32], strides = [1, 1]} : vector<16x32xf32> to vector<4x32xf32>
    %c5 = arith.constant 5 : index
    %c0_12 = arith.constant 0 : index
    %12 = vector.load %arg16[%c5, %c0_12] : memref<20x32xf32, #tpu.memory_space<vmem>>, vector<4x32xf32>
    tpu.vector_store %arg16[%c5, %c0_12], %11 {strides = array<i32>} : memref<20x32xf32, #tpu.memory_space<vmem>>, vector<4x32xf32>,
    %c9 = arith.constant 9 : index
    %c0_13 = arith.constant 0 : index
    %13 = vector.load %arg16[%c9, %c0_13] : memref<20x32xf32, #tpu.memory_space<vmem>>, vector<1x32xf32>
    tpu.vector_store %arg16[%c9, %c0_13], %7 {strides = array<i32>} : memref<20x32xf32, #tpu.memory_space<vmem>>, vector<1x32xf32>,
    %14 = vector.extract_strided_slice %5 {offsets = [4, 0], sizes = [4, 32], strides = [1, 1]} : vector<16x32xf32> to vector<4x32xf32>
    %c10 = arith.constant 10 : index
    %c0_14 = arith.constant 0 : index
    %15 = vector.load %arg16[%c10, %c0_14] : memref<20x32xf32, #tpu.memory_space<vmem>>, vector<4x32xf32>
    tpu.vector_store %arg16[%c10, %c0_14], %14 {strides = array<i32>} : memref<20x32xf32, #tpu.memory_space<vmem>>, vector<4x32xf32>,
    %c14 = arith.constant 14 : index
    %c0_15 = arith.constant 0 : index
    %16 = vector.load %arg16[%c14, %c0_15] : memref<20x32xf32, #tpu.memory_space<vmem>>, vector<1x32xf32>
    tpu.vector_store %arg16[%c14, %c0_15], %6 {strides = array<i32>} : memref<20x32xf32, #tpu.memory_space<vmem>>, vector<1x32xf32>,
    %17 = vector.extract_strided_slice %5 {offsets = [12, 0], sizes = [4, 32], strides = [1, 1]} : vector<16x32xf32> to vector<4x32xf32>
    %c15 = arith.constant 15 : index
    %c0_16 = arith.constant 0 : index
    %18 = vector.load %arg16[%c15, %c0_16] : memref<20x32xf32, #tpu.memory_space<vmem>>, vector<4x32xf32>
    tpu.vector_store %arg16[%c15, %c0_16], %17 {strides = array<i32>} : memref<20x32xf32, #tpu.memory_space<vmem>>, vector<4x32xf32>,
    %c19 = arith.constant 19 : index
    %c0_17 = arith.constant 0 : index
    %19 = vector.load %arg16[%c19, %c0_17] : memref<20x32xf32, #tpu.memory_space<vmem>>, vector<1x32xf32>
    tpu.vector_store %arg16[%c19, %c0_17], %7 {strides = array<i32>} : memref<20x32xf32, #tpu.memory_space<vmem>>, vector<1x32xf32>,
    %20 = tpu.iota {dimensions = array<i32: 0>} : vector<10x10xi32>
    %21 = tpu.iota {dimensions = array<i32: 1>} : vector<10x10xi32>
    %22 = arith.cmpi sle, %21, %20 : vector<10x10xi32>
    %c0_18 = arith.constant 0 : index
    %c0_19 = arith.constant 0 : index
    %c0_20 = arith.constant 0 : index
    %23 = vector.load %arg5[%c0_18, %c0_19, %c0_20] : memref<2x1x32xf32, #tpu.memory_space<vmem>>, vector<1x1x32xf32>
    %24 = vector.shape_cast %23 : vector<1x1x32xf32> to vector<1x32xf32>
    %c0_21 = arith.constant 0 : index
    %c0_22 = arith.constant 0 : index
    %c0_23 = arith.constant 0 : index
    %25 = vector.load %arg6[%c0_21, %c0_22, %c0_23] : memref<2x1x32xf32, #tpu.memory_space<vmem>>, vector<1x1x32xf32>
    %26 = vector.shape_cast %25 : vector<1x1x32xf32> to vector<1x32xf32>
    %c0_24 = arith.constant 0 : index
    %c0_25 = arith.constant 0 : index
    %c0_26 = arith.constant 0 : index
    %27 = vector.load %arg7[%c0_24, %c0_25, %c0_26] : memref<2x32x256xf32, #tpu.memory_space<vmem>>, vector<1x32x256xf32>
    %28 = vector.shape_cast %27 : vector<1x32x256xf32> to vector<32x256xf32>
    %c0_27 = arith.constant 0 : index
    %c0_28 = arith.constant 0 : index
    %c0_29 = arith.constant 0 : index
    %29 = vector.load %arg8[%c0_27, %c0_28, %c0_29] : memref<2x1x256xf32, #tpu.memory_space<vmem>>, vector<1x1x256xf32>
    %30 = vector.shape_cast %29 : vector<1x1x256xf32> to vector<1x256xf32>
    %c0_30 = arith.constant 0 : index
    %c0_31 = arith.constant 0 : index
    %c0_32 = arith.constant 0 : index
    %31 = vector.load %arg9[%c0_30, %c0_31, %c0_32] : memref<2x32x32xf32, #tpu.memory_space<vmem>>, vector<1x32x32xf32>
    %32 = vector.shape_cast %31 : vector<1x32x32xf32> to vector<32x32xf32>
    %c0_33 = arith.constant 0 : index
    %c0_34 = arith.constant 0 : index
    %33 = vector.load %arg16[%c0_33, %c0_34] : memref<20x32xf32, #tpu.memory_space<vmem>>, vector<20x32xf32>
    %cst_35 = arith.constant dense<0.000000e+00> : vector<20xf32>
    %34 = vector.multi_reduction <add>, %33, %cst_35 [1] : vector<20x32xf32> to vector<20xf32>
    %35 = vector.shape_cast %34 : vector<20xf32> to vector<20x1xf32>
    %cst_36 = arith.constant 3.200000e+01 : f32
    %36 = vector.broadcast %cst_36 : f32 to vector<20x1xf32>
    %37 = arith.divf %35, %36 : vector<20x1xf32>
    %38 = vector.broadcast %37 : vector<20x1xf32> to vector<20x32xf32>
    %39 = arith.subf %33, %38 : vector<20x32xf32>
    %40 = arith.mulf %39, %39 : vector<20x32xf32>
    %cst_37 = arith.constant dense<0.000000e+00> : vector<20xf32>
    %41 = vector.multi_reduction <add>, %40, %cst_37 [1] : vector<20x32xf32> to vector<20xf32>
    %42 = vector.shape_cast %41 : vector<20xf32> to vector<20x1xf32>
    %cst_38 = arith.constant 3.200000e+01 : f32
    %43 = vector.broadcast %cst_38 : f32 to vector<20x1xf32>
    %44 = arith.divf %42, %43 : vector<20x1xf32>
    %45 = vector.broadcast %37 : vector<20x1xf32> to vector<20x32xf32>
    %46 = arith.subf %33, %45 : vector<20x32xf32>
    %cst_39 = arith.constant 9.99999997E-7 : f32
    %47 = vector.broadcast %cst_39 : f32 to vector<20x1xf32>
    %48 = arith.addf %44, %47 : vector<20x1xf32>
    %49 = math.rsqrt %48 : vector<20x1xf32>
    %50 = vector.broadcast %49 : vector<20x1xf32> to vector<20x32xf32>
    %51 = arith.mulf %46, %50 : vector<20x32xf32>
    %52 = vector.broadcast %24 : vector<1x32xf32> to vector<20x32xf32>
    %53 = arith.mulf %51, %52 : vector<20x32xf32>
    %54 = vector.broadcast %26 : vector<1x32xf32> to vector<20x32xf32>
    %55 = arith.addf %53, %54 : vector<20x32xf32>
    %cst_40 = arith.constant dense<0.000000e+00> : vector<20x256xf32>
    %56 = tpu.matmul %55, %28, %cst_40 {dimension_numbers = #tpu.dot_dimension_numbers<[1], [0], [0], [1], [0, 0, 1, 1], [], []>} : vector<20x32xf32>, vector<32x256xf32>, vector<20x256xf32> -> vector<20x256xf32>
    %57 = vector.broadcast %30 : vector<1x256xf32> to vector<20x256xf32>
    %58 = arith.addf %56, %57 : vector<20x256xf32>
    %59 = vector.extract_strided_slice %58 {offsets = [0, 0], sizes = [20, 32], strides = [1, 1]} : vector<20x256xf32> to vector<20x32xf32>
    %60 = vector.extract_strided_slice %58 {offsets = [0, 32], sizes = [20, 32], strides = [1, 1]} : vector<20x256xf32> to vector<20x32xf32>
    %cst_41 = arith.constant 0.176776692 : f32
    %61 = vector.broadcast %cst_41 : f32 to vector<20x32xf32>
    %62 = arith.mulf %60, %61 : vector<20x32xf32>
    %63 = vector.extract_strided_slice %58 {offsets = [0, 64], sizes = [20, 32], strides = [1, 1]} : vector<20x256xf32> to vector<20x32xf32>
    %64 = vector.extract_strided_slice %58 {offsets = [0, 96], sizes = [20, 32], strides = [1, 1]} : vector<20x256xf32> to vector<20x32xf32>
    %65 = arith.negf %64 : vector<20x32xf32>
    %66 = math.exp %65 : vector<20x32xf32>
    %cst_42 = arith.constant 1.000000e+00 : f32
    %67 = vector.broadcast %cst_42 : f32 to vector<20x32xf32>
    %68 = arith.addf %67, %66 : vector<20x32xf32>
    %69 = arith.divf %67, %68 : vector<20x32xf32>
    %70 = vector.extract_strided_slice %58 {offsets = [0, 128], sizes = [20, 1], strides = [1, 1]} : vector<20x256xf32> to vector<20x1xf32>
    %71 = vector.extract_strided_slice %58 {offsets = [0, 129], sizes = [20, 1], strides = [1, 1]} : vector<20x256xf32> to vector<20x1xf32>
    %cst_43 = arith.constant 0.000000e+00 : f32
    %72 = vector.broadcast %cst_43 : f32 to vector<20x1xf32>
    %73 = arith.subf %72, %71 : vector<20x1xf32>
    %cst_44 = arith.constant 0.000000e+00 : f32
    %74 = vector.broadcast %cst_44 : f32 to vector<20x1xf32>
    %75 = arith.maximumf %73, %74 : vector<20x1xf32>
    %76 = vector.broadcast %cst_44 : f32 to vector<20x1xf32>
    %77 = arith.subf %73, %76 : vector<20x1xf32>
    %78 = arith.cmpf one, %77, %77 : vector<20x1xf32>
    %79 = vector.broadcast %cst_44 : f32 to vector<20x1xf32>
    %80 = arith.addf %73, %79 : vector<20x1xf32>
    %81 = math.absf %77 : vector<20x1xf32>
    %cst_45 = arith.constant 0.000000e+00 : f32
    %82 = vector.broadcast %cst_45 : f32 to vector<20x1xf32>
    %83 = arith.subf %82, %81 : vector<20x1xf32>
    %84 = math.exp %83 : vector<20x1xf32>
    %85 = math.log1p %84 : vector<20x1xf32>
    %86 = arith.addf %75, %85 : vector<20x1xf32>
    %87 = arith.select %78, %80, %86 : vector<20x1xi1>, vector<20x1xf32>
    %cst_46 = arith.constant 0.000000e+00 : f32
    %88 = vector.broadcast %cst_46 : f32 to vector<20x1xf32>
    %89 = arith.subf %88, %87 : vector<20x1xf32>
    %90 = vector.extract_strided_slice %59 {offsets = [0, 0], sizes = [10, 32], strides = [1, 1]} : vector<20x32xf32> to vector<10x32xf32>
    %91 = vector.extract_strided_slice %62 {offsets = [0, 0], sizes = [10, 32], strides = [1, 1]} : vector<20x32xf32> to vector<10x32xf32>
    %92 = vector.extract_strided_slice %63 {offsets = [0, 0], sizes = [10, 32], strides = [1, 1]} : vector<20x32xf32> to vector<10x32xf32>
    %93 = vector.extract_strided_slice %70 {offsets = [0, 0], sizes = [10, 1], strides = [1, 1]} : vector<20x1xf32> to vector<10x1xf32>
    %94 = vector.extract_strided_slice %89 {offsets = [0, 0], sizes = [10, 1], strides = [1, 1]} : vector<20x1xf32> to vector<10x1xf32>
    %95 = tpu.transpose %94, [1, 0] : vector<10x1xf32> -> vector<1x10xf32>
    %cst_47 = arith.constant 0.000000e+00 : f32
    %96 = vector.shape_cast %95 : vector<1x10xf32> to vector<1x10xf32>
    %97 = vector.broadcast %96 : vector<1x10xf32> to vector<10x10xf32>
    %98 = vector.broadcast %cst_47 : f32 to vector<10x10xf32>
    %99 = arith.select %22, %97, %98 : vector<10x10xi1>, vector<10x10xf32>
    %cst_48 = arith.constant dense<0.000000e+00> : vector<10xf32>
    %100 = vector.multi_reduction <add>, %99, %cst_48 [1] : vector<10x10xf32> to vector<10xf32>
    %101 = vector.shape_cast %100 : vector<10xf32> to vector<10x1xf32>
    %102 = tpu.transpose %101, [1, 0] : vector<10x1xf32> -> vector<1x10xf32>
    %103 = vector.broadcast %101 : vector<10x1xf32> to vector<10x10xf32>
    %104 = vector.broadcast %102 : vector<1x10xf32> to vector<10x10xf32>
    %105 = arith.subf %103, %104 : vector<10x10xf32>
    %106 = tpu.transpose %93, [1, 0] : vector<10x1xf32> -> vector<1x10xf32>
    %107 = vector.broadcast %106 : vector<1x10xf32> to vector<10x10xf32>
    %108 = arith.addf %105, %107 : vector<10x10xf32>
    %cst_49 = arith.constant -1.000000e+30 : f32
    %109 = vector.broadcast %cst_49 : f32 to vector<10x10xf32>
    %110 = arith.select %22, %108, %109 : vector<10x10xi1>, vector<10x10xf32>
    %cst_50 = arith.constant dense<0xFF800000> : vector<10xf32>
    %111 = vector.multi_reduction <maximumf>, %110, %cst_50 [1] : vector<10x10xf32> to vector<10xf32>
    %112 = vector.shape_cast %111 : vector<10xf32> to vector<10x1xf32>
    %113 = vector.broadcast %112 : vector<10x1xf32> to vector<10x10xf32>
    %114 = arith.subf %110, %113 : vector<10x10xf32>
    %115 = math.exp %114 : vector<10x10xf32>
    %116 = tpu.transpose %91, [1, 0] : vector<10x32xf32> -> vector<32x10xf32>
    %cst_51 = arith.constant dense<0.000000e+00> : vector<10x10xf32>
    %117 = tpu.matmul %90, %116, %cst_51 {dimension_numbers = #tpu.dot_dimension_numbers<[1], [0], [0], [1], [0, 0, 1, 1], [], []>} : vector<10x32xf32>, vector<32x10xf32>, vector<10x10xf32> -> vector<10x10xf32>
    %118 = arith.mulf %117, %115 : vector<10x10xf32>
    %cst_52 = arith.constant dense<0.000000e+00> : vector<10xf32>
    %119 = vector.multi_reduction <add>, %118, %cst_52 [1] : vector<10x10xf32> to vector<10xf32>
    %120 = vector.shape_cast %119 : vector<10xf32> to vector<10x1xf32>
    %121 = math.absf %120 : vector<10x1xf32>
    %cst_53 = arith.constant 0.000000e+00 : f32
    %122 = vector.broadcast %cst_53 : f32 to vector<10x1xf32>
    %123 = arith.subf %122, %112 : vector<10x1xf32>
    %124 = math.exp %123 : vector<10x1xf32>
    %125 = arith.maximumf %121, %124 : vector<10x1xf32>
    %126 = tpu.reciprocal %125 {approx = true} : vector<10x1xf32> -> vector<10x1xf32>
    %127 = vector.broadcast %126 : vector<10x1xf32> to vector<10x10xf32>
    %128 = arith.mulf %118, %127 : vector<10x10xf32>
    %cst_54 = arith.constant dense<0.000000e+00> : vector<10x32xf32>
    %129 = tpu.matmul %128, %92, %cst_54 {dimension_numbers = #tpu.dot_dimension_numbers<[1], [0], [0], [1], [0, 0, 1, 1], [], []>} : vector<10x10xf32>, vector<10x32xf32>, vector<10x32xf32> -> vector<10x32xf32>
    %c0_55 = arith.constant 0 : index
    %c0_56 = arith.constant 0 : index
    %130 = vector.load %arg17[%c0_55, %c0_56] : memref<20x32xf32, #tpu.memory_space<vmem>>, vector<10x32xf32>
    tpu.vector_store %arg17[%c0_55, %c0_56], %129 {strides = array<i32>} : memref<20x32xf32, #tpu.memory_space<vmem>>, vector<10x32xf32>,
    %131 = vector.extract_strided_slice %59 {offsets = [10, 0], sizes = [10, 32], strides = [1, 1]} : vector<20x32xf32> to vector<10x32xf32>
    %132 = vector.extract_strided_slice %62 {offsets = [10, 0], sizes = [10, 32], strides = [1, 1]} : vector<20x32xf32> to vector<10x32xf32>
    %133 = vector.extract_strided_slice %63 {offsets = [10, 0], sizes = [10, 32], strides = [1, 1]} : vector<20x32xf32> to vector<10x32xf32>
    %134 = vector.extract_strided_slice %70 {offsets = [10, 0], sizes = [10, 1], strides = [1, 1]} : vector<20x1xf32> to vector<10x1xf32>
    %135 = vector.extract_strided_slice %89 {offsets = [10, 0], sizes = [10, 1], strides = [1, 1]} : vector<20x1xf32> to vector<10x1xf32>
    %136 = tpu.transpose %135, [1, 0] : vector<10x1xf32> -> vector<1x10xf32>
    %cst_57 = arith.constant 0.000000e+00 : f32
    %137 = vector.shape_cast %136 : vector<1x10xf32> to vector<1x10xf32>
    %138 = vector.broadcast %137 : vector<1x10xf32> to vector<10x10xf32>
    %139 = vector.broadcast %cst_57 : f32 to vector<10x10xf32>
    %140 = arith.select %22, %138, %139 : vector<10x10xi1>, vector<10x10xf32>
    %cst_58 = arith.constant dense<0.000000e+00> : vector<10xf32>
    %141 = vector.multi_reduction <add>, %140, %cst_58 [1] : vector<10x10xf32> to vector<10xf32>
    %142 = vector.shape_cast %141 : vector<10xf32> to vector<10x1xf32>
    %143 = tpu.transpose %142, [1, 0] : vector<10x1xf32> -> vector<1x10xf32>
    %144 = vector.broadcast %142 : vector<10x1xf32> to vector<10x10xf32>
    %145 = vector.broadcast %143 : vector<1x10xf32> to vector<10x10xf32>
    %146 = arith.subf %144, %145 : vector<10x10xf32>
    %147 = tpu.transpose %134, [1, 0] : vector<10x1xf32> -> vector<1x10xf32>
    %148 = vector.broadcast %147 : vector<1x10xf32> to vector<10x10xf32>
    %149 = arith.addf %146, %148 : vector<10x10xf32>
    %cst_59 = arith.constant -1.000000e+30 : f32
    %150 = vector.broadcast %cst_59 : f32 to vector<10x10xf32>
    %151 = arith.select %22, %149, %150 : vector<10x10xi1>, vector<10x10xf32>
    %cst_60 = arith.constant dense<0xFF800000> : vector<10xf32>
    %152 = vector.multi_reduction <maximumf>, %151, %cst_60 [1] : vector<10x10xf32> to vector<10xf32>
    %153 = vector.shape_cast %152 : vector<10xf32> to vector<10x1xf32>
    %154 = vector.broadcast %153 : vector<10x1xf32> to vector<10x10xf32>
    %155 = arith.subf %151, %154 : vector<10x10xf32>
    %156 = math.exp %155 : vector<10x10xf32>
    %157 = tpu.transpose %132, [1, 0] : vector<10x32xf32> -> vector<32x10xf32>
    %cst_61 = arith.constant dense<0.000000e+00> : vector<10x10xf32>
    %158 = tpu.matmul %131, %157, %cst_61 {dimension_numbers = #tpu.dot_dimension_numbers<[1], [0], [0], [1], [0, 0, 1, 1], [], []>} : vector<10x32xf32>, vector<32x10xf32>, vector<10x10xf32> -> vector<10x10xf32>
    %159 = arith.mulf %158, %156 : vector<10x10xf32>
    %cst_62 = arith.constant dense<0.000000e+00> : vector<10xf32>
    %160 = vector.multi_reduction <add>, %159, %cst_62 [1] : vector<10x10xf32> to vector<10xf32>
    %161 = vector.shape_cast %160 : vector<10xf32> to vector<10x1xf32>
    %162 = math.absf %161 : vector<10x1xf32>
    %cst_63 = arith.constant 0.000000e+00 : f32
    %163 = vector.broadcast %cst_63 : f32 to vector<10x1xf32>
    %164 = arith.subf %163, %153 : vector<10x1xf32>
    %165 = math.exp %164 : vector<10x1xf32>
    %166 = arith.maximumf %162, %165 : vector<10x1xf32>
    %167 = tpu.reciprocal %166 {approx = true} : vector<10x1xf32> -> vector<10x1xf32>
    %168 = vector.broadcast %167 : vector<10x1xf32> to vector<10x10xf32>
    %169 = arith.mulf %159, %168 : vector<10x10xf32>
    %cst_64 = arith.constant dense<0.000000e+00> : vector<10x32xf32>
    %170 = tpu.matmul %169, %133, %cst_64 {dimension_numbers = #tpu.dot_dimension_numbers<[1], [0], [0], [1], [0, 0, 1, 1], [], []>} : vector<10x10xf32>, vector<10x32xf32>, vector<10x32xf32> -> vector<10x32xf32>
    %c10_65 = arith.constant 10 : index
    %c0_66 = arith.constant 0 : index
    %171 = vector.load %arg17[%c10_65, %c0_66] : memref<20x32xf32, #tpu.memory_space<vmem>>, vector<10x32xf32>
    tpu.vector_store %arg17[%c10_65, %c0_66], %170 {strides = array<i32>} : memref<20x32xf32, #tpu.memory_space<vmem>>, vector<10x32xf32>,
    %c0_67 = arith.constant 0 : index
    %c0_68 = arith.constant 0 : index
    %172 = vector.load %arg17[%c0_67, %c0_68] : memref<20x32xf32, #tpu.memory_space<vmem>>, vector<20x32xf32>
    %173 = arith.mulf %172, %69 : vector<20x32xf32>
    %cst_69 = arith.constant dense<0.000000e+00> : vector<20x32xf32>
    %174 = tpu.matmul %173, %32, %cst_69 {dimension_numbers = #tpu.dot_dimension_numbers<[1], [0], [0], [1], [0, 0, 1, 1], [], []>} : vector<20x32xf32>, vector<32x32xf32>, vector<20x32xf32> -> vector<20x32xf32>
    %175 = arith.addf %33, %174 : vector<20x32xf32>
    %c0_70 = arith.constant 0 : index
    %c0_71 = arith.constant 0 : index
    %176 = vector.load %arg16[%c0_70, %c0_71] : memref<20x32xf32, #tpu.memory_space<vmem>>, vector<20x32xf32>
    tpu.vector_store %arg16[%c0_70, %c0_71], %175 {strides = array<i32>} : memref<20x32xf32, #tpu.memory_space<vmem>>, vector<20x32xf32>,
    %c1 = arith.constant 1 : index
    %c0_72 = arith.constant 0 : index
    %c0_73 = arith.constant 0 : index
    %177 = vector.load %arg5[%c1, %c0_72, %c0_73] : memref<2x1x32xf32, #tpu.memory_space<vmem>>, vector<1x1x32xf32>
    %178 = vector.shape_cast %177 : vector<1x1x32xf32> to vector<1x32xf32>
    %c1_74 = arith.constant 1 : index
    %c0_75 = arith.constant 0 : index
    %c0_76 = arith.constant 0 : index
    %179 = vector.load %arg6[%c1_74, %c0_75, %c0_76] : memref<2x1x32xf32, #tpu.memory_space<vmem>>, vector<1x1x32xf32>
    %180 = vector.shape_cast %179 : vector<1x1x32xf32> to vector<1x32xf32>
    %c1_77 = arith.constant 1 : index
    %c0_78 = arith.constant 0 : index
    %c0_79 = arith.constant 0 : index
    %181 = vector.load %arg7[%c1_77, %c0_78, %c0_79] : memref<2x32x256xf32, #tpu.memory_space<vmem>>, vector<1x32x256xf32>
    %182 = vector.shape_cast %181 : vector<1x32x256xf32> to vector<32x256xf32>
    %c1_80 = arith.constant 1 : index
    %c0_81 = arith.constant 0 : index
    %c0_82 = arith.constant 0 : index
    %183 = vector.load %arg8[%c1_80, %c0_81, %c0_82] : memref<2x1x256xf32, #tpu.memory_space<vmem>>, vector<1x1x256xf32>
    %184 = vector.shape_cast %183 : vector<1x1x256xf32> to vector<1x256xf32>
    %c1_83 = arith.constant 1 : index
    %c0_84 = arith.constant 0 : index
    %c0_85 = arith.constant 0 : index
    %185 = vector.load %arg9[%c1_83, %c0_84, %c0_85] : memref<2x32x32xf32, #tpu.memory_space<vmem>>, vector<1x32x32xf32>
    %186 = vector.shape_cast %185 : vector<1x32x32xf32> to vector<32x32xf32>
    %c0_86 = arith.constant 0 : index
    %c0_87 = arith.constant 0 : index
    %187 = vector.load %arg16[%c0_86, %c0_87] : memref<20x32xf32, #tpu.memory_space<vmem>>, vector<20x32xf32>
    %cst_88 = arith.constant dense<0.000000e+00> : vector<20xf32>
    %188 = vector.multi_reduction <add>, %187, %cst_88 [1] : vector<20x32xf32> to vector<20xf32>
    %189 = vector.shape_cast %188 : vector<20xf32> to vector<20x1xf32>
    %cst_89 = arith.constant 3.200000e+01 : f32
    %190 = vector.broadcast %cst_89 : f32 to vector<20x1xf32>
    %191 = arith.divf %189, %190 : vector<20x1xf32>
    %192 = vector.broadcast %191 : vector<20x1xf32> to vector<20x32xf32>
    %193 = arith.subf %187, %192 : vector<20x32xf32>
    %194 = arith.mulf %193, %193 : vector<20x32xf32>
    %cst_90 = arith.constant dense<0.000000e+00> : vector<20xf32>
    %195 = vector.multi_reduction <add>, %194, %cst_90 [1] : vector<20x32xf32> to vector<20xf32>
    %196 = vector.shape_cast %195 : vector<20xf32> to vector<20x1xf32>
    %cst_91 = arith.constant 3.200000e+01 : f32
    %197 = vector.broadcast %cst_91 : f32 to vector<20x1xf32>
    %198 = arith.divf %196, %197 : vector<20x1xf32>
    %199 = vector.broadcast %191 : vector<20x1xf32> to vector<20x32xf32>
    %200 = arith.subf %187, %199 : vector<20x32xf32>
    %cst_92 = arith.constant 9.99999997E-7 : f32
    %201 = vector.broadcast %cst_92 : f32 to vector<20x1xf32>
    %202 = arith.addf %198, %201 : vector<20x1xf32>
    %203 = math.rsqrt %202 : vector<20x1xf32>
    %204 = vector.broadcast %203 : vector<20x1xf32> to vector<20x32xf32>
    %205 = arith.mulf %200, %204 : vector<20x32xf32>
    %206 = vector.broadcast %178 : vector<1x32xf32> to vector<20x32xf32>
    %207 = arith.mulf %205, %206 : vector<20x32xf32>
    %208 = vector.broadcast %180 : vector<1x32xf32> to vector<20x32xf32>
    %209 = arith.addf %207, %208 : vector<20x32xf32>
    %cst_93 = arith.constant dense<0.000000e+00> : vector<20x256xf32>
    %210 = tpu.matmul %209, %182, %cst_93 {dimension_numbers = #tpu.dot_dimension_numbers<[1], [0], [0], [1], [0, 0, 1, 1], [], []>} : vector<20x32xf32>, vector<32x256xf32>, vector<20x256xf32> -> vector<20x256xf32>
    %211 = vector.broadcast %184 : vector<1x256xf32> to vector<20x256xf32>
    %212 = arith.addf %210, %211 : vector<20x256xf32>
    %213 = vector.extract_strided_slice %212 {offsets = [0, 0], sizes = [20, 32], strides = [1, 1]} : vector<20x256xf32> to vector<20x32xf32>
    %214 = vector.extract_strided_slice %212 {offsets = [0, 32], sizes = [20, 32], strides = [1, 1]} : vector<20x256xf32> to vector<20x32xf32>
    %cst_94 = arith.constant 0.176776692 : f32
    %215 = vector.broadcast %cst_94 : f32 to vector<20x32xf32>
    %216 = arith.mulf %214, %215 : vector<20x32xf32>
    %217 = vector.extract_strided_slice %212 {offsets = [0, 64], sizes = [20, 32], strides = [1, 1]} : vector<20x256xf32> to vector<20x32xf32>
    %218 = vector.extract_strided_slice %212 {offsets = [0, 96], sizes = [20, 32], strides = [1, 1]} : vector<20x256xf32> to vector<20x32xf32>
    %219 = arith.negf %218 : vector<20x32xf32>
    %220 = math.exp %219 : vector<20x32xf32>
    %cst_95 = arith.constant 1.000000e+00 : f32
    %221 = vector.broadcast %cst_95 : f32 to vector<20x32xf32>
    %222 = arith.addf %221, %220 : vector<20x32xf32>
    %223 = arith.divf %221, %222 : vector<20x32xf32>
    %224 = vector.extract_strided_slice %212 {offsets = [0, 128], sizes = [20, 1], strides = [1, 1]} : vector<20x256xf32> to vector<20x1xf32>
    %225 = vector.extract_strided_slice %212 {offsets = [0, 129], sizes = [20, 1], strides = [1, 1]} : vector<20x256xf32> to vector<20x1xf32>
    %cst_96 = arith.constant 0.000000e+00 : f32
    %226 = vector.broadcast %cst_96 : f32 to vector<20x1xf32>
    %227 = arith.subf %226, %225 : vector<20x1xf32>
    %cst_97 = arith.constant 0.000000e+00 : f32
    %228 = vector.broadcast %cst_97 : f32 to vector<20x1xf32>
    %229 = arith.maximumf %227, %228 : vector<20x1xf32>
    %230 = vector.broadcast %cst_97 : f32 to vector<20x1xf32>
    %231 = arith.subf %227, %230 : vector<20x1xf32>
    %232 = arith.cmpf one, %231, %231 : vector<20x1xf32>
    %233 = vector.broadcast %cst_97 : f32 to vector<20x1xf32>
    %234 = arith.addf %227, %233 : vector<20x1xf32>
    %235 = math.absf %231 : vector<20x1xf32>
    %cst_98 = arith.constant 0.000000e+00 : f32
    %236 = vector.broadcast %cst_98 : f32 to vector<20x1xf32>
    %237 = arith.subf %236, %235 : vector<20x1xf32>
    %238 = math.exp %237 : vector<20x1xf32>
    %239 = math.log1p %238 : vector<20x1xf32>
    %240 = arith.addf %229, %239 : vector<20x1xf32>
    %241 = arith.select %232, %234, %240 : vector<20x1xi1>, vector<20x1xf32>
    %cst_99 = arith.constant 0.000000e+00 : f32
    %242 = vector.broadcast %cst_99 : f32 to vector<20x1xf32>
    %243 = arith.subf %242, %241 : vector<20x1xf32>
    %244 = vector.extract_strided_slice %213 {offsets = [0, 0], sizes = [10, 32], strides = [1, 1]} : vector<20x32xf32> to vector<10x32xf32>
    %245 = vector.extract_strided_slice %216 {offsets = [0, 0], sizes = [10, 32], strides = [1, 1]} : vector<20x32xf32> to vector<10x32xf32>
    %246 = vector.extract_strided_slice %217 {offsets = [0, 0], sizes = [10, 32], strides = [1, 1]} : vector<20x32xf32> to vector<10x32xf32>
    %247 = vector.extract_strided_slice %224 {offsets = [0, 0], sizes = [10, 1], strides = [1, 1]} : vector<20x1xf32> to vector<10x1xf32>
    %248 = vector.extract_strided_slice %243 {offsets = [0, 0], sizes = [10, 1], strides = [1, 1]} : vector<20x1xf32> to vector<10x1xf32>
    %249 = tpu.transpose %248, [1, 0] : vector<10x1xf32> -> vector<1x10xf32>
    %cst_100 = arith.constant 0.000000e+00 : f32
    %250 = vector.shape_cast %249 : vector<1x10xf32> to vector<1x10xf32>
    %251 = vector.broadcast %250 : vector<1x10xf32> to vector<10x10xf32>
    %252 = vector.broadcast %cst_100 : f32 to vector<10x10xf32>
    %253 = arith.select %22, %251, %252 : vector<10x10xi1>, vector<10x10xf32>
    %cst_101 = arith.constant dense<0.000000e+00> : vector<10xf32>
    %254 = vector.multi_reduction <add>, %253, %cst_101 [1] : vector<10x10xf32> to vector<10xf32>
    %255 = vector.shape_cast %254 : vector<10xf32> to vector<10x1xf32>
    %256 = tpu.transpose %255, [1, 0] : vector<10x1xf32> -> vector<1x10xf32>
    %257 = vector.broadcast %255 : vector<10x1xf32> to vector<10x10xf32>
    %258 = vector.broadcast %256 : vector<1x10xf32> to vector<10x10xf32>
    %259 = arith.subf %257, %258 : vector<10x10xf32>
    %260 = tpu.transpose %247, [1, 0] : vector<10x1xf32> -> vector<1x10xf32>
    %261 = vector.broadcast %260 : vector<1x10xf32> to vector<10x10xf32>
    %262 = arith.addf %259, %261 : vector<10x10xf32>
    %cst_102 = arith.constant -1.000000e+30 : f32
    %263 = vector.broadcast %cst_102 : f32 to vector<10x10xf32>
    %264 = arith.select %22, %262, %263 : vector<10x10xi1>, vector<10x10xf32>
    %cst_103 = arith.constant dense<0xFF800000> : vector<10xf32>
    %265 = vector.multi_reduction <maximumf>, %264, %cst_103 [1] : vector<10x10xf32> to vector<10xf32>
    %266 = vector.shape_cast %265 : vector<10xf32> to vector<10x1xf32>
    %267 = vector.broadcast %266 : vector<10x1xf32> to vector<10x10xf32>
    %268 = arith.subf %264, %267 : vector<10x10xf32>
    %269 = math.exp %268 : vector<10x10xf32>
    %270 = tpu.transpose %245, [1, 0] : vector<10x32xf32> -> vector<32x10xf32>
    %cst_104 = arith.constant dense<0.000000e+00> : vector<10x10xf32>
    %271 = tpu.matmul %244, %270, %cst_104 {dimension_numbers = #tpu.dot_dimension_numbers<[1], [0], [0], [1], [0, 0, 1, 1], [], []>} : vector<10x32xf32>, vector<32x10xf32>, vector<10x10xf32> -> vector<10x10xf32>
    %272 = arith.mulf %271, %269 : vector<10x10xf32>
    %cst_105 = arith.constant dense<0.000000e+00> : vector<10xf32>
    %273 = vector.multi_reduction <add>, %272, %cst_105 [1] : vector<10x10xf32> to vector<10xf32>
    %274 = vector.shape_cast %273 : vector<10xf32> to vector<10x1xf32>
    %275 = math.absf %274 : vector<10x1xf32>
    %cst_106 = arith.constant 0.000000e+00 : f32
    %276 = vector.broadcast %cst_106 : f32 to vector<10x1xf32>
    %277 = arith.subf %276, %266 : vector<10x1xf32>
    %278 = math.exp %277 : vector<10x1xf32>
    %279 = arith.maximumf %275, %278 : vector<10x1xf32>
    %280 = tpu.reciprocal %279 {approx = true} : vector<10x1xf32> -> vector<10x1xf32>
    %281 = vector.broadcast %280 : vector<10x1xf32> to vector<10x10xf32>
    %282 = arith.mulf %272, %281 : vector<10x10xf32>
    %cst_107 = arith.constant dense<0.000000e+00> : vector<10x32xf32>
    %283 = tpu.matmul %282, %246, %cst_107 {dimension_numbers = #tpu.dot_dimension_numbers<[1], [0], [0], [1], [0, 0, 1, 1], [], []>} : vector<10x10xf32>, vector<10x32xf32>, vector<10x32xf32> -> vector<10x32xf32>
    %c0_108 = arith.constant 0 : index
    %c0_109 = arith.constant 0 : index
    %284 = vector.load %arg17[%c0_108, %c0_109] : memref<20x32xf32, #tpu.memory_space<vmem>>, vector<10x32xf32>
    tpu.vector_store %arg17[%c0_108, %c0_109], %283 {strides = array<i32>} : memref<20x32xf32, #tpu.memory_space<vmem>>, vector<10x32xf32>,
    %285 = vector.extract_strided_slice %213 {offsets = [10, 0], sizes = [10, 32], strides = [1, 1]} : vector<20x32xf32> to vector<10x32xf32>
    %286 = vector.extract_strided_slice %216 {offsets = [10, 0], sizes = [10, 32], strides = [1, 1]} : vector<20x32xf32> to vector<10x32xf32>
    %287 = vector.extract_strided_slice %217 {offsets = [10, 0], sizes = [10, 32], strides = [1, 1]} : vector<20x32xf32> to vector<10x32xf32>
    %288 = vector.extract_strided_slice %224 {offsets = [10, 0], sizes = [10, 1], strides = [1, 1]} : vector<20x1xf32> to vector<10x1xf32>
    %289 = vector.extract_strided_slice %243 {offsets = [10, 0], sizes = [10, 1], strides = [1, 1]} : vector<20x1xf32> to vector<10x1xf32>
    %290 = tpu.transpose %289, [1, 0] : vector<10x1xf32> -> vector<1x10xf32>
    %cst_110 = arith.constant 0.000000e+00 : f32
    %291 = vector.shape_cast %290 : vector<1x10xf32> to vector<1x10xf32>
    %292 = vector.broadcast %291 : vector<1x10xf32> to vector<10x10xf32>
    %293 = vector.broadcast %cst_110 : f32 to vector<10x10xf32>
    %294 = arith.select %22, %292, %293 : vector<10x10xi1>, vector<10x10xf32>
    %cst_111 = arith.constant dense<0.000000e+00> : vector<10xf32>
    %295 = vector.multi_reduction <add>, %294, %cst_111 [1] : vector<10x10xf32> to vector<10xf32>
    %296 = vector.shape_cast %295 : vector<10xf32> to vector<10x1xf32>
    %297 = tpu.transpose %296, [1, 0] : vector<10x1xf32> -> vector<1x10xf32>
    %298 = vector.broadcast %296 : vector<10x1xf32> to vector<10x10xf32>
    %299 = vector.broadcast %297 : vector<1x10xf32> to vector<10x10xf32>
    %300 = arith.subf %298, %299 : vector<10x10xf32>
    %301 = tpu.transpose %288, [1, 0] : vector<10x1xf32> -> vector<1x10xf32>
    %302 = vector.broadcast %301 : vector<1x10xf32> to vector<10x10xf32>
    %303 = arith.addf %300, %302 : vector<10x10xf32>
    %cst_112 = arith.constant -1.000000e+30 : f32
    %304 = vector.broadcast %cst_112 : f32 to vector<10x10xf32>
    %305 = arith.select %22, %303, %304 : vector<10x10xi1>, vector<10x10xf32>
    %cst_113 = arith.constant dense<0xFF800000> : vector<10xf32>
    %306 = vector.multi_reduction <maximumf>, %305, %cst_113 [1] : vector<10x10xf32> to vector<10xf32>
    %307 = vector.shape_cast %306 : vector<10xf32> to vector<10x1xf32>
    %308 = vector.broadcast %307 : vector<10x1xf32> to vector<10x10xf32>
    %309 = arith.subf %305, %308 : vector<10x10xf32>
    %310 = math.exp %309 : vector<10x10xf32>
    %311 = tpu.transpose %286, [1, 0] : vector<10x32xf32> -> vector<32x10xf32>
    %cst_114 = arith.constant dense<0.000000e+00> : vector<10x10xf32>
    %312 = tpu.matmul %285, %311, %cst_114 {dimension_numbers = #tpu.dot_dimension_numbers<[1], [0], [0], [1], [0, 0, 1, 1], [], []>} : vector<10x32xf32>, vector<32x10xf32>, vector<10x10xf32> -> vector<10x10xf32>
    %313 = arith.mulf %312, %310 : vector<10x10xf32>
    %cst_115 = arith.constant dense<0.000000e+00> : vector<10xf32>
    %314 = vector.multi_reduction <add>, %313, %cst_115 [1] : vector<10x10xf32> to vector<10xf32>
    %315 = vector.shape_cast %314 : vector<10xf32> to vector<10x1xf32>
    %316 = math.absf %315 : vector<10x1xf32>
    %cst_116 = arith.constant 0.000000e+00 : f32
    %317 = vector.broadcast %cst_116 : f32 to vector<10x1xf32>
    %318 = arith.subf %317, %307 : vector<10x1xf32>
    %319 = math.exp %318 : vector<10x1xf32>
    %320 = arith.maximumf %316, %319 : vector<10x1xf32>
    %321 = tpu.reciprocal %320 {approx = true} : vector<10x1xf32> -> vector<10x1xf32>
    %322 = vector.broadcast %321 : vector<10x1xf32> to vector<10x10xf32>
    %323 = arith.mulf %313, %322 : vector<10x10xf32>
    %cst_117 = arith.constant dense<0.000000e+00> : vector<10x32xf32>
    %324 = tpu.matmul %323, %287, %cst_117 {dimension_numbers = #tpu.dot_dimension_numbers<[1], [0], [0], [1], [0, 0, 1, 1], [], []>} : vector<10x10xf32>, vector<10x32xf32>, vector<10x32xf32> -> vector<10x32xf32>
    %c10_118 = arith.constant 10 : index
    %c0_119 = arith.constant 0 : index
    %325 = vector.load %arg17[%c10_118, %c0_119] : memref<20x32xf32, #tpu.memory_space<vmem>>, vector<10x32xf32>
    tpu.vector_store %arg17[%c10_118, %c0_119], %324 {strides = array<i32>} : memref<20x32xf32, #tpu.memory_space<vmem>>, vector<10x32xf32>,
    %c0_120 = arith.constant 0 : index
    %c0_121 = arith.constant 0 : index
    %326 = vector.load %arg17[%c0_120, %c0_121] : memref<20x32xf32, #tpu.memory_space<vmem>>, vector<20x32xf32>
    %327 = arith.mulf %326, %223 : vector<20x32xf32>
    %cst_122 = arith.constant dense<0.000000e+00> : vector<20x32xf32>
    %328 = tpu.matmul %327, %186, %cst_122 {dimension_numbers = #tpu.dot_dimension_numbers<[1], [0], [0], [1], [0, 0, 1, 1], [], []>} : vector<20x32xf32>, vector<32x32xf32>, vector<20x32xf32> -> vector<20x32xf32>
    %329 = arith.addf %187, %328 : vector<20x32xf32>
    %c0_123 = arith.constant 0 : index
    %c0_124 = arith.constant 0 : index
    %330 = vector.load %arg16[%c0_123, %c0_124] : memref<20x32xf32, #tpu.memory_space<vmem>>, vector<20x32xf32>
    tpu.vector_store %arg16[%c0_123, %c0_124], %329 {strides = array<i32>} : memref<20x32xf32, #tpu.memory_space<vmem>>, vector<20x32xf32>,
    %c9_125 = arith.constant 9 : index
    %c0_126 = arith.constant 0 : index
    %331 = vector.load %arg16[%c9_125, %c0_126] : memref<20x32xf32, #tpu.memory_space<vmem>>, vector<1x32xf32>
    %c0_127 = arith.constant 0 : index
    %c0_128 = arith.constant 0 : index
    %332 = vector.load %arg18[%c0_127, %c0_128] : memref<2x32xf32, #tpu.memory_space<vmem>>, vector<1x32xf32>
    tpu.vector_store %arg18[%c0_127, %c0_128], %331 {strides = array<i32>} : memref<2x32xf32, #tpu.memory_space<vmem>>, vector<1x32xf32>,
    %c19_129 = arith.constant 19 : index
    %c0_130 = arith.constant 0 : index
    %333 = vector.load %arg16[%c19_129, %c0_130] : memref<20x32xf32, #tpu.memory_space<vmem>>, vector<1x32xf32>
    %c1_131 = arith.constant 1 : index
    %c0_132 = arith.constant 0 : index
    %334 = vector.load %arg18[%c1_131, %c0_132] : memref<2x32xf32, #tpu.memory_space<vmem>>, vector<1x32xf32>
    tpu.vector_store %arg18[%c1_131, %c0_132], %333 {strides = array<i32>} : memref<2x32xf32, #tpu.memory_space<vmem>>, vector<1x32xf32>,
    %c0_133 = arith.constant 0 : index
    %c0_134 = arith.constant 0 : index
    %335 = vector.load %arg18[%c0_133, %c0_134] : memref<2x32xf32, #tpu.memory_space<vmem>>, vector<2x32xf32>
    %c0_135 = arith.constant 0 : index
    %c0_136 = arith.constant 0 : index
    %336 = vector.load %arg10[%c0_135, %c0_136] : memref<32x16xf32, #tpu.memory_space<vmem>>, vector<32x16xf32>
    %cst_137 = arith.constant dense<0.000000e+00> : vector<2x16xf32>
    %337 = tpu.matmul %335, %336, %cst_137 {dimension_numbers = #tpu.dot_dimension_numbers<[1], [0], [0], [1], [0, 0, 1, 1], [], []>} : vector<2x32xf32>, vector<32x16xf32>, vector<2x16xf32> -> vector<2x16xf32>
    %c0_138 = arith.constant 0 : index
    %c0_139 = arith.constant 0 : index
    %338 = vector.load %arg11[%c0_138, %c0_139] : memref<1x16xf32, #tpu.memory_space<vmem>>, vector<1x16xf32>
    %339 = vector.broadcast %338 : vector<1x16xf32> to vector<2x16xf32>
    %340 = arith.addf %337, %339 : vector<2x16xf32>
    %341 = arith.mulf %340, %340 : vector<2x16xf32>
    %342 = arith.mulf %340, %341 : vector<2x16xf32>
    %cst_140 = arith.constant 4.471500e-02 : f32
    %343 = vector.broadcast %cst_140 : f32 to vector<2x16xf32>
    %344 = arith.mulf %343, %342 : vector<2x16xf32>
    %345 = arith.addf %340, %344 : vector<2x16xf32>
    %cst_141 = arith.constant 0.797884583 : f32
    %346 = vector.broadcast %cst_141 : f32 to vector<2x16xf32>
    %347 = arith.mulf %346, %345 : vector<2x16xf32>
    %348 = math.tanh %347 : vector<2x16xf32>
    %cst_142 = arith.constant 1.000000e+00 : f32
    %349 = vector.broadcast %cst_142 : f32 to vector<2x16xf32>
    %350 = arith.addf %349, %348 : vector<2x16xf32>
    %cst_143 = arith.constant 5.000000e-01 : f32
    %351 = vector.broadcast %cst_143 : f32 to vector<2x16xf32>
    %352 = arith.mulf %351, %350 : vector<2x16xf32>
    %353 = arith.mulf %340, %352 : vector<2x16xf32>
    %c0_144 = arith.constant 0 : index
    %c0_145 = arith.constant 0 : index
    %354 = vector.load %arg12[%c0_144, %c0_145] : memref<16x5xf32, #tpu.memory_space<vmem>>, vector<16x5xf32>
    %cst_146 = arith.constant dense<0.000000e+00> : vector<2x5xf32>
    %355 = tpu.matmul %353, %354, %cst_146 {dimension_numbers = #tpu.dot_dimension_numbers<[1], [0], [0], [1], [0, 0, 1, 1], [], []>} : vector<2x16xf32>, vector<16x5xf32>, vector<2x5xf32> -> vector<2x5xf32>
    %c0_147 = arith.constant 0 : index
    %c0_148 = arith.constant 0 : index
    %356 = vector.load %arg13[%c0_147, %c0_148] : memref<1x5xf32, #tpu.memory_space<vmem>>, vector<1x5xf32>
    %357 = vector.broadcast %356 : vector<1x5xf32> to vector<2x5xf32>
    %358 = arith.addf %355, %357 : vector<2x5xf32>
    %c0_149 = arith.constant 0 : index
    %c0_150 = arith.constant 0 : index
    %359 = vector.load %arg14[%c0_149, %c0_150] : memref<2x5xf32, #tpu.memory_space<vmem>>, vector<2x5xf32>
    tpu.vector_store %arg14[%c0_149, %c0_150], %358 {strides = array<i32>} : memref<2x5xf32, #tpu.memory_space<vmem>>, vector<2x5xf32>,
    %c0_151 = arith.constant 0 : index
    %c0_152 = arith.constant 0 : index
    %360 = vector.load %arg15[%c0_151, %c0_152] : memref<2x32xf32, #tpu.memory_space<vmem>>, vector<2x32xf32>
    tpu.vector_store %arg15[%c0_151, %c0_152], %335 {strides = array<i32>} : memref<2x32xf32, #tpu.memory_space<vmem>>, vector<2x32xf32>,
    return
  }
}

</mosaic_0001>

<llo_original>
// kernel: forward.1
$region0: #{forward.1}
  #allocation0 [shape = 'u32[]', space=smem, size = 0x4, offset = 0x4, fixed_abs, tag = 'smem constant byte address 0x4 - core index']
  #allocation1 [shape = 'u32[144,128]{1,0:T(1,128)}', space=vmem, size = 0x12000, scoped, tag = 'internal scratch']
  #allocation2 [shape = 'f32[20,32]{1,0:T(8,128)}', space=vmem, size = 0x3000, scoped, tag = 'scratch operand']
  #allocation3 [shape = 'f32[20,32]{1,0:T(8,128)}', space=vmem, size = 0x3000, scoped, tag = 'scratch operand']
  #allocation4 [shape = 'f32[2,32]{1,0:T(2,128)}', space=vmem, size = 0x400, scoped, tag = 'scratch operand']
  %s0 = inlined_call_operand.vmem [shape: f32[16,16], index: 0, kind: input, shape index: {}]
  %s1 = inlined_call_operand.vmem [shape: f32[16,32], index: 1, kind: input, shape index: {}]
  %s2 = inlined_call_operand.vmem [shape: f32[1,32], index: 2, kind: input, shape index: {}]
  %s3 = inlined_call_operand.vmem [shape: f32[1,32], index: 3, kind: input, shape index: {}]
  %s4 = inlined_call_operand.vmem [shape: f32[1,32], index: 4, kind: input, shape index: {}]
  %s5 = inlined_call_operand.vmem [shape: f32[2,1,32], index: 5, kind: input, shape index: {}]
  %s6 = inlined_call_operand.vmem [shape: f32[2,1,32], index: 6, kind: input, shape index: {}]
  %s7 = inlined_call_operand.vmem [shape: f32[2,32,256], index: 7, kind: input, shape index: {}]
  %s8 = inlined_call_operand.vmem [shape: f32[2,1,256], index: 8, kind: input, shape index: {}]
  %s9 = inlined_call_operand.vmem [shape: f32[2,32,32], index: 9, kind: input, shape index: {}]
  %s10 = inlined_call_operand.vmem [shape: f32[32,16], index: 10, kind: input, shape index: {}]
  %s11 = inlined_call_operand.vmem [shape: f32[1,16], index: 11, kind: input, shape index: {}]
  %s12 = inlined_call_operand.vmem [shape: f32[16,5], index: 12, kind: input, shape index: {}]
  %s13 = inlined_call_operand.vmem [shape: f32[1,5], index: 13, kind: input, shape index: {}]
  %s14 = inlined_call_operand.hbm [shape: f32[2,5], index: 14, kind: output, shape index: {0}]
  %s15 = inlined_call_operand.hbm [shape: f32[2,32], index: 15, kind: output, shape index: {1}]
  %16 = xla_tuple %s14, %s15
  %s17 = sld [smem:[#allocation0]]
  $region74: #{forward.1} parent=0
    _
  %s19 = ssub.s32 1, %s17
  %s20 = scalar_select 0, %s19, %s17
  $region1: #{forward.1} parent=0
    #allocation5 [shape = 'u8[1024]{0}', space=vmem, size = 0x400, scoped, tag = 'output window, operand 0, single buffered']
    #allocation6 [shape = 's32[1]{0}', space=sflag, size = 0x4, scoped, tag = 'scoped memory for forward.1']
    #allocation7 [shape = 'u8[1024]{0}', space=vmem, size = 0x400, scoped, tag = 'output window, operand 1, single buffered']
    #allocation8 [shape = 's32[1]{0}', space=sflag, size = 0x4, scoped, tag = 'scoped memory for forward.1']
    %21 = vsyncpa [#allocation6], 0
    %22 = vsyncpa [#allocation8], 0
    // Predicated region
    $region2: #{forward.1} parent=1 // pred_check
      _
    $region3: #{forward.1} parent=1 // pred_check_branch
      %24 = sbr.rel (0) target = $region5
    $region4: #{forward.1} parent=1 // pred_region
      _
    $region5: #{forward.1} parent=1 // pred_fallthru
      _
    // Predicated region
    $region6: #{forward.1} parent=1 // pred_check
      _
    $region7: #{forward.1} parent=1 // pred_check_branch
      %26 = sbr.rel (0) target = $region9
    $region8: #{forward.1} parent=1 // pred_region
      _
    $region9: #{forward.1} parent=1 // pred_fallthru
      _
    // Predicated region
    $region10: #{forward.1} parent=1 // pred_check
      _
    $region11: #{forward.1} parent=1 // pred_check_branch
      %28 = sbr.rel (0) target = $region13
    $region12: #{forward.1} parent=1 // pred_region
      _
    $region13: #{forward.1} parent=1 // pred_fallthru
      _
    // Predicated region
    $region14: #{forward.1} parent=1 // pred_check
      _
    $region15: #{forward.1} parent=1 // pred_check_branch
      %30 = sbr.rel (0) target = $region17
    $region16: #{forward.1} parent=1 // pred_region
      _
    $region17: #{forward.1} parent=1 // pred_fallthru
      _
    // Predicated region
    $region18: #{forward.1} parent=1 // pred_check
      _
    $region19: #{forward.1} parent=1 // pred_check_branch
      %32 = sbr.rel (0) target = $region21
    $region20: #{forward.1} parent=1 // pred_region
      _
    $region21: #{forward.1} parent=1 // pred_fallthru
      _
    // Predicated region
    $region22: #{forward.1} parent=1 // pred_check
      _
    $region23: #{forward.1} parent=1 // pred_check_branch
      %34 = sbr.rel (0) target = $region25
    $region24: #{forward.1} parent=1 // pred_region
      _
    $region25: #{forward.1} parent=1 // pred_fallthru
      _
    // Predicated region
    $region26: #{forward.1} parent=1 // pred_check
      _
    $region27: #{forward.1} parent=1 // pred_check_branch
      %36 = sbr.rel (0) target = $region29
    $region28: #{forward.1} parent=1 // pred_region
      _
    $region29: #{forward.1} parent=1 // pred_fallthru
      _
    // Predicated region
    $region30: #{forward.1} parent=1 // pred_check
      _
    $region31: #{forward.1} parent=1 // pred_check_branch
      %38 = sbr.rel (0) target = $region33
    $region32: #{forward.1} parent=1 // pred_region
      _
    $region33: #{forward.1} parent=1 // pred_fallthru
      _
    // Predicated region
    $region34: #{forward.1} parent=1 // pred_check
      _
    $region35: #{forward.1} parent=1 // pred_check_branch
      %40 = sbr.rel (0) target = $region37
    $region36: #{forward.1} parent=1 // pred_region
      _
    $region37: #{forward.1} parent=1 // pred_fallthru
      _
    // Predicated region
    $region38: #{forward.1} parent=1 // pred_check
      _
    $region39: #{forward.1} parent=1 // pred_check_branch
      %42 = sbr.rel (0) target = $region41
    $region40: #{forward.1} parent=1 // pred_region
      _
    $region41: #{forward.1} parent=1 // pred_fallthru
      _
    // Predicated region
    $region42: #{forward.1} parent=1 // pred_check
      _
    $region43: #{forward.1} parent=1 // pred_check_branch
      %44 = sbr.rel (0) target = $region45
    $region44: #{forward.1} parent=1 // pred_region
      _
    $region45: #{forward.1} parent=1 // pred_fallthru
      _
    // Predicated region
    $region46: #{forward.1} parent=1 // pred_check
      _
    $region47: #{forward.1} parent=1 // pred_check_branch
      %46 = sbr.rel (0) target = $region49
    $region48: #{forward.1} parent=1 // pred_region
      _
    $region49: #{forward.1} parent=1 // pred_fallthru
      _
    // Predicated region
    $region50: #{forward.1} parent=1 // pred_check
      _
    $region51: #{forward.1} parent=1 // pred_check_branch
      %48 = sbr.rel (0) target = $region53
    $region52: #{forward.1} parent=1 // pred_region
      _
    $region53: #{forward.1} parent=1 // pred_fallthru
      _
    // Predicated region
    $region54: #{forward.1} parent=1 // pred_check
      _
    $region55: #{forward.1} parent=1 // pred_check_branch
      %50 = sbr.rel (0) target = $region57
    $region56: #{forward.1} parent=1 // pred_region
      _
    $region57: #{forward.1} parent=1 // pred_fallthru
      _
    %v51 = vld [vmem:[%s0] sm:$0xff]
    %v52 = vld [vmem:[%s0 + $0x8] sm:$0xff]
    %v53 = vld [vmem:[%s1] sm:$0xff]
    %v54 = vld [vmem:[%s1 + $0x8] sm:$0xff]
    %v55 = vld [vmem:[%s2] sm:$0x1]
    %v57 = vlaneseq
    %v58 = vshrl.u32 %v57, 7
    %v59 = vsub.s32 0, %v58
    %v60 = vrot.slane %v55, %v59
    %vm62 = vcmask 130048
    %v64 = vsel %vm62, %v51, 0
    %v67 = vsel %vm62, %v52, 0
    %69 = vmatprep.subr.mxu0 0.0
    %70 = vmatpush1.msra.mxu0 0.0
    %71 = vmatprep.subr.mxu0 0.0
    %72 = vmatpush1.msra.mxu0 0.0
    %73 = vmatprep.subr.mxu0 0.0
    %74 = vmatpush1.msra.mxu0 0.0
    %75 = vmatprep.subr.mxu0 0.0
    %76 = vmatpush1.msra.mxu0 0.0
    %77 = vmatprep.subr.mxu0 0.0
    %78 = vmatpush1.msra.mxu0 0.0
    %79 = vmatprep.subr.mxu0 0.0
    %80 = vmatpush1.msra.mxu0 0.0
    %81 = vmatprep.subr.mxu0 0.0
    %82 = vmatpush1.msra.mxu0 0.0
    %83 = vmatprep.subr.mxu0 0.0
    %84 = vmatpush1.msra.mxu0 0.0
    %85 = vmatprep.subr.mxu0 0.0
    %86 = vmatpush1.msra.mxu0 0.0
    %87 = vmatprep.subr.mxu0 0.0
    %88 = vmatpush1.msra.mxu0 0.0
    %89 = vmatprep.subr.mxu0 0.0
    %90 = vmatpush1.msra.mxu0 0.0
    %91 = vmatprep.subr.mxu0 0.0
    %92 = vmatpush1.msra.mxu0 0.0
    %93 = vmatprep.subr.mxu0 0.0
    %94 = vmatpush1.msra.mxu0 0.0
    %95 = vmatprep.subr.mxu0 0.0
    %96 = vmatpush1.msra.mxu0 0.0
    %97 = vmatprep.subr.mxu0 0.0
    %98 = vmatpush1.msra.mxu0 %v54
    %99 = vmatprep.subr.mxu0 0.0
    %100 = vmatpush1.msra.mxu0 %v53
    %101 = vmatprep.subr.mxu0 0.0
    %102 = vmatpush2.msra.mxu0 0.0
    %103 = vmatprep.subr.mxu0 0.0
    %104 = vmatpush2.msra.mxu0 0.0
    %105 = vmatprep.subr.mxu0 0.0
    %106 = vmatpush2.msra.mxu0 0.0
    %107 = vmatprep.subr.mxu0 0.0
    %108 = vmatpush2.msra.mxu0 0.0
    %109 = vmatprep.subr.mxu0 0.0
    %110 = vmatpush2.msra.mxu0 0.0
    %111 = vmatprep.subr.mxu0 0.0
    %112 = vmatpush2.msra.mxu0 0.0
    %113 = vmatprep.subr.mxu0 0.0
    %114 = vmatpush2.msra.mxu0 0.0
    %115 = vmatprep.subr.mxu0 0.0
    %116 = vmatpush2.msra.mxu0 0.0
    %117 = vmatprep.subr.mxu0 0.0
    %118 = vmatpush2.msra.mxu0 0.0
    %119 = vmatprep.subr.mxu0 0.0
    %120 = vmatpush2.msra.mxu0 0.0
    %121 = vmatprep.subr.mxu0 0.0
    %122 = vmatpush2.msra.mxu0 0.0
    %123 = vmatprep.subr.mxu0 0.0
    %124 = vmatpush2.msra.mxu0 0.0
    %125 = vmatprep.subr.mxu0 0.0
    %126 = vmatpush2.msra.mxu0 0.0
    %127 = vmatprep.subr.mxu0 0.0
    %128 = vmatpush2.msra.mxu0 0.0
    %129 = vmatprep.subr.mxu0 0.0
    %130 = vmatpush2.msra.mxu0 0.0
    %131 = vmatprep.subr.mxu0 0.0
    %132 = vmatpush2.msra.mxu0 0.0
    %133 = vmatprep.mubr.f32.mxu0 0.0
    %134 = vmatmul.mubr.f32.gmra.mxu0 %v64
    %v135 = vpop.f32.mrf.mxu0
    %v136 = vadd.f32 %v60, %v135
    %v137 = vpop.f32.mrf.mxu0
    %138 = vmatprep.mubr.f32.mxu0 0.0
    %139 = vmatmul.mubr.f32.gmra.mxu0 %v67
    %v140 = vpop.f32.mrf.mxu0
    %v141 = vadd.f32 %v60, %v140
    %v142 = vpop.f32.mrf.mxu0
    %143 = vdwg.mxu0
    %v144 = vld [vmem:[%s3] sm:$0x1]
    %v145 = vld [vmem:[%s4] sm:$0x1]
    %vm146 = vcmask 257024
    %147 = vst.msk [vmem:[#allocation2] sm:$0xf] %vm146, %v136
    %vm148 = vcmask 253952
    %149 = vst.msk [vmem:[#allocation2 + $0x4] sm:$0x1] %vm148, %v144
    %150 = vst.msk [vmem:[#allocation2 + $0x5] sm:$0xf] %vm146, %v141
    %151 = vst.msk [vmem:[#allocation2 + $0x9] sm:$0x1] %vm148, %v145
    %vm152 = vcmask 261124
    %153 = vst.msk [vmem:[#allocation2 + $0x6] sm:$0xf0] %vm152, %v136
    %154 = vst.msk [vmem:[#allocation2 + $0xe] sm:$0x1] %vm148, %v144
    %155 = vst.msk [vmem:[#allocation2 + $0xb] sm:$0xf0] %vm152, %v141
    %156 = vst.msk [vmem:[#allocation2 + $0x13] sm:$0x1] %vm148, %v145
    %v157 = vlaneseq
    %v158 = vshrl.u32 %v157, 7
    %v159 = vadd.s32 %v158, 8
    %v160 = vlaneseq
    %v161 = vand.u32 %v160, 127
    %vm162 = vcmp.le.s32.totalorder %v161, %v158
    %vm163 = vcmp.le.s32.totalorder %v161, %v159
    %v164 = vld [vmem:[%s5] sm:$0x1]
    %v165 = vld [vmem:[%s6] sm:$0x1]
    %v166 = vld [vmem:[%s7] sm:$0xff]
    %v167 = vld [vmem:[%s7 + $0x8] sm:$0xff]
    %v168 = vld [vmem:[%s7 + $0x10] sm:$0xff]
    %v169 = vld [vmem:[%s7 + $0x18] sm:$0xff]
    %v170 = vld [vmem:[%s7 + $0x20] sm:$0xff]
    %v171 = vld [vmem:[%s7 + $0x28] sm:$0xff]
    %v172 = vld [vmem:[%s7 + $0x30] sm:$0xff]
    %v173 = vld [vmem:[%s7 + $0x38] sm:$0xff]
    %v174 = vld [vmem:[%s8] sm:$0x3]
    %v175 = vld [vmem:[%s9] sm:$0xff]
    %v176 = vld [vmem:[%s9 + $0x8] sm:$0xff]
    %v177 = vld [vmem:[%s9 + $0x10] sm:$0xff]
    %v178 = vld [vmem:[%s9 + $0x18] sm:$0xff]
    %v179 = vld [vmem:[#allocation2] sm:$0xff]
    %v180 = vld [vmem:[#allocation2 + $0x8] sm:$0xff]
    %v181 = vld [vmem:[#allocation2 + $0x10] sm:$0xf]
    %vm182 = vcmask 261120
    %v183 = vsel %vm182, %v179, 0.0
    %184 = vadd.xlane.f32.xlu0 %v183
    %v185 = vpop.xlane.xlu0 %184
    %v186 = vsel %vm182, %v180, 0.0
    %187 = vadd.xlane.f32.xlu0 %v186
    %v188 = vpop.xlane.xlu0 %187
    %v189 = vsel %vm146, %v181, 0.0
    %190 = vadd.xlane.f32.xlu0 %v189
    %v191 = vpop.xlane.xlu0 %190
    %v192 = vrcp.pop 32.0
    %v193 = vmul.f32 %v185, %v192
    %v194 = vmul.f32 %v188, %v192
    %v195 = vmul.f32 %v191, %v192
    %v196 = vsub.f32 %v179, %v193
    %v197 = vsub.f32 %v180, %v194
    %v198 = vsub.f32 %v181, %v195
    %v199 = vmul.f32 %v196, %v196
    %v200 = vmul.f32 %v197, %v197
    %v201 = vmul.f32 %v198, %v198
    %v202 = vsel %vm182, %v199, 0.0
    %203 = vadd.xlane.f32.xlu0 %v202
    %v204 = vpop.xlane.xlu0 %203
    %v205 = vsel %vm182, %v200, 0.0
    %206 = vadd.xlane.f32.xlu0 %v205
    %v207 = vpop.xlane.xlu0 %206
    %v208 = vsel %vm146, %v201, 0.0
    %209 = vadd.xlane.f32.xlu0 %v208
    %v210 = vpop.xlane.xlu0 %209
    %v211 = vmul.f32 %v204, %v192
    %v212 = vmul.f32 %v207, %v192
    %v213 = vmul.f32 %v210, %v192
    %v214 = vadd.f32 %v211, 1e-06
    %v215 = vadd.f32 %v212, 1e-06
    %v216 = vadd.f32 %v213, 1e-06
    %v217 = vrsqrt.pop %v214
    %v218 = vrsqrt.pop %v215
    %v219 = vrsqrt.pop %v216
    %v220 = vmul.f32 %v196, %v217
    %v221 = vmul.f32 %v197, %v218
    %v222 = vmul.f32 %v198, %v219
    %v224 = vlaneseq
    %v225 = vshrl.u32 %v224, 7
    %v226 = vsub.s32 0, %v225
    %v227 = vrot.slane %v164, %v226
    %v229 = vmul.f32 %v220, %v227
    %v230 = vmul.f32 %v221, %v227
    %v231 = vmul.f32 %v222, %v227
    %v233 = vlaneseq
    %v234 = vshrl.u32 %v233, 7
    %v235 = vsub.s32 0, %v234
    %v236 = vrot.slane %v165, %v235
    %v238 = vadd.f32 %v229, %v236
    %v239 = vadd.f32 %v230, %v236
    %v240 = vadd.f32 %v231, %v236
    %v242 = vlaneseq
    %v243 = vshrl.u32 %v242, 7
    %v244 = vsub.s32 0, %v243
    %v245 = vrot.slane %v174, %v244
    %v246 = vlaneseq
    %v247 = vshrl.u32 %v246, 7
    %v248 = vsub.s32 1, %v247
    %v249 = vrot.slane %v174, %v248
    %v253 = vsel %vm182, %v238, 0
    %v256 = vsel %vm182, %v239, 0
    %v259 = vsel %vm182, %v240, 0
    %261 = vmatprep.subr.mxu0 0.0
    %262 = vmatpush1.msra.mxu0 0.0
    %263 = vmatprep.subr.mxu0 0.0
    %264 = vmatpush1.msra.mxu0 0.0
    %265 = vmatprep.subr.mxu0 0.0
    %266 = vmatpush1.msra.mxu0 0.0
    %267 = vmatprep.subr.mxu0 0.0
    %268 = vmatpush1.msra.mxu0 0.0
    %269 = vmatprep.subr.mxu0 0.0
    %270 = vmatpush1.msra.mxu0 0.0
    %271 = vmatprep.subr.mxu0 0.0
    %272 = vmatpush1.msra.mxu0 0.0
    %273 = vmatprep.subr.mxu0 0.0
    %274 = vmatpush1.msra.mxu0 0.0
    %275 = vmatprep.subr.mxu0 0.0
    %276 = vmatpush1.msra.mxu0 0.0
    %277 = vmatprep.subr.mxu0 0.0
    %278 = vmatpush1.msra.mxu0 0.0
    %279 = vmatprep.subr.mxu0 0.0
    %280 = vmatpush1.msra.mxu0 0.0
    %281 = vmatprep.subr.mxu0 0.0
    %282 = vmatpush1.msra.mxu0 0.0
    %283 = vmatprep.subr.mxu0 0.0
    %284 = vmatpush1.msra.mxu0 0.0
    %285 = vmatprep.subr.mxu0 %v173
    %286 = vmatpush1.msra.mxu0 %v172
    %287 = vmatprep.subr.mxu0 %v171
    %288 = vmatpush1.msra.mxu0 %v170
    %289 = vmatprep.subr.mxu0 %v169
    %290 = vmatpush1.msra.mxu0 %v168
    %291 = vmatprep.subr.mxu0 %v167
    %292 = vmatpush1.msra.mxu0 %v166
    %293 = vmatprep.subr.mxu0 0.0
    %294 = vmatpush2.msra.mxu0 0.0
    %295 = vmatprep.subr.mxu0 0.0
    %296 = vmatpush2.msra.mxu0 0.0
    %297 = vmatprep.subr.mxu0 0.0
    %298 = vmatpush2.msra.mxu0 0.0
    %299 = vmatprep.subr.mxu0 0.0
    %300 = vmatpush2.msra.mxu0 0.0
    %301 = vmatprep.subr.mxu0 0.0
    %302 = vmatpush2.msra.mxu0 0.0
    %303 = vmatprep.subr.mxu0 0.0
    %304 = vmatpush2.msra.mxu0 0.0
    %305 = vmatprep.subr.mxu0 0.0
    %306 = vmatpush2.msra.mxu0 0.0
    %307 = vmatprep.subr.mxu0 0.0
    %308 = vmatpush2.msra.mxu0 0.0
    %309 = vmatprep.subr.mxu0 0.0
    %310 = vmatpush2.msra.mxu0 0.0
    %311 = vmatprep.subr.mxu0 0.0
    %312 = vmatpush2.msra.mxu0 0.0
    %313 = vmatprep.subr.mxu0 0.0
    %314 = vmatpush2.msra.mxu0 0.0
    %315 = vmatprep.subr.mxu0 0.0
    %316 = vmatpush2.msra.mxu0 0.0
    %317 = vmatprep.subr.mxu0 0.0
    %318 = vmatpush2.msra.mxu0 0.0
    %319 = vmatprep.subr.mxu0 0.0
    %320 = vmatpush2.msra.mxu0 0.0
    %321 = vmatprep.subr.mxu0 0.0
    %322 = vmatpush2.msra.mxu0 0.0
    %323 = vmatprep.subr.mxu0 0.0
    %324 = vmatpush2.msra.mxu0 0.0
    %325 = vmatprep.mubr.f32.mxu0 0.0
    %326 = vmatmul.mubr.f32.gmra.mxu0 %v253
    %v327 = vpop.f32.mrf.mxu0
    %v328 = vadd.f32 %v245, %v327
    %v329 = vpop.f32.mrf.mxu0
    %v330 = vadd.f32 %v249, %v329
    %331 = vmatprep.mubr.f32.mxu0 0.0
    %332 = vmatmul.mubr.f32.gmra.mxu0 %v256
    %v333 = vpop.f32.mrf.mxu0
    %v334 = vadd.f32 %v245, %v333
    %v335 = vpop.f32.mrf.mxu0
    %v336 = vadd.f32 %v249, %v335
    %337 = vmatprep.mubr.f32.mxu0 0.0
    %338 = vmatmul.mubr.f32.gmra.mxu0 %v259
    %v339 = vpop.f32.mrf.mxu0
    %v340 = vadd.f32 %v245, %v339
    %v341 = vpop.f32.mrf.mxu0
    %v342 = vadd.f32 %v249, %v341
    %343 = vdwg.mxu0
    %v344 = vmul.f32 %v328, 0.17677669
    %v345 = vmul.f32 %v334, 0.17677669
    %v346 = vmul.f32 %v340, 0.17677669
    %v347 = vxor.u32 %v328, 2147483648
    %v348 = vxor.u32 %v334, 2147483648
    %v349 = vxor.u32 %v340, 2147483648
    %v350 = vmul.f32 %v347, 1.442695
    %v351 = vpow.pop %v350
    %v352 = vmul.f32 %v348, 1.442695
    %v353 = vpow.pop %v352
    %v354 = vmul.f32 %v349, 1.442695
    %v355 = vpow.pop %v354
    %v356 = vadd.f32 %v351, 1.0
    %v357 = vadd.f32 %v353, 1.0
    %v358 = vadd.f32 %v355, 1.0
    %v359 = vrcp.pop %v356
    %v360 = vmul.f32 1.0, %v359
    %v361 = vrcp.pop %v357
    %v362 = vmul.f32 1.0, %v361
    %v363 = vrcp.pop %v358
    %v364 = vmul.f32 1.0, %v363
    %v365 = vsub.f32 0.0, %v330
    %v366 = vsub.f32 0.0, %v336
    %v367 = vsub.f32 0.0, %v342
    %v368 = vmax.f32 %v365, 0.0
    %v369 = vmax.f32 %v366, 0.0
    %v370 = vmax.f32 %v367, 0.0
    %vm371 = vcmp.ne.f32.partialorder %v365, %v365
    %vm372 = vcmp.ne.f32.partialorder %v366, %v366
    %vm373 = vcmp.ne.f32.partialorder %v367, %v367
    %v374 = vadd.f32 %v365, 0.0
    %v375 = vadd.f32 %v366, 0.0
    %v376 = vadd.f32 %v367, 0.0
    %v377 = vand.u32 2147483647, %v365
    %v378 = vand.u32 2147483647, %v366
    %v379 = vand.u32 2147483647, %v367
    %v380 = vsub.f32 0.0, %v377
    %v381 = vsub.f32 0.0, %v378
    %v382 = vsub.f32 0.0, %v379
    %v383 = vmul.f32 %v380, 1.442695
    %v384 = vpow.pop %v383
    %v385 = vmul.f32 %v381, 1.442695
    %v386 = vpow.pop %v385
    %v387 = vmul.f32 %v382, 1.442695
    %v388 = vpow.pop %v387
    %v389 = vadd.f32 %v384, 1.0
    %v390 = vlog2.pop %v389
    %v391 = vmul.f32 %v390, 0.6931472
    %v392 = vmul.f32 -0.5, %v384
    %v393 = vadd.f32 %v392, 1.0
    %v394 = vmul.f32 %v393, %v384
    %v395 = vand.u32 2147483647, %v384
    %vm396 = vcmp.lt.f32.partialorder %v395, 0.0004427343
    %v397 = vsel %vm396, %v394, %v391
    %v398 = vadd.f32 %v386, 1.0
    %v399 = vlog2.pop %v398
    %v400 = vmul.f32 %v399, 0.6931472
    %v401 = vmul.f32 -0.5, %v386
    %v402 = vadd.f32 %v401, 1.0
    %v403 = vmul.f32 %v402, %v386
    %v404 = vand.u32 2147483647, %v386
    %vm405 = vcmp.lt.f32.partialorder %v404, 0.0004427343
    %v406 = vsel %vm405, %v403, %v400
    %v407 = vadd.f32 %v388, 1.0
    %v408 = vlog2.pop %v407
    %v409 = vmul.f32 %v408, 0.6931472
    %v410 = vmul.f32 -0.5, %v388
    %v411 = vadd.f32 %v410, 1.0
    %v412 = vmul.f32 %v411, %v388
    %v413 = vand.u32 2147483647, %v388
    %vm414 = vcmp.lt.f32.partialorder %v413, 0.0004427343
    %v415 = vsel %vm414, %v412, %v409
    %v416 = vadd.f32 %v368, %v397
    %v417 = vadd.f32 %v369, %v406
    %v418 = vadd.f32 %v370, %v415
    %v419 = vsel %vm371, %v374, %v416
    %v420 = vsel %vm372, %v375, %v417
    %v421 = vsel %vm373, %v376, %v418
    %v422 = vsub.f32 0.0, %v419
    %v423 = vsub.f32 0.0, %v420
    %v424 = vsub.f32 0.0, %v421
    %427 = vrot.lane.b32.xlu0 %v422, 127
    %v428 = vpop.permute.xlu0 %427
    %429 = vrot.lane.b32.xlu0 %v423, 127
    %v430 = vpop.permute.xlu0 %429
    %433 = vxpose.xlu0.b32.start [1/16] %v428, 128
    %434 = vxpose.xlu0.b32.cont [2/16] %v430, 128
    %435 = vxpose.xlu0.b32.cont [3/16] 0.0, 128
    %436 = vxpose.xlu0.b32.cont [4/16] 0.0, 128
    %437 = vxpose.xlu0.b32.cont [5/16] 0.0, 128
    %438 = vxpose.xlu0.b32.cont [6/16] 0.0, 128
    %439 = vxpose.xlu0.b32.cont [7/16] 0.0, 128
    %440 = vxpose.xlu0.b32.cont [8/16] 0.0, 128
    %441 = vxpose.xlu0.b32.cont [9/16] 0.0, 128
    %442 = vxpose.xlu0.b32.cont [10/16] 0.0, 128
    %443 = vxpose.xlu0.b32.cont [11/16] 0.0, 128
    %444 = vxpose.xlu0.b32.cont [12/16] 0.0, 128
    %445 = vxpose.xlu0.b32.cont [13/16] 0.0, 128
    %446 = vxpose.xlu0.b32.cont [14/16] 0.0, 128
    %447 = vxpose.xlu0.b32.cont [15/16] 0.0, 128
    %448 = vxpose.xlu0.b32.end [16/16] 0.0, 128
    %v449 = vpop.trf.xlu0
    %v450 = vpop.trf.xlu0
    %v451 = vpop.trf.xlu0
    %v452 = vpop.trf.xlu0
    %v453 = vpop.trf.xlu0
    %v454 = vpop.trf.xlu0
    %v455 = vpop.trf.xlu0
    %v456 = vpop.trf.xlu0
    %v457 = vpop.trf.xlu0
    %v458 = vpop.trf.xlu0
    %v459 = vpop.trf.xlu0
    %v460 = vpop.trf.xlu0
    %v461 = vpop.trf.xlu0
    %v462 = vpop.trf.xlu0
    %v463 = vpop.trf.xlu0
    %v464 = vpop.trf.xlu0
    %v465 = vlaneseq
    %v466 = vshrl.u32 %v465, 7
    %v467 = vsub.s32 0, %v466
    %v468 = vrot.slane %v449, %v467
    %v469 = vsel %vm162, %v468, 0.0
    %v470 = vsel %vm163, %v468, 0.0
    %vm471 = vcmask 80896
    %v472 = vsel %vm471, %v469, 0.0
    %473 = vadd.xlane.f32.xlu0 %v472
    %v474 = vpop.xlane.xlu0 %473
    %vm475 = vcmask 74752
    %v476 = vsel %vm475, %v470, 0.0
    %477 = vadd.xlane.f32.xlu0 %v476
    %v478 = vpop.xlane.xlu0 %477
    %479 = vxpose.xlu0.b32.start [1/16] %v474, 128
    %480 = vxpose.xlu0.b32.cont [2/16] %v478, 128
    %481 = vxpose.xlu0.b32.cont [3/16] 0.0, 128
    %482 = vxpose.xlu0.b32.cont [4/16] 0.0, 128
    %483 = vxpose.xlu0.b32.cont [5/16] 0.0, 128
    %484 = vxpose.xlu0.b32.cont [6/16] 0.0, 128
    %485 = vxpose.xlu0.b32.cont [7/16] 0.0, 128
    %486 = vxpose.xlu0.b32.cont [8/16] 0.0, 128
    %487 = vxpose.xlu0.b32.cont [9/16] 0.0, 128
    %488 = vxpose.xlu0.b32.cont [10/16] 0.0, 128
    %489 = vxpose.xlu0.b32.cont [11/16] 0.0, 128
    %490 = vxpose.xlu0.b32.cont [12/16] 0.0, 128
    %491 = vxpose.xlu0.b32.cont [13/16] 0.0, 128
    %492 = vxpose.xlu0.b32.cont [14/16] 0.0, 128
    %493 = vxpose.xlu0.b32.cont [15/16] 0.0, 128
    %494 = vxpose.xlu0.b32.end [16/16] 0.0, 128
    %v495 = vpop.trf.xlu0
    %v496 = vpop.trf.xlu0
    %v497 = vpop.trf.xlu0
    %v498 = vpop.trf.xlu0
    %v499 = vpop.trf.xlu0
    %v500 = vpop.trf.xlu0
    %v501 = vpop.trf.xlu0
    %v502 = vpop.trf.xlu0
    %v503 = vpop.trf.xlu0
    %v504 = vpop.trf.xlu0
    %v505 = vpop.trf.xlu0
    %v506 = vpop.trf.xlu0
    %v507 = vpop.trf.xlu0
    %v508 = vpop.trf.xlu0
    %v509 = vpop.trf.xlu0
    %v510 = vpop.trf.xlu0
    %v511 = vlaneseq
    %v512 = vshrl.u32 %v511, 7
    %v513 = vsub.s32 0, %v512
    %v514 = vrot.slane %v495, %v513
    %v515 = vsub.f32 %v474, %v514
    %v516 = vsub.f32 %v478, %v514
    %517 = vxpose.xlu0.b32.start [1/16] %v330, 128
    %518 = vxpose.xlu0.b32.cont [2/16] %v336, 128
    %519 = vxpose.xlu0.b32.cont [3/16] 0.0, 128
    %520 = vxpose.xlu0.b32.cont [4/16] 0.0, 128
    %521 = vxpose.xlu0.b32.cont [5/16] 0.0, 128
    %522 = vxpose.xlu0.b32.cont [6/16] 0.0, 128
    %523 = vxpose.xlu0.b32.cont [7/16] 0.0, 128
    %524 = vxpose.xlu0.b32.cont [8/16] 0.0, 128
    %525 = vxpose.xlu0.b32.cont [9/16] 0.0, 128
    %526 = vxpose.xlu0.b32.cont [10/16] 0.0, 128
    %527 = vxpose.xlu0.b32.cont [11/16] 0.0, 128
    %528 = vxpose.xlu0.b32.cont [12/16] 0.0, 128
    %529 = vxpose.xlu0.b32.cont [13/16] 0.0, 128
    %530 = vxpose.xlu0.b32.cont [14/16] 0.0, 128
    %531 = vxpose.xlu0.b32.cont [15/16] 0.0, 128
    %532 = vxpose.xlu0.b32.end [16/16] 0.0, 128
    %v533 = vpop.trf.xlu0
    %v534 = vpop.trf.xlu0
    %v535 = vpop.trf.xlu0
    %v536 = vpop.trf.xlu0
    %v537 = vpop.trf.xlu0
    %v538 = vpop.trf.xlu0
    %v539 = vpop.trf.xlu0
    %v540 = vpop.trf.xlu0
    %v541 = vpop.trf.xlu0
    %v542 = vpop.trf.xlu0
    %v543 = vpop.trf.xlu0
    %v544 = vpop.trf.xlu0
    %v545 = vpop.trf.xlu0
    %v546 = vpop.trf.xlu0
    %v547 = vpop.trf.xlu0
    %v548 = vpop.trf.xlu0
    %v549 = vlaneseq
    %v550 = vshrl.u32 %v549, 7
    %v551 = vsub.s32 0, %v550
    %v552 = vrot.slane %v533, %v551
    %v553 = vadd.f32 %v515, %v552
    %v554 = vadd.f32 %v516, %v552
    %v555 = vsel %vm162, %v553, -1e+30
    %v556 = vsel %vm163, %v554, -1e+30
    %v557 = vsel %vm471, %v555, -inf
    %558 = vmax.xlane.f32.xlu0 %v557
    %v559 = vpop.xlane.xlu0 %558
    %v560 = vsel %vm475, %v556, -inf
    %561 = vmax.xlane.f32.xlu0 %v560
    %v562 = vpop.xlane.xlu0 %561
    %v563 = vsub.f32 %v555, %v559
    %v564 = vsub.f32 %v556, %v562
    %v565 = vmul.f32 %v563, 1.442695
    %v566 = vpow.pop %v565
    %v567 = vmul.f32 %v564, 1.442695
    %v568 = vpow.pop %v567
    %571 = vrot.lane.b32.xlu0 %v344, 96
    %v572 = vpop.permute.xlu0 %571
    %573 = vrot.lane.b32.xlu0 %v345, 96
    %v574 = vpop.permute.xlu0 %573
    %v576 = vsel %vm182, %v328, 0
    %v579 = vsel %vm182, %v334, 0
    %v581 = vsel %vm182, %v572, 0
    %v583 = vsel %vm182, %v574, 0
    %585 = vmatprep.subr.mxu0 0.0
    %586 = vmatpush1.xpose.msra.mxu0 0.0
    %587 = vmatprep.subr.mxu0 0.0
    %588 = vmatpush1.xpose.msra.mxu0 0.0
    %589 = vmatprep.subr.mxu0 0.0
    %590 = vmatpush1.xpose.msra.mxu0 0.0
    %591 = vmatprep.subr.mxu0 0.0
    %592 = vmatpush1.xpose.msra.mxu0 0.0
    %593 = vmatprep.subr.mxu0 0.0
    %594 = vmatpush1.xpose.msra.mxu0 0.0
    %595 = vmatprep.subr.mxu0 0.0
    %596 = vmatpush1.xpose.msra.mxu0 0.0
    %597 = vmatprep.subr.mxu0 0.0
    %598 = vmatpush1.xpose.msra.mxu0 0.0
    %599 = vmatprep.subr.mxu0 0.0
    %600 = vmatpush1.xpose.msra.mxu0 0.0
    %601 = vmatprep.subr.mxu0 0.0
    %602 = vmatpush1.xpose.msra.mxu0 0.0
    %603 = vmatprep.subr.mxu0 0.0
    %604 = vmatpush1.xpose.msra.mxu0 0.0
    %605 = vmatprep.subr.mxu0 0.0
    %606 = vmatpush1.xpose.msra.mxu0 0.0
    %607 = vmatprep.subr.mxu0 0.0
    %608 = vmatpush1.xpose.msra.mxu0 0.0
    %609 = vmatprep.subr.mxu0 0.0
    %610 = vmatpush1.xpose.msra.mxu0 0.0
    %611 = vmatprep.subr.mxu0 0.0
    %612 = vmatpush1.xpose.msra.mxu0 0.0
    %613 = vmatprep.subr.mxu0 0.0
    %614 = vmatpush1.xpose.msra.mxu0 %v583
    %615 = vmatprep.subr.mxu0 0.0
    %616 = vmatpush1.xpose.msra.mxu0 %v581
    %617 = vmatprep.subr.mxu0 0.0
    %618 = vmatpush2.xpose.msra.mxu0 0.0
    %619 = vmatprep.subr.mxu0 0.0
    %620 = vmatpush2.xpose.msra.mxu0 0.0
    %621 = vmatprep.subr.mxu0 0.0
    %622 = vmatpush2.xpose.msra.mxu0 0.0
    %623 = vmatprep.subr.mxu0 0.0
    %624 = vmatpush2.xpose.msra.mxu0 0.0
    %625 = vmatprep.subr.mxu0 0.0
    %626 = vmatpush2.xpose.msra.mxu0 0.0
    %627 = vmatprep.subr.mxu0 0.0
    %628 = vmatpush2.xpose.msra.mxu0 0.0
    %629 = vmatprep.subr.mxu0 0.0
    %630 = vmatpush2.xpose.msra.mxu0 0.0
    %631 = vmatprep.subr.mxu0 0.0
    %632 = vmatpush2.xpose.msra.mxu0 0.0
    %633 = vmatprep.subr.mxu0 0.0
    %634 = vmatpush2.xpose.msra.mxu0 0.0
    %635 = vmatprep.subr.mxu0 0.0
    %636 = vmatpush2.xpose.msra.mxu0 0.0
    %637 = vmatprep.subr.mxu0 0.0
    %638 = vmatpush2.xpose.msra.mxu0 0.0
    %639 = vmatprep.subr.mxu0 0.0
    %640 = vmatpush2.xpose.msra.mxu0 0.0
    %641 = vmatprep.subr.mxu0 0.0
    %642 = vmatpush2.xpose.msra.mxu0 0.0
    %643 = vmatprep.subr.mxu0 0.0
    %644 = vmatpush2.xpose.msra.mxu0 0.0
    %645 = vmatprep.subr.mxu0 0.0
    %646 = vmatpush2.xpose.msra.mxu0 0.0
    %647 = vmatprep.subr.mxu0 0.0
    %648 = vmatpush2.xpose.msra.mxu0 0.0
    %649 = vmatprep.mubr.f32.mxu0 0.0
    %650 = vmatmul.mubr.f32.gmra.mxu0 %v576
    %v651 = vpop.f32.mrf.mxu0
    %v652 = vadd.f32 0.0, %v651
    %v653 = vpop.f32.mrf.mxu0
    %654 = vmatprep.mubr.f32.mxu0 0.0
    %655 = vmatmul.mubr.f32.gmra.mxu0 %v579
    %v656 = vpop.f32.mrf.mxu0
    %v657 = vadd.f32 0.0, %v656
    %v658 = vpop.f32.mrf.mxu0
    %659 = vdwg.mxu0
    %v660 = vmul.f32 %v652, %v566
    %v661 = vmul.f32 %v657, %v568
    %v662 = vsel %vm471, %v660, 0.0
    %663 = vadd.xlane.f32.xlu0 %v662
    %v664 = vpop.xlane.xlu0 %663
    %v665 = vsel %vm475, %v661, 0.0
    %666 = vadd.xlane.f32.xlu0 %v665
    %v667 = vpop.xlane.xlu0 %666
    %v668 = vand.u32 2147483647, %v664
    %v669 = vand.u32 2147483647, %v667
    %v670 = vsub.f32 0.0, %v559
    %v671 = vsub.f32 0.0, %v562
    %v672 = vmul.f32 %v670, 1.442695
    %v673 = vpow.pop %v672
    %v674 = vmul.f32 %v671, 1.442695
    %v675 = vpow.pop %v674
    %v676 = vmax.f32 %v668, %v673
    %v677 = vmax.f32 %v669, %v675
    %v678 = vrcp.pop %v676
    %v679 = vrcp.pop %v677
    %v680 = vmul.f32 %v660, %v678
    %v681 = vmul.f32 %v661, %v679
    %682 = vrot.lane.b32.xlu0 %v328, 64
    %v683 = vpop.permute.xlu0 %682
    %684 = vrot.lane.b32.xlu0 %v334, 64
    %v685 = vpop.permute.xlu0 %684
    %v688 = vsel %vm471, %v680, 0
    %v691 = vsel %vm471, %v681, 0
    %vm693 = vcmask 1041408
    %v694 = vsel %vm693, %v685, 0
    %696 = vmatprep.subr.mxu0 0.0
    %697 = vmatpush1.msra.mxu0 0.0
    %698 = vmatprep.subr.mxu0 0.0
    %699 = vmatpush1.msra.mxu0 0.0
    %700 = vmatprep.subr.mxu0 0.0
    %701 = vmatpush1.msra.mxu0 0.0
    %702 = vmatprep.subr.mxu0 0.0
    %703 = vmatpush1.msra.mxu0 0.0
    %704 = vmatprep.subr.mxu0 0.0
    %705 = vmatpush1.msra.mxu0 0.0
    %706 = vmatprep.subr.mxu0 0.0
    %707 = vmatpush1.msra.mxu0 0.0
    %708 = vmatprep.subr.mxu0 0.0
    %709 = vmatpush1.msra.mxu0 0.0
    %710 = vmatprep.subr.mxu0 0.0
    %711 = vmatpush1.msra.mxu0 0.0
    %712 = vmatprep.subr.mxu0 0.0
    %713 = vmatpush1.msra.mxu0 0.0
    %714 = vmatprep.subr.mxu0 0.0
    %715 = vmatpush1.msra.mxu0 0.0
    %716 = vmatprep.subr.mxu0 0.0
    %717 = vmatpush1.msra.mxu0 0.0
    %718 = vmatprep.subr.mxu0 0.0
    %719 = vmatpush1.msra.mxu0 0.0
    %720 = vmatprep.subr.mxu0 0.0
    %721 = vmatpush1.msra.mxu0 0.0
    %722 = vmatprep.subr.mxu0 0.0
    %723 = vmatpush1.msra.mxu0 0.0
    %724 = vmatprep.subr.mxu0 0.0
    %725 = vmatpush1.msra.mxu0 %v694
    %726 = vmatprep.subr.mxu0 0.0
    %727 = vmatpush1.msra.mxu0 %v683
    %728 = vmatprep.subr.mxu0 0.0
    %729 = vmatpush2.msra.mxu0 0.0
    %730 = vmatprep.subr.mxu0 0.0
    %731 = vmatpush2.msra.mxu0 0.0
    %732 = vmatprep.subr.mxu0 0.0
    %733 = vmatpush2.msra.mxu0 0.0
    %734 = vmatprep.subr.mxu0 0.0
    %735 = vmatpush2.msra.mxu0 0.0
    %736 = vmatprep.subr.mxu0 0.0
    %737 = vmatpush2.msra.mxu0 0.0
    %738 = vmatprep.subr.mxu0 0.0
    %739 = vmatpush2.msra.mxu0 0.0
    %740 = vmatprep.subr.mxu0 0.0
    %741 = vmatpush2.msra.mxu0 0.0
    %742 = vmatprep.subr.mxu0 0.0
    %743 = vmatpush2.msra.mxu0 0.0
    %744 = vmatprep.subr.mxu0 0.0
    %745 = vmatpush2.msra.mxu0 0.0
    %746 = vmatprep.subr.mxu0 0.0
    %747 = vmatpush2.msra.mxu0 0.0
    %748 = vmatprep.subr.mxu0 0.0
    %749 = vmatpush2.msra.mxu0 0.0
    %750 = vmatprep.subr.mxu0 0.0
    %751 = vmatpush2.msra.mxu0 0.0
    %752 = vmatprep.subr.mxu0 0.0
    %753 = vmatpush2.msra.mxu0 0.0
    %754 = vmatprep.subr.mxu0 0.0
    %755 = vmatpush2.msra.mxu0 0.0
    %756 = vmatprep.subr.mxu0 0.0
    %757 = vmatpush2.msra.mxu0 0.0
    %758 = vmatprep.subr.mxu0 0.0
    %759 = vmatpush2.msra.mxu0 0.0
    %760 = vmatprep.mubr.f32.mxu0 0.0
    %761 = vmatmul.mubr.f32.gmra.mxu0 %v688
    %v762 = vpop.f32.mrf.mxu0
    %v763 = vadd.f32 0.0, %v762
    %v764 = vpop.f32.mrf.mxu0
    %765 = vmatprep.mubr.f32.mxu0 0.0
    %766 = vmatmul.mubr.f32.gmra.mxu0 %v691
    %v767 = vpop.f32.mrf.mxu0
    %v768 = vadd.f32 0.0, %v767
    %v769 = vpop.f32.mrf.mxu0
    %770 = vdwg.mxu0
    %771 = vst.msk [vmem:[#allocation3] sm:$0xff] %vm182, %v763
    %vm772 = vcmask 254976
    %773 = vst.msk [vmem:[#allocation3 + $0x8] sm:$0x3] %vm772, %v768
    %vm775 = vcmask 1045504
    %v776 = vrot.slane %v423, 2
    %v777 = vrot.slane %v424, 2
    %v778 = vsel %vm775, %v776, %v777
    %779 = vrot.lane.b32.xlu0 %v778, 127
    %v780 = vpop.permute.xlu0 %779
    %781 = vrot.lane.b32.xlu0 %v777, 127
    %v782 = vpop.permute.xlu0 %781
    %785 = vxpose.xlu0.b32.start [1/16] %v780, 128
    %786 = vxpose.xlu0.b32.cont [2/16] %v782, 128
    %787 = vxpose.xlu0.b32.cont [3/16] 0.0, 128
    %788 = vxpose.xlu0.b32.cont [4/16] 0.0, 128
    %789 = vxpose.xlu0.b32.cont [5/16] 0.0, 128
    %790 = vxpose.xlu0.b32.cont [6/16] 0.0, 128
    %791 = vxpose.xlu0.b32.cont [7/16] 0.0, 128
    %792 = vxpose.xlu0.b32.cont [8/16] 0.0, 128
    %793 = vxpose.xlu0.b32.cont [9/16] 0.0, 128
    %794 = vxpose.xlu0.b32.cont [10/16] 0.0, 128
    %795 = vxpose.xlu0.b32.cont [11/16] 0.0, 128
    %796 = vxpose.xlu0.b32.cont [12/16] 0.0, 128
    %797 = vxpose.xlu0.b32.cont [13/16] 0.0, 128
    %798 = vxpose.xlu0.b32.cont [14/16] 0.0, 128
    %799 = vxpose.xlu0.b32.cont [15/16] 0.0, 128
    %800 = vxpose.xlu0.b32.end [16/16] 0.0, 128
    %v801 = vpop.trf.xlu0
    %v802 = vpop.trf.xlu0
    %v803 = vpop.trf.xlu0
    %v804 = vpop.trf.xlu0
    %v805 = vpop.trf.xlu0
    %v806 = vpop.trf.xlu0
    %v807 = vpop.trf.xlu0
    %v808 = vpop.trf.xlu0
    %v809 = vpop.trf.xlu0
    %v810 = vpop.trf.xlu0
    %v811 = vpop.trf.xlu0
    %v812 = vpop.trf.xlu0
    %v813 = vpop.trf.xlu0
    %v814 = vpop.trf.xlu0
    %v815 = vpop.trf.xlu0
    %v816 = vpop.trf.xlu0
    %v817 = vlaneseq
    %v818 = vshrl.u32 %v817, 7
    %v819 = vsub.s32 0, %v818
    %v820 = vrot.slane %v801, %v819
    %v821 = vsel %vm162, %v820, 0.0
    %v822 = vsel %vm163, %v820, 0.0
    %v823 = vsel %vm471, %v821, 0.0
    %824 = vadd.xlane.f32.xlu0 %v823
    %v825 = vpop.xlane.xlu0 %824
    %v826 = vsel %vm475, %v822, 0.0
    %827 = vadd.xlane.f32.xlu0 %v826
    %v828 = vpop.xlane.xlu0 %827
    %829 = vxpose.xlu0.b32.start [1/16] %v825, 128
    %830 = vxpose.xlu0.b32.cont [2/16] %v828, 128
    %831 = vxpose.xlu0.b32.cont [3/16] 0.0, 128
    %832 = vxpose.xlu0.b32.cont [4/16] 0.0, 128
    %833 = vxpose.xlu0.b32.cont [5/16] 0.0, 128
    %834 = vxpose.xlu0.b32.cont [6/16] 0.0, 128
    %835 = vxpose.xlu0.b32.cont [7/16] 0.0, 128
    %836 = vxpose.xlu0.b32.cont [8/16] 0.0, 128
    %837 = vxpose.xlu0.b32.cont [9/16] 0.0, 128
    %838 = vxpose.xlu0.b32.cont [10/16] 0.0, 128
    %839 = vxpose.xlu0.b32.cont [11/16] 0.0, 128
    %840 = vxpose.xlu0.b32.cont [12/16] 0.0, 128
    %841 = vxpose.xlu0.b32.cont [13/16] 0.0, 128
    %842 = vxpose.xlu0.b32.cont [14/16] 0.0, 128
    %843 = vxpose.xlu0.b32.cont [15/16] 0.0, 128
    %844 = vxpose.xlu0.b32.end [16/16] 0.0, 128
    %v845 = vpop.trf.xlu0
    %v846 = vpop.trf.xlu0
    %v847 = vpop.trf.xlu0
    %v848 = vpop.trf.xlu0
    %v849 = vpop.trf.xlu0
    %v850 = vpop.trf.xlu0
    %v851 = vpop.trf.xlu0
    %v852 = vpop.trf.xlu0
    %v853 = vpop.trf.xlu0
    %v854 = vpop.trf.xlu0
    %v855 = vpop.trf.xlu0
    %v856 = vpop.trf.xlu0
    %v857 = vpop.trf.xlu0
    %v858 = vpop.trf.xlu0
    %v859 = vpop.trf.xlu0
    %v860 = vpop.trf.xlu0
    %v861 = vlaneseq
    %v862 = vshrl.u32 %v861, 7
    %v863 = vsub.s32 0, %v862
    %v864 = vrot.slane %v845, %v863
    %v865 = vsub.f32 %v825, %v864
    %v866 = vsub.f32 %v828, %v864
    %v869 = vrot.slane %v336, 2
    %v870 = vrot.slane %v342, 2
    %v871 = vsel %vm775, %v869, %v870
    %874 = vxpose.xlu0.b32.start [1/16] %v871, 128
    %875 = vxpose.xlu0.b32.cont [2/16] %v870, 128
    %876 = vxpose.xlu0.b32.cont [3/16] 0.0, 128
    %877 = vxpose.xlu0.b32.cont [4/16] 0.0, 128
    %878 = vxpose.xlu0.b32.cont [5/16] 0.0, 128
    %879 = vxpose.xlu0.b32.cont [6/16] 0.0, 128
    %880 = vxpose.xlu0.b32.cont [7/16] 0.0, 128
    %881 = vxpose.xlu0.b32.cont [8/16] 0.0, 128
    %882 = vxpose.xlu0.b32.cont [9/16] 0.0, 128
    %883 = vxpose.xlu0.b32.cont [10/16] 0.0, 128
    %884 = vxpose.xlu0.b32.cont [11/16] 0.0, 128
    %885 = vxpose.xlu0.b32.cont [12/16] 0.0, 128
    %886 = vxpose.xlu0.b32.cont [13/16] 0.0, 128
    %887 = vxpose.xlu0.b32.cont [14/16] 0.0, 128
    %888 = vxpose.xlu0.b32.cont [15/16] 0.0, 128
    %889 = vxpose.xlu0.b32.end [16/16] 0.0, 128
    %v890 = vpop.trf.xlu0
    %v891 = vpop.trf.xlu0
    %v892 = vpop.trf.xlu0
    %v893 = vpop.trf.xlu0
    %v894 = vpop.trf.xlu0
    %v895 = vpop.trf.xlu0
    %v896 = vpop.trf.xlu0
    %v897 = vpop.trf.xlu0
    %v898 = vpop.trf.xlu0
    %v899 = vpop.trf.xlu0
    %v900 = vpop.trf.xlu0
    %v901 = vpop.trf.xlu0
    %v902 = vpop.trf.xlu0
    %v903 = vpop.trf.xlu0
    %v904 = vpop.trf.xlu0
    %v905 = vpop.trf.xlu0
    %v906 = vlaneseq
    %v907 = vshrl.u32 %v906, 7
    %v908 = vsub.s32 0, %v907
    %v909 = vrot.slane %v890, %v908
    %v910 = vadd.f32 %v865, %v909
    %v911 = vadd.f32 %v866, %v909
    %v912 = vsel %vm162, %v910, -1e+30
    %v913 = vsel %vm163, %v911, -1e+30
    %v914 = vsel %vm471, %v912, -inf
    %915 = vmax.xlane.f32.xlu0 %v914
    %v916 = vpop.xlane.xlu0 %915
    %v917 = vsel %vm475, %v913, -inf
    %918 = vmax.xlane.f32.xlu0 %v917
    %v919 = vpop.xlane.xlu0 %918
    %v920 = vsub.f32 %v912, %v916
    %v921 = vsub.f32 %v913, %v919
    %v922 = vmul.f32 %v920, 1.442695
    %v923 = vpow.pop %v922
    %v924 = vmul.f32 %v921, 1.442695
    %v925 = vpow.pop %v924
    %v927 = vrot.slane %v334, 2
    %v928 = vrot.slane %v340, 2
    %v929 = vsel %vm775, %v927, %v928
    %v931 = vrot.slane %v345, 2
    %v932 = vrot.slane %v346, 2
    %v933 = vsel %vm775, %v931, %v932
    %934 = vrot.lane.b32.xlu0 %v933, 96
    %v935 = vpop.permute.xlu0 %934
    %936 = vrot.lane.b32.xlu0 %v932, 96
    %v937 = vpop.permute.xlu0 %936
    %v938 = vsel %vm182, %v929, 0
    %v940 = vsel %vm182, %v928, 0
    %v942 = vsel %vm182, %v935, 0
    %v944 = vsel %vm182, %v937, 0
    %946 = vmatprep.subr.mxu0 0.0
    %947 = vmatpush1.xpose.msra.mxu0 0.0
    %948 = vmatprep.subr.mxu0 0.0
    %949 = vmatpush1.xpose.msra.mxu0 0.0
    %950 = vmatprep.subr.mxu0 0.0
    %951 = vmatpush1.xpose.msra.mxu0 0.0
    %952 = vmatprep.subr.mxu0 0.0
    %953 = vmatpush1.xpose.msra.mxu0 0.0
    %954 = vmatprep.subr.mxu0 0.0
    %955 = vmatpush1.xpose.msra.mxu0 0.0
    %956 = vmatprep.subr.mxu0 0.0
    %957 = vmatpush1.xpose.msra.mxu0 0.0
    %958 = vmatprep.subr.mxu0 0.0
    %959 = vmatpush1.xpose.msra.mxu0 0.0
    %960 = vmatprep.subr.mxu0 0.0
    %961 = vmatpush1.xpose.msra.mxu0 0.0
    %962 = vmatprep.subr.mxu0 0.0
    %963 = vmatpush1.xpose.msra.mxu0 0.0
    %964 = vmatprep.subr.mxu0 0.0
    %965 = vmatpush1.xpose.msra.mxu0 0.0
    %966 = vmatprep.subr.mxu0 0.0
    %967 = vmatpush1.xpose.msra.mxu0 0.0
    %968 = vmatprep.subr.mxu0 0.0
    %969 = vmatpush1.xpose.msra.mxu0 0.0
    %970 = vmatprep.subr.mxu0 0.0
    %971 = vmatpush1.xpose.msra.mxu0 0.0
    %972 = vmatprep.subr.mxu0 0.0
    %973 = vmatpush1.xpose.msra.mxu0 0.0
    %974 = vmatprep.subr.mxu0 0.0
    %975 = vmatpush1.xpose.msra.mxu0 %v944
    %976 = vmatprep.subr.mxu0 0.0
    %977 = vmatpush1.xpose.msra.mxu0 %v942
    %978 = vmatprep.subr.mxu0 0.0
    %979 = vmatpush2.xpose.msra.mxu0 0.0
    %980 = vmatprep.subr.mxu0 0.0
    %981 = vmatpush2.xpose.msra.mxu0 0.0
    %982 = vmatprep.subr.mxu0 0.0
    %983 = vmatpush2.xpose.msra.mxu0 0.0
    %984 = vmatprep.subr.mxu0 0.0
    %985 = vmatpush2.xpose.msra.mxu0 0.0
    %986 = vmatprep.subr.mxu0 0.0
    %987 = vmatpush2.xpose.msra.mxu0 0.0
    %988 = vmatprep.subr.mxu0 0.0
    %989 = vmatpush2.xpose.msra.mxu0 0.0
    %990 = vmatprep.subr.mxu0 0.0
    %991 = vmatpush2.xpose.msra.mxu0 0.0
    %992 = vmatprep.subr.mxu0 0.0
    %993 = vmatpush2.xpose.msra.mxu0 0.0
    %994 = vmatprep.subr.mxu0 0.0
    %995 = vmatpush2.xpose.msra.mxu0 0.0
    %996 = vmatprep.subr.mxu0 0.0
    %997 = vmatpush2.xpose.msra.mxu0 0.0
    %998 = vmatprep.subr.mxu0 0.0
    %999 = vmatpush2.xpose.msra.mxu0 0.0
    %1000 = vmatprep.subr.mxu0 0.0
    %1001 = vmatpush2.xpose.msra.mxu0 0.0
    %1002 = vmatprep.subr.mxu0 0.0
    %1003 = vmatpush2.xpose.msra.mxu0 0.0
    %1004 = vmatprep.subr.mxu0 0.0
    %1005 = vmatpush2.xpose.msra.mxu0 0.0
    %1006 = vmatprep.subr.mxu0 0.0
    %1007 = vmatpush2.xpose.msra.mxu0 0.0
    %1008 = vmatprep.subr.mxu0 0.0
    %1009 = vmatpush2.xpose.msra.mxu0 0.0
    %1010 = vmatprep.mubr.f32.mxu0 0.0
    %1011 = vmatmul.mubr.f32.gmra.mxu0 %v938
    %v1012 = vpop.f32.mrf.mxu0
    %v1013 = vadd.f32 0.0, %v1012
    %v1014 = vpop.f32.mrf.mxu0
    %1015 = vmatprep.mubr.f32.mxu0 0.0
    %1016 = vmatmul.mubr.f32.gmra.mxu0 %v940
    %v1017 = vpop.f32.mrf.mxu0
    %v1018 = vadd.f32 0.0, %v1017
    %v1019 = vpop.f32.mrf.mxu0
    %1020 = vdwg.mxu0
    %v1021 = vmul.f32 %v1013, %v923
    %v1022 = vmul.f32 %v1018, %v925
    %v1023 = vsel %vm471, %v1021, 0.0
    %1024 = vadd.xlane.f32.xlu0 %v1023
    %v1025 = vpop.xlane.xlu0 %1024
    %v1026 = vsel %vm475, %v1022, 0.0
    %1027 = vadd.xlane.f32.xlu0 %v1026
    %v1028 = vpop.xlane.xlu0 %1027
    %v1029 = vand.u32 2147483647, %v1025
    %v1030 = vand.u32 2147483647, %v1028
    %v1031 = vsub.f32 0.0, %v916
    %v1032 = vsub.f32 0.0, %v919
    %v1033 = vmul.f32 %v1031, 1.442695
    %v1034 = vpow.pop %v1033
    %v1035 = vmul.f32 %v1032, 1.442695
    %v1036 = vpow.pop %v1035
    %v1037 = vmax.f32 %v1029, %v1034
    %v1038 = vmax.f32 %v1030, %v1036
    %v1039 = vrcp.pop %v1037
    %v1040 = vrcp.pop %v1038
    %v1041 = vmul.f32 %v1021, %v1039
    %v1042 = vmul.f32 %v1022, %v1040
    %1043 = vrot.lane.b32.xlu0 %v929, 64
    %v1044 = vpop.permute.xlu0 %1043
    %1045 = vrot.lane.b32.xlu0 %v928, 64
    %v1046 = vpop.permute.xlu0 %1045
    %v1049 = vsel %vm471, %v1041, 0
    %v1052 = vsel %vm471, %v1042, 0
    %v1054 = vsel %vm693, %v1046, 0
    %1056 = vmatprep.subr.mxu0 0.0
    %1057 = vmatpush1.msra.mxu0 0.0
    %1058 = vmatprep.subr.mxu0 0.0
    %1059 = vmatpush1.msra.mxu0 0.0
    %1060 = vmatprep.subr.mxu0 0.0
    %1061 = vmatpush1.msra.mxu0 0.0
    %1062 = vmatprep.subr.mxu0 0.0
    %1063 = vmatpush1.msra.mxu0 0.0
    %1064 = vmatprep.subr.mxu0 0.0
    %1065 = vmatpush1.msra.mxu0 0.0
    %1066 = vmatprep.subr.mxu0 0.0
    %1067 = vmatpush1.msra.mxu0 0.0
    %1068 = vmatprep.subr.mxu0 0.0
    %1069 = vmatpush1.msra.mxu0 0.0
    %1070 = vmatprep.subr.mxu0 0.0
    %1071 = vmatpush1.msra.mxu0 0.0
    %1072 = vmatprep.subr.mxu0 0.0
    %1073 = vmatpush1.msra.mxu0 0.0
    %1074 = vmatprep.subr.mxu0 0.0
    %1075 = vmatpush1.msra.mxu0 0.0
    %1076 = vmatprep.subr.mxu0 0.0
    %1077 = vmatpush1.msra.mxu0 0.0
    %1078 = vmatprep.subr.mxu0 0.0
    %1079 = vmatpush1.msra.mxu0 0.0
    %1080 = vmatprep.subr.mxu0 0.0
    %1081 = vmatpush1.msra.mxu0 0.0
    %1082 = vmatprep.subr.mxu0 0.0
    %1083 = vmatpush1.msra.mxu0 0.0
    %1084 = vmatprep.subr.mxu0 0.0
    %1085 = vmatpush1.msra.mxu0 %v1054
    %1086 = vmatprep.subr.mxu0 0.0
    %1087 = vmatpush1.msra.mxu0 %v1044
    %1088 = vmatprep.subr.mxu0 0.0
    %1089 = vmatpush2.msra.mxu0 0.0
    %1090 = vmatprep.subr.mxu0 0.0
    %1091 = vmatpush2.msra.mxu0 0.0
    %1092 = vmatprep.subr.mxu0 0.0
    %1093 = vmatpush2.msra.mxu0 0.0
    %1094 = vmatprep.subr.mxu0 0.0
    %1095 = vmatpush2.msra.mxu0 0.0
    %1096 = vmatprep.subr.mxu0 0.0
    %1097 = vmatpush2.msra.mxu0 0.0
    %1098 = vmatprep.subr.mxu0 0.0
    %1099 = vmatpush2.msra.mxu0 0.0
    %1100 = vmatprep.subr.mxu0 0.0
    %1101 = vmatpush2.msra.mxu0 0.0
    %1102 = vmatprep.subr.mxu0 0.0
    %1103 = vmatpush2.msra.mxu0 0.0
    %1104 = vmatprep.subr.mxu0 0.0
    %1105 = vmatpush2.msra.mxu0 0.0
    %1106 = vmatprep.subr.mxu0 0.0
    %1107 = vmatpush2.msra.mxu0 0.0
    %1108 = vmatprep.subr.mxu0 0.0
    %1109 = vmatpush2.msra.mxu0 0.0
    %1110 = vmatprep.subr.mxu0 0.0
    %1111 = vmatpush2.msra.mxu0 0.0
    %1112 = vmatprep.subr.mxu0 0.0
    %1113 = vmatpush2.msra.mxu0 0.0
    %1114 = vmatprep.subr.mxu0 0.0
    %1115 = vmatpush2.msra.mxu0 0.0
    %1116 = vmatprep.subr.mxu0 0.0
    %1117 = vmatpush2.msra.mxu0 0.0
    %1118 = vmatprep.subr.mxu0 0.0
    %1119 = vmatpush2.msra.mxu0 0.0
    %1120 = vmatprep.mubr.f32.mxu0 0.0
    %1121 = vmatmul.mubr.f32.gmra.mxu0 %v1049
    %v1122 = vpop.f32.mrf.mxu0
    %v1123 = vadd.f32 0.0, %v1122
    %v1124 = vpop.f32.mrf.mxu0
    %1125 = vmatprep.mubr.f32.mxu0 0.0
    %1126 = vmatmul.mubr.f32.gmra.mxu0 %v1052
    %v1127 = vpop.f32.mrf.mxu0
    %v1128 = vadd.f32 0.0, %v1127
    %v1129 = vpop.f32.mrf.mxu0
    %1130 = vdwg.mxu0
    %1131 = vst.msk [vmem:[#allocation3 + $0xa] sm:$0xff] %vm182, %v1123
    %1132 = vst.msk [vmem:[#allocation3 + $0x12] sm:$0x3] %vm772, %v1128
    %v1133 = vld [vmem:[#allocation3] sm:$0xff]
    %v1134 = vld [vmem:[#allocation3 + $0x8] sm:$0xff]
    %v1135 = vld [vmem:[#allocation3 + $0x10] sm:$0xf]
    %1139 = vrot.lane.b32.xlu0 %v360, 32
    %v1140 = vpop.permute.xlu0 %1139
    %1141 = vrot.lane.b32.xlu0 %v362, 32
    %v1142 = vpop.permute.xlu0 %1141
    %1143 = vrot.lane.b32.xlu0 %v364, 32
    %v1144 = vpop.permute.xlu0 %1143
    %v1148 = vmul.f32 %v1133, %v1140
    %v1149 = vmul.f32 %v1134, %v1142
    %v1150 = vmul.f32 %v1135, %v1144
    %v1152 = vsel %vm182, %v1148, 0
    %v1155 = vsel %vm182, %v1149, 0
    %v1158 = vsel %vm182, %v1150, 0
    %1160 = vmatprep.subr.mxu0 0.0
    %1161 = vmatpush1.msra.mxu0 0.0
    %1162 = vmatprep.subr.mxu0 0.0
    %1163 = vmatpush1.msra.mxu0 0.0
    %1164 = vmatprep.subr.mxu0 0.0
    %1165 = vmatpush1.msra.mxu0 0.0
    %1166 = vmatprep.subr.mxu0 0.0
    %1167 = vmatpush1.msra.mxu0 0.0
    %1168 = vmatprep.subr.mxu0 0.0
    %1169 = vmatpush1.msra.mxu0 0.0
    %1170 = vmatprep.subr.mxu0 0.0
    %1171 = vmatpush1.msra.mxu0 0.0
    %1172 = vmatprep.subr.mxu0 0.0
    %1173 = vmatpush1.msra.mxu0 0.0
    %1174 = vmatprep.subr.mxu0 0.0
    %1175 = vmatpush1.msra.mxu0 0.0
    %1176 = vmatprep.subr.mxu0 0.0
    %1177 = vmatpush1.msra.mxu0 0.0
    %1178 = vmatprep.subr.mxu0 0.0
    %1179 = vmatpush1.msra.mxu0 0.0
    %1180 = vmatprep.subr.mxu0 0.0
    %1181 = vmatpush1.msra.mxu0 0.0
    %1182 = vmatprep.subr.mxu0 0.0
    %1183 = vmatpush1.msra.mxu0 0.0
    %1184 = vmatprep.subr.mxu0 0.0
    %1185 = vmatpush1.msra.mxu0 %v178
    %1186 = vmatprep.subr.mxu0 0.0
    %1187 = vmatpush1.msra.mxu0 %v177
    %1188 = vmatprep.subr.mxu0 0.0
    %1189 = vmatpush1.msra.mxu0 %v176
    %1190 = vmatprep.subr.mxu0 0.0
    %1191 = vmatpush1.msra.mxu0 %v175
    %1192 = vmatprep.subr.mxu0 0.0
    %1193 = vmatpush2.msra.mxu0 0.0
    %1194 = vmatprep.subr.mxu0 0.0
    %1195 = vmatpush2.msra.mxu0 0.0
    %1196 = vmatprep.subr.mxu0 0.0
    %1197 = vmatpush2.msra.mxu0 0.0
    %1198 = vmatprep.subr.mxu0 0.0
    %1199 = vmatpush2.msra.mxu0 0.0
    %1200 = vmatprep.subr.mxu0 0.0
    %1201 = vmatpush2.msra.mxu0 0.0
    %1202 = vmatprep.subr.mxu0 0.0
    %1203 = vmatpush2.msra.mxu0 0.0
    %1204 = vmatprep.subr.mxu0 0.0
    %1205 = vmatpush2.msra.mxu0 0.0
    %1206 = vmatprep.subr.mxu0 0.0
    %1207 = vmatpush2.msra.mxu0 0.0
    %1208 = vmatprep.subr.mxu0 0.0
    %1209 = vmatpush2.msra.mxu0 0.0
    %1210 = vmatprep.subr.mxu0 0.0
    %1211 = vmatpush2.msra.mxu0 0.0
    %1212 = vmatprep.subr.mxu0 0.0
    %1213 = vmatpush2.msra.mxu0 0.0
    %1214 = vmatprep.subr.mxu0 0.0
    %1215 = vmatpush2.msra.mxu0 0.0
    %1216 = vmatprep.subr.mxu0 0.0
    %1217 = vmatpush2.msra.mxu0 0.0
    %1218 = vmatprep.subr.mxu0 0.0
    %1219 = vmatpush2.msra.mxu0 0.0
    %1220 = vmatprep.subr.mxu0 0.0
    %1221 = vmatpush2.msra.mxu0 0.0
    %1222 = vmatprep.subr.mxu0 0.0
    %1223 = vmatpush2.msra.mxu0 0.0
    %1224 = vmatprep.mubr.f32.mxu0 0.0
    %1225 = vmatmul.mubr.f32.gmra.mxu0 %v1152
    %v1226 = vpop.f32.mrf.mxu0
    %v1227 = vadd.f32 0.0, %v1226
    %v1228 = vpop.f32.mrf.mxu0
    %1229 = vmatprep.mubr.f32.mxu0 0.0
    %1230 = vmatmul.mubr.f32.gmra.mxu0 %v1155
    %v1231 = vpop.f32.mrf.mxu0
    %v1232 = vadd.f32 0.0, %v1231
    %v1233 = vpop.f32.mrf.mxu0
    %1234 = vmatprep.mubr.f32.mxu0 0.0
    %1235 = vmatmul.mubr.f32.gmra.mxu0 %v1158
    %v1236 = vpop.f32.mrf.mxu0
    %v1237 = vadd.f32 0.0, %v1236
    %v1238 = vpop.f32.mrf.mxu0
    %1239 = vdwg.mxu0
    %v1240 = vadd.f32 %v179, %v1227
    %v1241 = vadd.f32 %v180, %v1232
    %v1242 = vadd.f32 %v181, %v1237
    %1243 = vst.msk [vmem:[#allocation2] sm:$0xff] %vm182, %v1240
    %1244 = vst.msk [vmem:[#allocation2 + $0x8] sm:$0xff] %vm182, %v1241
    %1245 = vst.msk [vmem:[#allocation2 + $0x10] sm:$0xf] %vm146, %v1242
    %s1246 = scalar_lea.vmem %s5, 1
    %v1247 = vld [vmem:[%s1246] sm:$0x1]
    %s1248 = scalar_lea.vmem %s6, 1
    %v1249 = vld [vmem:[%s1248] sm:$0x1]
    %s1250 = scalar_lea.vmem %s7, 64
    %v1251 = vld [vmem:[%s1250] sm:$0xff]
    %v1252 = vld [vmem:[%s1250 + $0x8] sm:$0xff]
    %v1253 = vld [vmem:[%s1250 + $0x10] sm:$0xff]
    %v1254 = vld [vmem:[%s1250 + $0x18] sm:$0xff]
    %v1255 = vld [vmem:[%s1250 + $0x20] sm:$0xff]
    %v1256 = vld [vmem:[%s1250 + $0x28] sm:$0xff]
    %v1257 = vld [vmem:[%s1250 + $0x30] sm:$0xff]
    %v1258 = vld [vmem:[%s1250 + $0x38] sm:$0xff]
    %s1259 = scalar_lea.vmem %s8, 2
    %v1260 = vld [vmem:[%s1259] sm:$0x3]
    %s1261 = scalar_lea.vmem %s9, 32
    %v1262 = vld [vmem:[%s1261] sm:$0xff]
    %v1263 = vld [vmem:[%s1261 + $0x8] sm:$0xff]
    %v1264 = vld [vmem:[%s1261 + $0x10] sm:$0xff]
    %v1265 = vld [vmem:[%s1261 + $0x18] sm:$0xff]
    %v1266 = vld [vmem:[#allocation2] sm:$0xff]
    %v1267 = vld [vmem:[#allocation2 + $0x8] sm:$0xff]
    %v1268 = vld [vmem:[#allocation2 + $0x10] sm:$0xf]
    %v1269 = vsel %vm182, %v1266, 0.0
    %1270 = vadd.xlane.f32.xlu0 %v1269
    %v1271 = vpop.xlane.xlu0 %1270
    %v1272 = vsel %vm182, %v1267, 0.0
    %1273 = vadd.xlane.f32.xlu0 %v1272
    %v1274 = vpop.xlane.xlu0 %1273
    %v1275 = vsel %vm146, %v1268, 0.0
    %1276 = vadd.xlane.f32.xlu0 %v1275
    %v1277 = vpop.xlane.xlu0 %1276
    %v1278 = vmul.f32 %v1271, %v192
    %v1279 = vmul.f32 %v1274, %v192
    %v1280 = vmul.f32 %v1277, %v192
    %v1281 = vsub.f32 %v1266, %v1278
    %v1282 = vsub.f32 %v1267, %v1279
    %v1283 = vsub.f32 %v1268, %v1280
    %v1284 = vmul.f32 %v1281, %v1281
    %v1285 = vmul.f32 %v1282, %v1282
    %v1286 = vmul.f32 %v1283, %v1283
    %v1287 = vsel %vm182, %v1284, 0.0
    %1288 = vadd.xlane.f32.xlu0 %v1287
    %v1289 = vpop.xlane.xlu0 %1288
    %v1290 = vsel %vm182, %v1285, 0.0
    %1291 = vadd.xlane.f32.xlu0 %v1290
    %v1292 = vpop.xlane.xlu0 %1291
    %v1293 = vsel %vm146, %v1286, 0.0
    %1294 = vadd.xlane.f32.xlu0 %v1293
    %v1295 = vpop.xlane.xlu0 %1294
    %v1296 = vmul.f32 %v1289, %v192
    %v1297 = vmul.f32 %v1292, %v192
    %v1298 = vmul.f32 %v1295, %v192
    %v1299 = vadd.f32 %v1296, 1e-06
    %v1300 = vadd.f32 %v1297, 1e-06
    %v1301 = vadd.f32 %v1298, 1e-06
    %v1302 = vrsqrt.pop %v1299
    %v1303 = vrsqrt.pop %v1300
    %v1304 = vrsqrt.pop %v1301
    %v1305 = vmul.f32 %v1281, %v1302
    %v1306 = vmul.f32 %v1282, %v1303
    %v1307 = vmul.f32 %v1283, %v1304
    %v1309 = vlaneseq
    %v1310 = vshrl.u32 %v1309, 7
    %v1311 = vsub.s32 0, %v1310
    %v1312 = vrot.slane %v1247, %v1311
    %v1314 = vmul.f32 %v1305, %v1312
    %v1315 = vmul.f32 %v1306, %v1312
    %v1316 = vmul.f32 %v1307, %v1312
    %v1318 = vlaneseq
    %v1319 = vshrl.u32 %v1318, 7
    %v1320 = vsub.s32 0, %v1319
    %v1321 = vrot.slane %v1249, %v1320
    %v1323 = vadd.f32 %v1314, %v1321
    %v1324 = vadd.f32 %v1315, %v1321
    %v1325 = vadd.f32 %v1316, %v1321
    %v1327 = vlaneseq
    %v1328 = vshrl.u32 %v1327, 7
    %v1329 = vsub.s32 0, %v1328
    %v1330 = vrot.slane %v1260, %v1329
    %v1331 = vlaneseq
    %v1332 = vshrl.u32 %v1331, 7
    %v1333 = vsub.s32 1, %v1332
    %v1334 = vrot.slane %v1260, %v1333
    %v1338 = vsel %vm182, %v1323, 0
    %v1341 = vsel %vm182, %v1324, 0
    %v1344 = vsel %vm182, %v1325, 0
    %1346 = vmatprep.subr.mxu0 0.0
    %1347 = vmatpush1.msra.mxu0 0.0
    %1348 = vmatprep.subr.mxu0 0.0
    %1349 = vmatpush1.msra.mxu0 0.0
    %1350 = vmatprep.subr.mxu0 0.0
    %1351 = vmatpush1.msra.mxu0 0.0
    %1352 = vmatprep.subr.mxu0 0.0
    %1353 = vmatpush1.msra.mxu0 0.0
    %1354 = vmatprep.subr.mxu0 0.0
    %1355 = vmatpush1.msra.mxu0 0.0
    %1356 = vmatprep.subr.mxu0 0.0
    %1357 = vmatpush1.msra.mxu0 0.0
    %1358 = vmatprep.subr.mxu0 0.0
    %1359 = vmatpush1.msra.mxu0 0.0
    %1360 = vmatprep.subr.mxu0 0.0
    %1361 = vmatpush1.msra.mxu0 0.0
    %1362 = vmatprep.subr.mxu0 0.0
    %1363 = vmatpush1.msra.mxu0 0.0
    %1364 = vmatprep.subr.mxu0 0.0
    %1365 = vmatpush1.msra.mxu0 0.0
    %1366 = vmatprep.subr.mxu0 0.0
    %1367 = vmatpush1.msra.mxu0 0.0
    %1368 = vmatprep.subr.mxu0 0.0
    %1369 = vmatpush1.msra.mxu0 0.0
    %1370 = vmatprep.subr.mxu0 %v1258
    %1371 = vmatpush1.msra.mxu0 %v1257
    %1372 = vmatprep.subr.mxu0 %v1256
    %1373 = vmatpush1.msra.mxu0 %v1255
    %1374 = vmatprep.subr.mxu0 %v1254
    %1375 = vmatpush1.msra.mxu0 %v1253
    %1376 = vmatprep.subr.mxu0 %v1252
    %1377 = vmatpush1.msra.mxu0 %v1251
    %1378 = vmatprep.subr.mxu0 0.0
    %1379 = vmatpush2.msra.mxu0 0.0
    %1380 = vmatprep.subr.mxu0 0.0
    %1381 = vmatpush2.msra.mxu0 0.0
    %1382 = vmatprep.subr.mxu0 0.0
    %1383 = vmatpush2.msra.mxu0 0.0
    %1384 = vmatprep.subr.mxu0 0.0
    %1385 = vmatpush2.msra.mxu0 0.0
    %1386 = vmatprep.subr.mxu0 0.0
    %1387 = vmatpush2.msra.mxu0 0.0
    %1388 = vmatprep.subr.mxu0 0.0
    %1389 = vmatpush2.msra.mxu0 0.0
    %1390 = vmatprep.subr.mxu0 0.0
    %1391 = vmatpush2.msra.mxu0 0.0
    %1392 = vmatprep.subr.mxu0 0.0
    %1393 = vmatpush2.msra.mxu0 0.0
    %1394 = vmatprep.subr.mxu0 0.0
    %1395 = vmatpush2.msra.mxu0 0.0
    %1396 = vmatprep.subr.mxu0 0.0
    %1397 = vmatpush2.msra.mxu0 0.0
    %1398 = vmatprep.subr.mxu0 0.0
    %1399 = vmatpush2.msra.mxu0 0.0
    %1400 = vmatprep.subr.mxu0 0.0
    %1401 = vmatpush2.msra.mxu0 0.0
    %1402 = vmatprep.subr.mxu0 0.0
    %1403 = vmatpush2.msra.mxu0 0.0
    %1404 = vmatprep.subr.mxu0 0.0
    %1405 = vmatpush2.msra.mxu0 0.0
    %1406 = vmatprep.subr.mxu0 0.0
    %1407 = vmatpush2.msra.mxu0 0.0
    %1408 = vmatprep.subr.mxu0 0.0
    %1409 = vmatpush2.msra.mxu0 0.0
    %1410 = vmatprep.mubr.f32.mxu0 0.0
    %1411 = vmatmul.mubr.f32.gmra.mxu0 %v1338
    %v1412 = vpop.f32.mrf.mxu0
    %v1413 = vadd.f32 %v1330, %v1412
    %v1414 = vpop.f32.mrf.mxu0
    %v1415 = vadd.f32 %v1334, %v1414
    %1416 = vmatprep.mubr.f32.mxu0 0.0
    %1417 = vmatmul.mubr.f32.gmra.mxu0 %v1341
    %v1418 = vpop.f32.mrf.mxu0
    %v1419 = vadd.f32 %v1330, %v1418
    %v1420 = vpop.f32.mrf.mxu0
    %v1421 = vadd.f32 %v1334, %v1420
    %1422 = vmatprep.mubr.f32.mxu0 0.0
    %1423 = vmatmul.mubr.f32.gmra.mxu0 %v1344
    %v1424 = vpop.f32.mrf.mxu0
    %v1425 = vadd.f32 %v1330, %v1424
    %v1426 = vpop.f32.mrf.mxu0
    %v1427 = vadd.f32 %v1334, %v1426
    %1428 = vdwg.mxu0
    %v1429 = vmul.f32 %v1413, 0.17677669
    %v1430 = vmul.f32 %v1419, 0.17677669
    %v1431 = vmul.f32 %v1425, 0.17677669
    %v1432 = vxor.u32 %v1413, 2147483648
    %v1433 = vxor.u32 %v1419, 2147483648
    %v1434 = vxor.u32 %v1425, 2147483648
    %v1435 = vmul.f32 %v1432, 1.442695
    %v1436 = vpow.pop %v1435
    %v1437 = vmul.f32 %v1433, 1.442695
    %v1438 = vpow.pop %v1437
    %v1439 = vmul.f32 %v1434, 1.442695
    %v1440 = vpow.pop %v1439
    %v1441 = vadd.f32 %v1436, 1.0
    %v1442 = vadd.f32 %v1438, 1.0
    %v1443 = vadd.f32 %v1440, 1.0
    %v1444 = vrcp.pop %v1441
    %v1445 = vmul.f32 1.0, %v1444
    %v1446 = vrcp.pop %v1442
    %v1447 = vmul.f32 1.0, %v1446
    %v1448 = vrcp.pop %v1443
    %v1449 = vmul.f32 1.0, %v1448
    %v1450 = vsub.f32 0.0, %v1415
    %v1451 = vsub.f32 0.0, %v1421
    %v1452 = vsub.f32 0.0, %v1427
    %v1453 = vmax.f32 %v1450, 0.0
    %v1454 = vmax.f32 %v1451, 0.0
    %v1455 = vmax.f32 %v1452, 0.0
    %vm1456 = vcmp.ne.f32.partialorder %v1450, %v1450
    %vm1457 = vcmp.ne.f32.partialorder %v1451, %v1451
    %vm1458 = vcmp.ne.f32.partialorder %v1452, %v1452
    %v1459 = vadd.f32 %v1450, 0.0
    %v1460 = vadd.f32 %v1451, 0.0
    %v1461 = vadd.f32 %v1452, 0.0
    %v1462 = vand.u32 2147483647, %v1450
    %v1463 = vand.u32 2147483647, %v1451
    %v1464 = vand.u32 2147483647, %v1452
    %v1465 = vsub.f32 0.0, %v1462
    %v1466 = vsub.f32 0.0, %v1463
    %v1467 = vsub.f32 0.0, %v1464
    %v1468 = vmul.f32 %v1465, 1.442695
    %v1469 = vpow.pop %v1468
    %v1470 = vmul.f32 %v1466, 1.442695
    %v1471 = vpow.pop %v1470
    %v1472 = vmul.f32 %v1467, 1.442695
    %v1473 = vpow.pop %v1472
    %v1474 = vadd.f32 %v1469, 1.0
    %v1475 = vlog2.pop %v1474
    %v1476 = vmul.f32 %v1475, 0.6931472
    %v1477 = vmul.f32 -0.5, %v1469
    %v1478 = vadd.f32 %v1477, 1.0
    %v1479 = vmul.f32 %v1478, %v1469
    %v1480 = vand.u32 2147483647, %v1469
    %vm1481 = vcmp.lt.f32.partialorder %v1480, 0.0004427343
    %v1482 = vsel %vm1481, %v1479, %v1476
    %v1483 = vadd.f32 %v1471, 1.0
    %v1484 = vlog2.pop %v1483
    %v1485 = vmul.f32 %v1484, 0.6931472
    %v1486 = vmul.f32 -0.5, %v1471
    %v1487 = vadd.f32 %v1486, 1.0
    %v1488 = vmul.f32 %v1487, %v1471
    %v1489 = vand.u32 2147483647, %v1471
    %vm1490 = vcmp.lt.f32.partialorder %v1489, 0.0004427343
    %v1491 = vsel %vm1490, %v1488, %v1485
    %v1492 = vadd.f32 %v1473, 1.0
    %v1493 = vlog2.pop %v1492
    %v1494 = vmul.f32 %v1493, 0.6931472
    %v1495 = vmul.f32 -0.5, %v1473
    %v1496 = vadd.f32 %v1495, 1.0
    %v1497 = vmul.f32 %v1496, %v1473
    %v1498 = vand.u32 2147483647, %v1473
    %vm1499 = vcmp.lt.f32.partialorder %v1498, 0.0004427343
    %v1500 = vsel %vm1499, %v1497, %v1494
    %v1501 = vadd.f32 %v1453, %v1482
    %v1502 = vadd.f32 %v1454, %v1491
    %v1503 = vadd.f32 %v1455, %v1500
    %v1504 = vsel %vm1456, %v1459, %v1501
    %v1505 = vsel %vm1457, %v1460, %v1502
    %v1506 = vsel %vm1458, %v1461, %v1503
    %v1507 = vsub.f32 0.0, %v1504
    %v1508 = vsub.f32 0.0, %v1505
    %v1509 = vsub.f32 0.0, %v1506
    %1512 = vrot.lane.b32.xlu0 %v1507, 127
    %v1513 = vpop.permute.xlu0 %1512
    %1514 = vrot.lane.b32.xlu0 %v1508, 127
    %v1515 = vpop.permute.xlu0 %1514
    %1518 = vxpose.xlu0.b32.start [1/16] %v1513, 128
    %1519 = vxpose.xlu0.b32.cont [2/16] %v1515, 128
    %1520 = vxpose.xlu0.b32.cont [3/16] 0.0, 128
    %1521 = vxpose.xlu0.b32.cont [4/16] 0.0, 128
    %1522 = vxpose.xlu0.b32.cont [5/16] 0.0, 128
    %1523 = vxpose.xlu0.b32.cont [6/16] 0.0, 128
    %1524 = vxpose.xlu0.b32.cont [7/16] 0.0, 128
    %1525 = vxpose.xlu0.b32.cont [8/16] 0.0, 128
    %1526 = vxpose.xlu0.b32.cont [9/16] 0.0, 128
    %1527 = vxpose.xlu0.b32.cont [10/16] 0.0, 128
    %1528 = vxpose.xlu0.b32.cont [11/16] 0.0, 128
    %1529 = vxpose.xlu0.b32.cont [12/16] 0.0, 128
    %1530 = vxpose.xlu0.b32.cont [13/16] 0.0, 128
    %1531 = vxpose.xlu0.b32.cont [14/16] 0.0, 128
    %1532 = vxpose.xlu0.b32.cont [15/16] 0.0, 128
    %1533 = vxpose.xlu0.b32.end [16/16] 0.0, 128
    %v1534 = vpop.trf.xlu0
    %v1535 = vpop.trf.xlu0
    %v1536 = vpop.trf.xlu0
    %v1537 = vpop.trf.xlu0
    %v1538 = vpop.trf.xlu0
    %v1539 = vpop.trf.xlu0
    %v1540 = vpop.trf.xlu0
    %v1541 = vpop.trf.xlu0
    %v1542 = vpop.trf.xlu0
    %v1543 = vpop.trf.xlu0
    %v1544 = vpop.trf.xlu0
    %v1545 = vpop.trf.xlu0
    %v1546 = vpop.trf.xlu0
    %v1547 = vpop.trf.xlu0
    %v1548 = vpop.trf.xlu0
    %v1549 = vpop.trf.xlu0
    %v1550 = vlaneseq
    %v1551 = vshrl.u32 %v1550, 7
    %v1552 = vsub.s32 0, %v1551
    %v1553 = vrot.slane %v1534, %v1552
    %v1554 = vsel %vm162, %v1553, 0.0
    %v1555 = vsel %vm163, %v1553, 0.0
    %v1556 = vsel %vm471, %v1554, 0.0
    %1557 = vadd.xlane.f32.xlu0 %v1556
    %v1558 = vpop.xlane.xlu0 %1557
    %v1559 = vsel %vm475, %v1555, 0.0
    %1560 = vadd.xlane.f32.xlu0 %v1559
    %v1561 = vpop.xlane.xlu0 %1560
    %1562 = vxpose.xlu0.b32.start [1/16] %v1558, 128
    %1563 = vxpose.xlu0.b32.cont [2/16] %v1561, 128
    %1564 = vxpose.xlu0.b32.cont [3/16] 0.0, 128
    %1565 = vxpose.xlu0.b32.cont [4/16] 0.0, 128
    %1566 = vxpose.xlu0.b32.cont [5/16] 0.0, 128
    %1567 = vxpose.xlu0.b32.cont [6/16] 0.0, 128
    %1568 = vxpose.xlu0.b32.cont [7/16] 0.0, 128
    %1569 = vxpose.xlu0.b32.cont [8/16] 0.0, 128
    %1570 = vxpose.xlu0.b32.cont [9/16] 0.0, 128
    %1571 = vxpose.xlu0.b32.cont [10/16] 0.0, 128
    %1572 = vxpose.xlu0.b32.cont [11/16] 0.0, 128
    %1573 = vxpose.xlu0.b32.cont [12/16] 0.0, 128
    %1574 = vxpose.xlu0.b32.cont [13/16] 0.0, 128
    %1575 = vxpose.xlu0.b32.cont [14/16] 0.0, 128
    %1576 = vxpose.xlu0.b32.cont [15/16] 0.0, 128
    %1577 = vxpose.xlu0.b32.end [16/16] 0.0, 128
    %v1578 = vpop.trf.xlu0
    %v1579 = vpop.trf.xlu0
    %v1580 = vpop.trf.xlu0
    %v1581 = vpop.trf.xlu0
    %v1582 = vpop.trf.xlu0
    %v1583 = vpop.trf.xlu0
    %v1584 = vpop.trf.xlu0
    %v1585 = vpop.trf.xlu0
    %v1586 = vpop.trf.xlu0
    %v1587 = vpop.trf.xlu0
    %v1588 = vpop.trf.xlu0
    %v1589 = vpop.trf.xlu0
    %v1590 = vpop.trf.xlu0
    %v1591 = vpop.trf.xlu0
    %v1592 = vpop.trf.xlu0
    %v1593 = vpop.trf.xlu0
    %v1594 = vlaneseq
    %v1595 = vshrl.u32 %v1594, 7
    %v1596 = vsub.s32 0, %v1595
    %v1597 = vrot.slane %v1578, %v1596
    %v1598 = vsub.f32 %v1558, %v1597
    %v1599 = vsub.f32 %v1561, %v1597
    %1600 = vxpose.xlu0.b32.start [1/16] %v1415, 128
    %1601 = vxpose.xlu0.b32.cont [2/16] %v1421, 128
    %1602 = vxpose.xlu0.b32.cont [3/16] 0.0, 128
    %1603 = vxpose.xlu0.b32.cont [4/16] 0.0, 128
    %1604 = vxpose.xlu0.b32.cont [5/16] 0.0, 128
    %1605 = vxpose.xlu0.b32.cont [6/16] 0.0, 128
    %1606 = vxpose.xlu0.b32.cont [7/16] 0.0, 128
    %1607 = vxpose.xlu0.b32.cont [8/16] 0.0, 128
    %1608 = vxpose.xlu0.b32.cont [9/16] 0.0, 128
    %1609 = vxpose.xlu0.b32.cont [10/16] 0.0, 128
    %1610 = vxpose.xlu0.b32.cont [11/16] 0.0, 128
    %1611 = vxpose.xlu0.b32.cont [12/16] 0.0, 128
    %1612 = vxpose.xlu0.b32.cont [13/16] 0.0, 128
    %1613 = vxpose.xlu0.b32.cont [14/16] 0.0, 128
    %1614 = vxpose.xlu0.b32.cont [15/16] 0.0, 128
    %1615 = vxpose.xlu0.b32.end [16/16] 0.0, 128
    %v1616 = vpop.trf.xlu0
    %v1617 = vpop.trf.xlu0
    %v1618 = vpop.trf.xlu0
    %v1619 = vpop.trf.xlu0
    %v1620 = vpop.trf.xlu0
    %v1621 = vpop.trf.xlu0
    %v1622 = vpop.trf.xlu0
    %v1623 = vpop.trf.xlu0
    %v1624 = vpop.trf.xlu0
    %v1625 = vpop.trf.xlu0
    %v1626 = vpop.trf.xlu0
    %v1627 = vpop.trf.xlu0
    %v1628 = vpop.trf.xlu0
    %v1629 = vpop.trf.xlu0
    %v1630 = vpop.trf.xlu0
    %v1631 = vpop.trf.xlu0
    %v1632 = vlaneseq
    %v1633 = vshrl.u32 %v1632, 7
    %v1634 = vsub.s32 0, %v1633
    %v1635 = vrot.slane %v1616, %v1634
    %v1636 = vadd.f32 %v1598, %v1635
    %v1637 = vadd.f32 %v1599, %v1635
    %v1638 = vsel %vm162, %v1636, -1e+30
    %v1639 = vsel %vm163, %v1637, -1e+30
    %v1640 = vsel %vm471, %v1638, -inf
    %1641 = vmax.xlane.f32.xlu0 %v1640
    %v1642 = vpop.xlane.xlu0 %1641
    %v1643 = vsel %vm475, %v1639, -inf
    %1644 = vmax.xlane.f32.xlu0 %v1643
    %v1645 = vpop.xlane.xlu0 %1644
    %v1646 = vsub.f32 %v1638, %v1642
    %v1647 = vsub.f32 %v1639, %v1645
    %v1648 = vmul.f32 %v1646, 1.442695
    %v1649 = vpow.pop %v1648
    %v1650 = vmul.f32 %v1647, 1.442695
    %v1651 = vpow.pop %v1650
    %1654 = vrot.lane.b32.xlu0 %v1429, 96
    %v1655 = vpop.permute.xlu0 %1654
    %1656 = vrot.lane.b32.xlu0 %v1430, 96
    %v1657 = vpop.permute.xlu0 %1656
    %v1659 = vsel %vm182, %v1413, 0
    %v1662 = vsel %vm182, %v1419, 0
    %v1664 = vsel %vm182, %v1655, 0
    %v1666 = vsel %vm182, %v1657, 0
    %1668 = vmatprep.subr.mxu0 0.0
    %1669 = vmatpush1.xpose.msra.mxu0 0.0
    %1670 = vmatprep.subr.mxu0 0.0
    %1671 = vmatpush1.xpose.msra.mxu0 0.0
    %1672 = vmatprep.subr.mxu0 0.0
    %1673 = vmatpush1.xpose.msra.mxu0 0.0
    %1674 = vmatprep.subr.mxu0 0.0
    %1675 = vmatpush1.xpose.msra.mxu0 0.0
    %1676 = vmatprep.subr.mxu0 0.0
    %1677 = vmatpush1.xpose.msra.mxu0 0.0
    %1678 = vmatprep.subr.mxu0 0.0
    %1679 = vmatpush1.xpose.msra.mxu0 0.0
    %1680 = vmatprep.subr.mxu0 0.0
    %1681 = vmatpush1.xpose.msra.mxu0 0.0
    %1682 = vmatprep.subr.mxu0 0.0
    %1683 = vmatpush1.xpose.msra.mxu0 0.0
    %1684 = vmatprep.subr.mxu0 0.0
    %1685 = vmatpush1.xpose.msra.mxu0 0.0
    %1686 = vmatprep.subr.mxu0 0.0
    %1687 = vmatpush1.xpose.msra.mxu0 0.0
    %1688 = vmatprep.subr.mxu0 0.0
    %1689 = vmatpush1.xpose.msra.mxu0 0.0
    %1690 = vmatprep.subr.mxu0 0.0
    %1691 = vmatpush1.xpose.msra.mxu0 0.0
    %1692 = vmatprep.subr.mxu0 0.0
    %1693 = vmatpush1.xpose.msra.mxu0 0.0
    %1694 = vmatprep.subr.mxu0 0.0
    %1695 = vmatpush1.xpose.msra.mxu0 0.0
    %1696 = vmatprep.subr.mxu0 0.0
    %1697 = vmatpush1.xpose.msra.mxu0 %v1666
    %1698 = vmatprep.subr.mxu0 0.0
    %1699 = vmatpush1.xpose.msra.mxu0 %v1664
    %1700 = vmatprep.subr.mxu0 0.0
    %1701 = vmatpush2.xpose.msra.mxu0 0.0
    %1702 = vmatprep.subr.mxu0 0.0
    %1703 = vmatpush2.xpose.msra.mxu0 0.0
    %1704 = vmatprep.subr.mxu0 0.0
    %1705 = vmatpush2.xpose.msra.mxu0 0.0
    %1706 = vmatprep.subr.mxu0 0.0
    %1707 = vmatpush2.xpose.msra.mxu0 0.0
    %1708 = vmatprep.subr.mxu0 0.0
    %1709 = vmatpush2.xpose.msra.mxu0 0.0
    %1710 = vmatprep.subr.mxu0 0.0
    %1711 = vmatpush2.xpose.msra.mxu0 0.0
    %1712 = vmatprep.subr.mxu0 0.0
    %1713 = vmatpush2.xpose.msra.mxu0 0.0
    %1714 = vmatprep.subr.mxu0 0.0
    %1715 = vmatpush2.xpose.msra.mxu0 0.0
    %1716 = vmatprep.subr.mxu0 0.0
    %1717 = vmatpush2.xpose.msra.mxu0 0.0
    %1718 = vmatprep.subr.mxu0 0.0
    %1719 = vmatpush2.xpose.msra.mxu0 0.0
    %1720 = vmatprep.subr.mxu0 0.0
    %1721 = vmatpush2.xpose.msra.mxu0 0.0
    %1722 = vmatprep.subr.mxu0 0.0
    %1723 = vmatpush2.xpose.msra.mxu0 0.0
    %1724 = vmatprep.subr.mxu0 0.0
    %1725 = vmatpush2.xpose.msra.mxu0 0.0
    %1726 = vmatprep.subr.mxu0 0.0
    %1727 = vmatpush2.xpose.msra.mxu0 0.0
    %1728 = vmatprep.subr.mxu0 0.0
    %1729 = vmatpush2.xpose.msra.mxu0 0.0
    %1730 = vmatprep.subr.mxu0 0.0
    %1731 = vmatpush2.xpose.msra.mxu0 0.0
    %1732 = vmatprep.mubr.f32.mxu0 0.0
    %1733 = vmatmul.mubr.f32.gmra.mxu0 %v1659
    %v1734 = vpop.f32.mrf.mxu0
    %v1735 = vadd.f32 0.0, %v1734
    %v1736 = vpop.f32.mrf.mxu0
    %1737 = vmatprep.mubr.f32.mxu0 0.0
    %1738 = vmatmul.mubr.f32.gmra.mxu0 %v1662
    %v1739 = vpop.f32.mrf.mxu0
    %v1740 = vadd.f32 0.0, %v1739
    %v1741 = vpop.f32.mrf.mxu0
    %1742 = vdwg.mxu0
    %v1743 = vmul.f32 %v1735, %v1649
    %v1744 = vmul.f32 %v1740, %v1651
    %v1745 = vsel %vm471, %v1743, 0.0
    %1746 = vadd.xlane.f32.xlu0 %v1745
    %v1747 = vpop.xlane.xlu0 %1746
    %v1748 = vsel %vm475, %v1744, 0.0
    %1749 = vadd.xlane.f32.xlu0 %v1748
    %v1750 = vpop.xlane.xlu0 %1749
    %v1751 = vand.u32 2147483647, %v1747
    %v1752 = vand.u32 2147483647, %v1750
    %v1753 = vsub.f32 0.0, %v1642
    %v1754 = vsub.f32 0.0, %v1645
    %v1755 = vmul.f32 %v1753, 1.442695
    %v1756 = vpow.pop %v1755
    %v1757 = vmul.f32 %v1754, 1.442695
    %v1758 = vpow.pop %v1757
    %v1759 = vmax.f32 %v1751, %v1756
    %v1760 = vmax.f32 %v1752, %v1758
    %v1761 = vrcp.pop %v1759
    %v1762 = vrcp.pop %v1760
    %v1763 = vmul.f32 %v1743, %v1761
    %v1764 = vmul.f32 %v1744, %v1762
    %1765 = vrot.lane.b32.xlu0 %v1413, 64
    %v1766 = vpop.permute.xlu0 %1765
    %1767 = vrot.lane.b32.xlu0 %v1419, 64
    %v1768 = vpop.permute.xlu0 %1767
    %v1771 = vsel %vm471, %v1763, 0
    %v1774 = vsel %vm471, %v1764, 0
    %v1776 = vsel %vm693, %v1768, 0
    %1778 = vmatprep.subr.mxu0 0.0
    %1779 = vmatpush1.msra.mxu0 0.0
    %1780 = vmatprep.subr.mxu0 0.0
    %1781 = vmatpush1.msra.mxu0 0.0
    %1782 = vmatprep.subr.mxu0 0.0
    %1783 = vmatpush1.msra.mxu0 0.0
    %1784 = vmatprep.subr.mxu0 0.0
    %1785 = vmatpush1.msra.mxu0 0.0
    %1786 = vmatprep.subr.mxu0 0.0
    %1787 = vmatpush1.msra.mxu0 0.0
    %1788 = vmatprep.subr.mxu0 0.0
    %1789 = vmatpush1.msra.mxu0 0.0
    %1790 = vmatprep.subr.mxu0 0.0
    %1791 = vmatpush1.msra.mxu0 0.0
    %1792 = vmatprep.subr.mxu0 0.0
    %1793 = vmatpush1.msra.mxu0 0.0
    %1794 = vmatprep.subr.mxu0 0.0
    %1795 = vmatpush1.msra.mxu0 0.0
    %1796 = vmatprep.subr.mxu0 0.0
    %1797 = vmatpush1.msra.mxu0 0.0
    %1798 = vmatprep.subr.mxu0 0.0
    %1799 = vmatpush1.msra.mxu0 0.0
    %1800 = vmatprep.subr.mxu0 0.0
    %1801 = vmatpush1.msra.mxu0 0.0
    %1802 = vmatprep.subr.mxu0 0.0
    %1803 = vmatpush1.msra.mxu0 0.0
    %1804 = vmatprep.subr.mxu0 0.0
    %1805 = vmatpush1.msra.mxu0 0.0
    %1806 = vmatprep.subr.mxu0 0.0
    %1807 = vmatpush1.msra.mxu0 %v1776
    %1808 = vmatprep.subr.mxu0 0.0
    %1809 = vmatpush1.msra.mxu0 %v1766
    %1810 = vmatprep.subr.mxu0 0.0
    %1811 = vmatpush2.msra.mxu0 0.0
    %1812 = vmatprep.subr.mxu0 0.0
    %1813 = vmatpush2.msra.mxu0 0.0
    %1814 = vmatprep.subr.mxu0 0.0
    %1815 = vmatpush2.msra.mxu0 0.0
    %1816 = vmatprep.subr.mxu0 0.0
    %1817 = vmatpush2.msra.mxu0 0.0
    %1818 = vmatprep.subr.mxu0 0.0
    %1819 = vmatpush2.msra.mxu0 0.0
    %1820 = vmatprep.subr.mxu0 0.0
    %1821 = vmatpush2.msra.mxu0 0.0
    %1822 = vmatprep.subr.mxu0 0.0
    %1823 = vmatpush2.msra.mxu0 0.0
    %1824 = vmatprep.subr.mxu0 0.0
    %1825 = vmatpush2.msra.mxu0 0.0
    %1826 = vmatprep.subr.mxu0 0.0
    %1827 = vmatpush2.msra.mxu0 0.0
    %1828 = vmatprep.subr.mxu0 0.0
    %1829 = vmatpush2.msra.mxu0 0.0
    %1830 = vmatprep.subr.mxu0 0.0
    %1831 = vmatpush2.msra.mxu0 0.0
    %1832 = vmatprep.subr.mxu0 0.0
    %1833 = vmatpush2.msra.mxu0 0.0
    %1834 = vmatprep.subr.mxu0 0.0
    %1835 = vmatpush2.msra.mxu0 0.0
    %1836 = vmatprep.subr.mxu0 0.0
    %1837 = vmatpush2.msra.mxu0 0.0
    %1838 = vmatprep.subr.mxu0 0.0
    %1839 = vmatpush2.msra.mxu0 0.0
    %1840 = vmatprep.subr.mxu0 0.0
    %1841 = vmatpush2.msra.mxu0 0.0
    %1842 = vmatprep.mubr.f32.mxu0 0.0
    %1843 = vmatmul.mubr.f32.gmra.mxu0 %v1771
    %v1844 = vpop.f32.mrf.mxu0
    %v1845 = vadd.f32 0.0, %v1844
    %v1846 = vpop.f32.mrf.mxu0
    %1847 = vmatprep.mubr.f32.mxu0 0.0
    %1848 = vmatmul.mubr.f32.gmra.mxu0 %v1774
    %v1849 = vpop.f32.mrf.mxu0
    %v1850 = vadd.f32 0.0, %v1849
    %v1851 = vpop.f32.mrf.mxu0
    %1852 = vdwg.mxu0
    %1853 = vst.msk [vmem:[#allocation3] sm:$0xff] %vm182, %v1845
    %1854 = vst.msk [vmem:[#allocation3 + $0x8] sm:$0x3] %vm772, %v1850
    %v1856 = vrot.slane %v1508, 2
    %v1857 = vrot.slane %v1509, 2
    %v1858 = vsel %vm775, %v1856, %v1857
    %1859 = vrot.lane.b32.xlu0 %v1858, 127
    %v1860 = vpop.permute.xlu0 %1859
    %1861 = vrot.lane.b32.xlu0 %v1857, 127
    %v1862 = vpop.permute.xlu0 %1861
    %1865 = vxpose.xlu0.b32.start [1/16] %v1860, 128
    %1866 = vxpose.xlu0.b32.cont [2/16] %v1862, 128
    %1867 = vxpose.xlu0.b32.cont [3/16] 0.0, 128
    %1868 = vxpose.xlu0.b32.cont [4/16] 0.0, 128
    %1869 = vxpose.xlu0.b32.cont [5/16] 0.0, 128
    %1870 = vxpose.xlu0.b32.cont [6/16] 0.0, 128
    %1871 = vxpose.xlu0.b32.cont [7/16] 0.0, 128
    %1872 = vxpose.xlu0.b32.cont [8/16] 0.0, 128
    %1873 = vxpose.xlu0.b32.cont [9/16] 0.0, 128
    %1874 = vxpose.xlu0.b32.cont [10/16] 0.0, 128
    %1875 = vxpose.xlu0.b32.cont [11/16] 0.0, 128
    %1876 = vxpose.xlu0.b32.cont [12/16] 0.0, 128
    %1877 = vxpose.xlu0.b32.cont [13/16] 0.0, 128
    %1878 = vxpose.xlu0.b32.cont [14/16] 0.0, 128
    %1879 = vxpose.xlu0.b32.cont [15/16] 0.0, 128
    %1880 = vxpose.xlu0.b32.end [16/16] 0.0, 128
    %v1881 = vpop.trf.xlu0
    %v1882 = vpop.trf.xlu0
    %v1883 = vpop.trf.xlu0
    %v1884 = vpop.trf.xlu0
    %v1885 = vpop.trf.xlu0
    %v1886 = vpop.trf.xlu0
    %v1887 = vpop.trf.xlu0
    %v1888 = vpop.trf.xlu0
    %v1889 = vpop.trf.xlu0
    %v1890 = vpop.trf.xlu0
    %v1891 = vpop.trf.xlu0
    %v1892 = vpop.trf.xlu0
    %v1893 = vpop.trf.xlu0
    %v1894 = vpop.trf.xlu0
    %v1895 = vpop.trf.xlu0
    %v1896 = vpop.trf.xlu0
    %v1897 = vlaneseq
    %v1898 = vshrl.u32 %v1897, 7
    %v1899 = vsub.s32 0, %v1898
    %v1900 = vrot.slane %v1881, %v1899
    %v1901 = vsel %vm162, %v1900, 0.0
    %v1902 = vsel %vm163, %v1900, 0.0
    %v1903 = vsel %vm471, %v1901, 0.0
    %1904 = vadd.xlane.f32.xlu0 %v1903
    %v1905 = vpop.xlane.xlu0 %1904
    %v1906 = vsel %vm475, %v1902, 0.0
    %1907 = vadd.xlane.f32.xlu0 %v1906
    %v1908 = vpop.xlane.xlu0 %1907
    %1909 = vxpose.xlu0.b32.start [1/16] %v1905, 128
    %1910 = vxpose.xlu0.b32.cont [2/16] %v1908, 128
    %1911 = vxpose.xlu0.b32.cont [3/16] 0.0, 128
    %1912 = vxpose.xlu0.b32.cont [4/16] 0.0, 128
    %1913 = vxpose.xlu0.b32.cont [5/16] 0.0, 128
    %1914 = vxpose.xlu0.b32.cont [6/16] 0.0, 128
    %1915 = vxpose.xlu0.b32.cont [7/16] 0.0, 128
    %1916 = vxpose.xlu0.b32.cont [8/16] 0.0, 128
    %1917 = vxpose.xlu0.b32.cont [9/16] 0.0, 128
    %1918 = vxpose.xlu0.b32.cont [10/16] 0.0, 128
    %1919 = vxpose.xlu0.b32.cont [11/16] 0.0, 128
    %1920 = vxpose.xlu0.b32.cont [12/16] 0.0, 128
    %1921 = vxpose.xlu0.b32.cont [13/16] 0.0, 128
    %1922 = vxpose.xlu0.b32.cont [14/16] 0.0, 128
    %1923 = vxpose.xlu0.b32.cont [15/16] 0.0, 128
    %1924 = vxpose.xlu0.b32.end [16/16] 0.0, 128
    %v1925 = vpop.trf.xlu0
    %v1926 = vpop.trf.xlu0
    %v1927 = vpop.trf.xlu0
    %v1928 = vpop.trf.xlu0
    %v1929 = vpop.trf.xlu0
    %v1930 = vpop.trf.xlu0
    %v1931 = vpop.trf.xlu0
    %v1932 = vpop.trf.xlu0
    %v1933 = vpop.trf.xlu0
    %v1934 = vpop.trf.xlu0
    %v1935 = vpop.trf.xlu0
    %v1936 = vpop.trf.xlu0
    %v1937 = vpop.trf.xlu0
    %v1938 = vpop.trf.xlu0
    %v1939 = vpop.trf.xlu0
    %v1940 = vpop.trf.xlu0
    %v1941 = vlaneseq
    %v1942 = vshrl.u32 %v1941, 7
    %v1943 = vsub.s32 0, %v1942
    %v1944 = vrot.slane %v1925, %v1943
    %v1945 = vsub.f32 %v1905, %v1944
    %v1946 = vsub.f32 %v1908, %v1944
    %v1949 = vrot.slane %v1421, 2
    %v1950 = vrot.slane %v1427, 2
    %v1951 = vsel %vm775, %v1949, %v1950
    %1954 = vxpose.xlu0.b32.start [1/16] %v1951, 128
    %1955 = vxpose.xlu0.b32.cont [2/16] %v1950, 128
    %1956 = vxpose.xlu0.b32.cont [3/16] 0.0, 128
    %1957 = vxpose.xlu0.b32.cont [4/16] 0.0, 128
    %1958 = vxpose.xlu0.b32.cont [5/16] 0.0, 128
    %1959 = vxpose.xlu0.b32.cont [6/16] 0.0, 128
    %1960 = vxpose.xlu0.b32.cont [7/16] 0.0, 128
    %1961 = vxpose.xlu0.b32.cont [8/16] 0.0, 128
    %1962 = vxpose.xlu0.b32.cont [9/16] 0.0, 128
    %1963 = vxpose.xlu0.b32.cont [10/16] 0.0, 128
    %1964 = vxpose.xlu0.b32.cont [11/16] 0.0, 128
    %1965 = vxpose.xlu0.b32.cont [12/16] 0.0, 128
    %1966 = vxpose.xlu0.b32.cont [13/16] 0.0, 128
    %1967 = vxpose.xlu0.b32.cont [14/16] 0.0, 128
    %1968 = vxpose.xlu0.b32.cont [15/16] 0.0, 128
    %1969 = vxpose.xlu0.b32.end [16/16] 0.0, 128
    %v1970 = vpop.trf.xlu0
    %v1971 = vpop.trf.xlu0
    %v1972 = vpop.trf.xlu0
    %v1973 = vpop.trf.xlu0
    %v1974 = vpop.trf.xlu0
    %v1975 = vpop.trf.xlu0
    %v1976 = vpop.trf.xlu0
    %v1977 = vpop.trf.xlu0
    %v1978 = vpop.trf.xlu0
    %v1979 = vpop.trf.xlu0
    %v1980 = vpop.trf.xlu0
    %v1981 = vpop.trf.xlu0
    %v1982 = vpop.trf.xlu0
    %v1983 = vpop.trf.xlu0
    %v1984 = vpop.trf.xlu0
    %v1985 = vpop.trf.xlu0
    %v1986 = vlaneseq
    %v1987 = vshrl.u32 %v1986, 7
    %v1988 = vsub.s32 0, %v1987
    %v1989 = vrot.slane %v1970, %v1988
    %v1990 = vadd.f32 %v1945, %v1989
    %v1991 = vadd.f32 %v1946, %v1989
    %v1992 = vsel %vm162, %v1990, -1e+30
    %v1993 = vsel %vm163, %v1991, -1e+30
    %v1994 = vsel %vm471, %v1992, -inf
    %1995 = vmax.xlane.f32.xlu0 %v1994
    %v1996 = vpop.xlane.xlu0 %1995
    %v1997 = vsel %vm475, %v1993, -inf
    %1998 = vmax.xlane.f32.xlu0 %v1997
    %v1999 = vpop.xlane.xlu0 %1998
    %v2000 = vsub.f32 %v1992, %v1996
    %v2001 = vsub.f32 %v1993, %v1999
    %v2002 = vmul.f32 %v2000, 1.442695
    %v2003 = vpow.pop %v2002
    %v2004 = vmul.f32 %v2001, 1.442695
    %v2005 = vpow.pop %v2004
    %v2007 = vrot.slane %v1419, 2
    %v2008 = vrot.slane %v1425, 2
    %v2009 = vsel %vm775, %v2007, %v2008
    %v2011 = vrot.slane %v1430, 2
    %v2012 = vrot.slane %v1431, 2
    %v2013 = vsel %vm775, %v2011, %v2012
    %2014 = vrot.lane.b32.xlu0 %v2013, 96
    %v2015 = vpop.permute.xlu0 %2014
    %2016 = vrot.lane.b32.xlu0 %v2012, 96
    %v2017 = vpop.permute.xlu0 %2016
    %v2018 = vsel %vm182, %v2009, 0
    %v2020 = vsel %vm182, %v2008, 0
    %v2022 = vsel %vm182, %v2015, 0
    %v2024 = vsel %vm182, %v2017, 0
    %2026 = vmatprep.subr.mxu0 0.0
    %2027 = vmatpush1.xpose.msra.mxu0 0.0
    %2028 = vmatprep.subr.mxu0 0.0
    %2029 = vmatpush1.xpose.msra.mxu0 0.0
    %2030 = vmatprep.subr.mxu0 0.0
    %2031 = vmatpush1.xpose.msra.mxu0 0.0
    %2032 = vmatprep.subr.mxu0 0.0
    %2033 = vmatpush1.xpose.msra.mxu0 0.0
    %2034 = vmatprep.subr.mxu0 0.0
    %2035 = vmatpush1.xpose.msra.mxu0 0.0
    %2036 = vmatprep.subr.mxu0 0.0
    %2037 = vmatpush1.xpose.msra.mxu0 0.0
    %2038 = vmatprep.subr.mxu0 0.0
    %2039 = vmatpush1.xpose.msra.mxu0 0.0
    %2040 = vmatprep.subr.mxu0 0.0
    %2041 = vmatpush1.xpose.msra.mxu0 0.0
    %2042 = vmatprep.subr.mxu0 0.0
    %2043 = vmatpush1.xpose.msra.mxu0 0.0
    %2044 = vmatprep.subr.mxu0 0.0
    %2045 = vmatpush1.xpose.msra.mxu0 0.0
    %2046 = vmatprep.subr.mxu0 0.0
    %2047 = vmatpush1.xpose.msra.mxu0 0.0
    %2048 = vmatprep.subr.mxu0 0.0
    %2049 = vmatpush1.xpose.msra.mxu0 0.0
    %2050 = vmatprep.subr.mxu0 0.0
    %2051 = vmatpush1.xpose.msra.mxu0 0.0
    %2052 = vmatprep.subr.mxu0 0.0
    %2053 = vmatpush1.xpose.msra.mxu0 0.0
    %2054 = vmatprep.subr.mxu0 0.0
    %2055 = vmatpush1.xpose.msra.mxu0 %v2024
    %2056 = vmatprep.subr.mxu0 0.0
    %2057 = vmatpush1.xpose.msra.mxu0 %v2022
    %2058 = vmatprep.subr.mxu0 0.0
    %2059 = vmatpush2.xpose.msra.mxu0 0.0
    %2060 = vmatprep.subr.mxu0 0.0
    %2061 = vmatpush2.xpose.msra.mxu0 0.0
    %2062 = vmatprep.subr.mxu0 0.0
    %2063 = vmatpush2.xpose.msra.mxu0 0.0
    %2064 = vmatprep.subr.mxu0 0.0
    %2065 = vmatpush2.xpose.msra.mxu0 0.0
    %2066 = vmatprep.subr.mxu0 0.0
    %2067 = vmatpush2.xpose.msra.mxu0 0.0
    %2068 = vmatprep.subr.mxu0 0.0
    %2069 = vmatpush2.xpose.msra.mxu0 0.0
    %2070 = vmatprep.subr.mxu0 0.0
    %2071 = vmatpush2.xpose.msra.mxu0 0.0
    %2072 = vmatprep.subr.mxu0 0.0
    %2073 = vmatpush2.xpose.msra.mxu0 0.0
    %2074 = vmatprep.subr.mxu0 0.0
    %2075 = vmatpush2.xpose.msra.mxu0 0.0
    %2076 = vmatprep.subr.mxu0 0.0
    %2077 = vmatpush2.xpose.msra.mxu0 0.0
    %2078 = vmatprep.subr.mxu0 0.0
    %2079 = vmatpush2.xpose.msra.mxu0 0.0
    %2080 = vmatprep.subr.mxu0 0.0
    %2081 = vmatpush2.xpose.msra.mxu0 0.0
    %2082 = vmatprep.subr.mxu0 0.0
    %2083 = vmatpush2.xpose.msra.mxu0 0.0
    %2084 = vmatprep.subr.mxu0 0.0
    %2085 = vmatpush2.xpose.msra.mxu0 0.0
    %2086 = vmatprep.subr.mxu0 0.0
    %2087 = vmatpush2.xpose.msra.mxu0 0.0
    %2088 = vmatprep.subr.mxu0 0.0
    %2089 = vmatpush2.xpose.msra.mxu0 0.0
    %2090 = vmatprep.mubr.f32.mxu0 0.0
    %2091 = vmatmul.mubr.f32.gmra.mxu0 %v2018
    %v2092 = vpop.f32.mrf.mxu0
    %v2093 = vadd.f32 0.0, %v2092
    %v2094 = vpop.f32.mrf.mxu0
    %2095 = vmatprep.mubr.f32.mxu0 0.0
    %2096 = vmatmul.mubr.f32.gmra.mxu0 %v2020
    %v2097 = vpop.f32.mrf.mxu0
    %v2098 = vadd.f32 0.0, %v2097
    %v2099 = vpop.f32.mrf.mxu0
    %2100 = vdwg.mxu0
    %v2101 = vmul.f32 %v2093, %v2003
    %v2102 = vmul.f32 %v2098, %v2005
    %v2103 = vsel %vm471, %v2101, 0.0
    %2104 = vadd.xlane.f32.xlu0 %v2103
    %v2105 = vpop.xlane.xlu0 %2104
    %v2106 = vsel %vm475, %v2102, 0.0
    %2107 = vadd.xlane.f32.xlu0 %v2106
    %v2108 = vpop.xlane.xlu0 %2107
    %v2109 = vand.u32 2147483647, %v2105
    %v2110 = vand.u32 2147483647, %v2108
    %v2111 = vsub.f32 0.0, %v1996
    %v2112 = vsub.f32 0.0, %v1999
    %v2113 = vmul.f32 %v2111, 1.442695
    %v2114 = vpow.pop %v2113
    %v2115 = vmul.f32 %v2112, 1.442695
    %v2116 = vpow.pop %v2115
    %v2117 = vmax.f32 %v2109, %v2114
    %v2118 = vmax.f32 %v2110, %v2116
    %v2119 = vrcp.pop %v2117
    %v2120 = vrcp.pop %v2118
    %v2121 = vmul.f32 %v2101, %v2119
    %v2122 = vmul.f32 %v2102, %v2120
    %2123 = vrot.lane.b32.xlu0 %v2009, 64
    %v2124 = vpop.permute.xlu0 %2123
    %2125 = vrot.lane.b32.xlu0 %v2008, 64
    %v2126 = vpop.permute.xlu0 %2125
    %v2129 = vsel %vm471, %v2121, 0
    %v2132 = vsel %vm471, %v2122, 0
    %v2134 = vsel %vm693, %v2126, 0
    %2136 = vmatprep.subr.mxu0 0.0
    %2137 = vmatpush1.msra.mxu0 0.0
    %2138 = vmatprep.subr.mxu0 0.0
    %2139 = vmatpush1.msra.mxu0 0.0
    %2140 = vmatprep.subr.mxu0 0.0
    %2141 = vmatpush1.msra.mxu0 0.0
    %2142 = vmatprep.subr.mxu0 0.0
    %2143 = vmatpush1.msra.mxu0 0.0
    %2144 = vmatprep.subr.mxu0 0.0
    %2145 = vmatpush1.msra.mxu0 0.0
    %2146 = vmatprep.subr.mxu0 0.0
    %2147 = vmatpush1.msra.mxu0 0.0
    %2148 = vmatprep.subr.mxu0 0.0
    %2149 = vmatpush1.msra.mxu0 0.0
    %2150 = vmatprep.subr.mxu0 0.0
    %2151 = vmatpush1.msra.mxu0 0.0
    %2152 = vmatprep.subr.mxu0 0.0
    %2153 = vmatpush1.msra.mxu0 0.0
    %2154 = vmatprep.subr.mxu0 0.0
    %2155 = vmatpush1.msra.mxu0 0.0
    %2156 = vmatprep.subr.mxu0 0.0
    %2157 = vmatpush1.msra.mxu0 0.0
    %2158 = vmatprep.subr.mxu0 0.0
    %2159 = vmatpush1.msra.mxu0 0.0
    %2160 = vmatprep.subr.mxu0 0.0
    %2161 = vmatpush1.msra.mxu0 0.0
    %2162 = vmatprep.subr.mxu0 0.0
    %2163 = vmatpush1.msra.mxu0 0.0
    %2164 = vmatprep.subr.mxu0 0.0
    %2165 = vmatpush1.msra.mxu0 %v2134
    %2166 = vmatprep.subr.mxu0 0.0
    %2167 = vmatpush1.msra.mxu0 %v2124
    %2168 = vmatprep.subr.mxu0 0.0
    %2169 = vmatpush2.msra.mxu0 0.0
    %2170 = vmatprep.subr.mxu0 0.0
    %2171 = vmatpush2.msra.mxu0 0.0
    %2172 = vmatprep.subr.mxu0 0.0
    %2173 = vmatpush2.msra.mxu0 0.0
    %2174 = vmatprep.subr.mxu0 0.0
    %2175 = vmatpush2.msra.mxu0 0.0
    %2176 = vmatprep.subr.mxu0 0.0
    %2177 = vmatpush2.msra.mxu0 0.0
    %2178 = vmatprep.subr.mxu0 0.0
    %2179 = vmatpush2.msra.mxu0 0.0
    %2180 = vmatprep.subr.mxu0 0.0
    %2181 = vmatpush2.msra.mxu0 0.0
    %2182 = vmatprep.subr.mxu0 0.0
    %2183 = vmatpush2.msra.mxu0 0.0
    %2184 = vmatprep.subr.mxu0 0.0
    %2185 = vmatpush2.msra.mxu0 0.0
    %2186 = vmatprep.subr.mxu0 0.0
    %2187 = vmatpush2.msra.mxu0 0.0
    %2188 = vmatprep.subr.mxu0 0.0
    %2189 = vmatpush2.msra.mxu0 0.0
    %2190 = vmatprep.subr.mxu0 0.0
    %2191 = vmatpush2.msra.mxu0 0.0
    %2192 = vmatprep.subr.mxu0 0.0
    %2193 = vmatpush2.msra.mxu0 0.0
    %2194 = vmatprep.subr.mxu0 0.0
    %2195 = vmatpush2.msra.mxu0 0.0
    %2196 = vmatprep.subr.mxu0 0.0
    %2197 = vmatpush2.msra.mxu0 0.0
    %2198 = vmatprep.subr.mxu0 0.0
    %2199 = vmatpush2.msra.mxu0 0.0
    %2200 = vmatprep.mubr.f32.mxu0 0.0
    %2201 = vmatmul.mubr.f32.gmra.mxu0 %v2129
    %v2202 = vpop.f32.mrf.mxu0
    %v2203 = vadd.f32 0.0, %v2202
    %v2204 = vpop.f32.mrf.mxu0
    %2205 = vmatprep.mubr.f32.mxu0 0.0
    %2206 = vmatmul.mubr.f32.gmra.mxu0 %v2132
    %v2207 = vpop.f32.mrf.mxu0
    %v2208 = vadd.f32 0.0, %v2207
    %v2209 = vpop.f32.mrf.mxu0
    %2210 = vdwg.mxu0
    %2211 = vst.msk [vmem:[#allocation3 + $0xa] sm:$0xff] %vm182, %v2203
    %2212 = vst.msk [vmem:[#allocation3 + $0x12] sm:$0x3] %vm772, %v2208
    %v2213 = vld [vmem:[#allocation3] sm:$0xff]
    %v2214 = vld [vmem:[#allocation3 + $0x8] sm:$0xff]
    %v2215 = vld [vmem:[#allocation3 + $0x10] sm:$0xf]
    %2219 = vrot.lane.b32.xlu0 %v1445, 32
    %v2220 = vpop.permute.xlu0 %2219
    %2221 = vrot.lane.b32.xlu0 %v1447, 32
    %v2222 = vpop.permute.xlu0 %2221
    %2223 = vrot.lane.b32.xlu0 %v1449, 32
    %v2224 = vpop.permute.xlu0 %2223
    %v2228 = vmul.f32 %v2213, %v2220
    %v2229 = vmul.f32 %v2214, %v2222
    %v2230 = vmul.f32 %v2215, %v2224
    %v2232 = vsel %vm182, %v2228, 0
    %v2235 = vsel %vm182, %v2229, 0
    %v2238 = vsel %vm182, %v2230, 0
    %2240 = vmatprep.subr.mxu0 0.0
    %2241 = vmatpush1.msra.mxu0 0.0
    %2242 = vmatprep.subr.mxu0 0.0
    %2243 = vmatpush1.msra.mxu0 0.0
    %2244 = vmatprep.subr.mxu0 0.0
    %2245 = vmatpush1.msra.mxu0 0.0
    %2246 = vmatprep.subr.mxu0 0.0
    %2247 = vmatpush1.msra.mxu0 0.0
    %2248 = vmatprep.subr.mxu0 0.0
    %2249 = vmatpush1.msra.mxu0 0.0
    %2250 = vmatprep.subr.mxu0 0.0
    %2251 = vmatpush1.msra.mxu0 0.0
    %2252 = vmatprep.subr.mxu0 0.0
    %2253 = vmatpush1.msra.mxu0 0.0
    %2254 = vmatprep.subr.mxu0 0.0
    %2255 = vmatpush1.msra.mxu0 0.0
    %2256 = vmatprep.subr.mxu0 0.0
    %2257 = vmatpush1.msra.mxu0 0.0
    %2258 = vmatprep.subr.mxu0 0.0
    %2259 = vmatpush1.msra.mxu0 0.0
    %2260 = vmatprep.subr.mxu0 0.0
    %2261 = vmatpush1.msra.mxu0 0.0
    %2262 = vmatprep.subr.mxu0 0.0
    %2263 = vmatpush1.msra.mxu0 0.0
    %2264 = vmatprep.subr.mxu0 0.0
    %2265 = vmatpush1.msra.mxu0 %v1265
    %2266 = vmatprep.subr.mxu0 0.0
    %2267 = vmatpush1.msra.mxu0 %v1264
    %2268 = vmatprep.subr.mxu0 0.0
    %2269 = vmatpush1.msra.mxu0 %v1263
    %2270 = vmatprep.subr.mxu0 0.0
    %2271 = vmatpush1.msra.mxu0 %v1262
    %2272 = vmatprep.subr.mxu0 0.0
    %2273 = vmatpush2.msra.mxu0 0.0
    %2274 = vmatprep.subr.mxu0 0.0
    %2275 = vmatpush2.msra.mxu0 0.0
    %2276 = vmatprep.subr.mxu0 0.0
    %2277 = vmatpush2.msra.mxu0 0.0
    %2278 = vmatprep.subr.mxu0 0.0
    %2279 = vmatpush2.msra.mxu0 0.0
    %2280 = vmatprep.subr.mxu0 0.0
    %2281 = vmatpush2.msra.mxu0 0.0
    %2282 = vmatprep.subr.mxu0 0.0
    %2283 = vmatpush2.msra.mxu0 0.0
    %2284 = vmatprep.subr.mxu0 0.0
    %2285 = vmatpush2.msra.mxu0 0.0
    %2286 = vmatprep.subr.mxu0 0.0
    %2287 = vmatpush2.msra.mxu0 0.0
    %2288 = vmatprep.subr.mxu0 0.0
    %2289 = vmatpush2.msra.mxu0 0.0
    %2290 = vmatprep.subr.mxu0 0.0
    %2291 = vmatpush2.msra.mxu0 0.0
    %2292 = vmatprep.subr.mxu0 0.0
    %2293 = vmatpush2.msra.mxu0 0.0
    %2294 = vmatprep.subr.mxu0 0.0
    %2295 = vmatpush2.msra.mxu0 0.0
    %2296 = vmatprep.subr.mxu0 0.0
    %2297 = vmatpush2.msra.mxu0 0.0
    %2298 = vmatprep.subr.mxu0 0.0
    %2299 = vmatpush2.msra.mxu0 0.0
    %2300 = vmatprep.subr.mxu0 0.0
    %2301 = vmatpush2.msra.mxu0 0.0
    %2302 = vmatprep.subr.mxu0 0.0
    %2303 = vmatpush2.msra.mxu0 0.0
    %2304 = vmatprep.mubr.f32.mxu0 0.0
    %2305 = vmatmul.mubr.f32.gmra.mxu0 %v2232
    %v2306 = vpop.f32.mrf.mxu0
    %v2307 = vadd.f32 0.0, %v2306
    %v2308 = vpop.f32.mrf.mxu0
    %2309 = vmatprep.mubr.f32.mxu0 0.0
    %2310 = vmatmul.mubr.f32.gmra.mxu0 %v2235
    %v2311 = vpop.f32.mrf.mxu0
    %v2312 = vadd.f32 0.0, %v2311
    %v2313 = vpop.f32.mrf.mxu0
    %2314 = vmatprep.mubr.f32.mxu0 0.0
    %2315 = vmatmul.mubr.f32.gmra.mxu0 %v2238
    %v2316 = vpop.f32.mrf.mxu0
    %v2317 = vadd.f32 0.0, %v2316
    %v2318 = vpop.f32.mrf.mxu0
    %2319 = vdwg.mxu0
    %v2320 = vadd.f32 %v1266, %v2307
    %v2321 = vadd.f32 %v1267, %v2312
    %v2322 = vadd.f32 %v1268, %v2317
    %2323 = vst.msk [vmem:[#allocation2] sm:$0xff] %vm182, %v2320
    %2324 = vst.msk [vmem:[#allocation2 + $0x8] sm:$0xff] %vm182, %v2321
    %2325 = vst.msk [vmem:[#allocation2 + $0x10] sm:$0xf] %vm146, %v2322
    %v2326 = vld [vmem:[#allocation2 + $0x9] sm:$0x1]
    %2327 = vst.msk [vmem:[#allocation4] sm:$0x1] %vm148, %v2326
    %v2328 = vld [vmem:[#allocation2 + $0x13] sm:$0x1]
    %2329 = vst.msk [vmem:[#allocation4 + $0x1] sm:$0x1] %vm148, %v2328
    %v2330 = vld [vmem:[#allocation4] sm:$0x3]
    %v2331 = vld [vmem:[%s10] sm:$0xff]
    %v2332 = vld [vmem:[%s10 + $0x8] sm:$0xff]
    %v2333 = vld [vmem:[%s10 + $0x10] sm:$0xff]
    %v2334 = vld [vmem:[%s10 + $0x18] sm:$0xff]
    %v2335 = vld [vmem:[%s11] sm:$0x1]
    %v2337 = vlaneseq
    %v2338 = vshrl.u32 %v2337, 7
    %v2339 = vsub.s32 0, %v2338
    %v2340 = vrot.slane %v2335, %v2339
    %v2343 = vsel %vm182, %v2330, 0
    %2345 = vmatprep.subr.mxu0 0.0
    %2346 = vmatpush1.msra.mxu0 0.0
    %2347 = vmatprep.subr.mxu0 0.0
    %2348 = vmatpush1.msra.mxu0 0.0
    %2349 = vmatprep.subr.mxu0 0.0
    %2350 = vmatpush1.msra.mxu0 0.0
    %2351 = vmatprep.subr.mxu0 0.0
    %2352 = vmatpush1.msra.mxu0 0.0
    %2353 = vmatprep.subr.mxu0 0.0
    %2354 = vmatpush1.msra.mxu0 0.0
    %2355 = vmatprep.subr.mxu0 0.0
    %2356 = vmatpush1.msra.mxu0 0.0
    %2357 = vmatprep.subr.mxu0 0.0
    %2358 = vmatpush1.msra.mxu0 0.0
    %2359 = vmatprep.subr.mxu0 0.0
    %2360 = vmatpush1.msra.mxu0 0.0
    %2361 = vmatprep.subr.mxu0 0.0
    %2362 = vmatpush1.msra.mxu0 0.0
    %2363 = vmatprep.subr.mxu0 0.0
    %2364 = vmatpush1.msra.mxu0 0.0
    %2365 = vmatprep.subr.mxu0 0.0
    %2366 = vmatpush1.msra.mxu0 0.0
    %2367 = vmatprep.subr.mxu0 0.0
    %2368 = vmatpush1.msra.mxu0 0.0
    %2369 = vmatprep.subr.mxu0 0.0
    %2370 = vmatpush1.msra.mxu0 %v2334
    %2371 = vmatprep.subr.mxu0 0.0
    %2372 = vmatpush1.msra.mxu0 %v2333
    %2373 = vmatprep.subr.mxu0 0.0
    %2374 = vmatpush1.msra.mxu0 %v2332
    %2375 = vmatprep.subr.mxu0 0.0
    %2376 = vmatpush1.msra.mxu0 %v2331
    %2377 = vmatprep.subr.mxu0 0.0
    %2378 = vmatpush2.msra.mxu0 0.0
    %2379 = vmatprep.subr.mxu0 0.0
    %2380 = vmatpush2.msra.mxu0 0.0
    %2381 = vmatprep.subr.mxu0 0.0
    %2382 = vmatpush2.msra.mxu0 0.0
    %2383 = vmatprep.subr.mxu0 0.0
    %2384 = vmatpush2.msra.mxu0 0.0
    %2385 = vmatprep.subr.mxu0 0.0
    %2386 = vmatpush2.msra.mxu0 0.0
    %2387 = vmatprep.subr.mxu0 0.0
    %2388 = vmatpush2.msra.mxu0 0.0
    %2389 = vmatprep.subr.mxu0 0.0
    %2390 = vmatpush2.msra.mxu0 0.0
    %2391 = vmatprep.subr.mxu0 0.0
    %2392 = vmatpush2.msra.mxu0 0.0
    %2393 = vmatprep.subr.mxu0 0.0
    %2394 = vmatpush2.msra.mxu0 0.0
    %2395 = vmatprep.subr.mxu0 0.0
    %2396 = vmatpush2.msra.mxu0 0.0
    %2397 = vmatprep.subr.mxu0 0.0
    %2398 = vmatpush2.msra.mxu0 0.0
    %2399 = vmatprep.subr.mxu0 0.0
    %2400 = vmatpush2.msra.mxu0 0.0
    %2401 = vmatprep.subr.mxu0 0.0
    %2402 = vmatpush2.msra.mxu0 0.0
    %2403 = vmatprep.subr.mxu0 0.0
    %2404 = vmatpush2.msra.mxu0 0.0
    %2405 = vmatprep.subr.mxu0 0.0
    %2406 = vmatpush2.msra.mxu0 0.0
    %2407 = vmatprep.subr.mxu0 0.0
    %2408 = vmatpush2.msra.mxu0 0.0
    %2409 = vmatprep.mubr.f32.mxu0 0.0
    %2410 = vmatmul.mubr.f32.gmra.mxu0 %v2343
    %v2411 = vpop.f32.mrf.mxu0
    %v2412 = vadd.f32 %v2340, %v2411
    %v2413 = vpop.f32.mrf.mxu0
    %2414 = vdwg.mxu0
    %v2415 = vmul.f32 %v2412, %v2412
    %v2416 = vmul.f32 %v2412, %v2415
    %v2417 = vmul.f32 %v2416, 0.044715
    %v2418 = vadd.f32 %v2412, %v2417
    %v2419 = vmul.f32 %v2418, 0.7978846
    %v2420 = vtanh.pop %v2419
    %v2421 = vadd.f32 %v2420, 1.0
    %v2422 = vmul.f32 %v2421, 0.5
    %v2423 = vmul.f32 %v2412, %v2422
    %v2424 = vld [vmem:[%s12] sm:$0xff]
    %v2425 = vld [vmem:[%s12 + $0x8] sm:$0xff]
    %v2426 = vld [vmem:[%s13] sm:$0x1]
    %v2428 = vlaneseq
    %v2429 = vshrl.u32 %v2428, 7
    %v2430 = vsub.s32 0, %v2429
    %v2431 = vrot.slane %v2426, %v2430
    %v2434 = vsel %vm62, %v2423, 0
    %2436 = vmatprep.subr.mxu0 0.0
    %2437 = vmatpush1.msra.mxu0 0.0
    %2438 = vmatprep.subr.mxu0 0.0
    %2439 = vmatpush1.msra.mxu0 0.0
    %2440 = vmatprep.subr.mxu0 0.0
    %2441 = vmatpush1.msra.mxu0 0.0
    %2442 = vmatprep.subr.mxu0 0.0
    %2443 = vmatpush1.msra.mxu0 0.0
    %2444 = vmatprep.subr.mxu0 0.0
    %2445 = vmatpush1.msra.mxu0 0.0
    %2446 = vmatprep.subr.mxu0 0.0
    %2447 = vmatpush1.msra.mxu0 0.0
    %2448 = vmatprep.subr.mxu0 0.0
    %2449 = vmatpush1.msra.mxu0 0.0
    %2450 = vmatprep.subr.mxu0 0.0
    %2451 = vmatpush1.msra.mxu0 0.0
    %2452 = vmatprep.subr.mxu0 0.0
    %2453 = vmatpush1.msra.mxu0 0.0
    %2454 = vmatprep.subr.mxu0 0.0
    %2455 = vmatpush1.msra.mxu0 0.0
    %2456 = vmatprep.subr.mxu0 0.0
    %2457 = vmatpush1.msra.mxu0 0.0
    %2458 = vmatprep.subr.mxu0 0.0
    %2459 = vmatpush1.msra.mxu0 0.0
    %2460 = vmatprep.subr.mxu0 0.0
    %2461 = vmatpush1.msra.mxu0 0.0
    %2462 = vmatprep.subr.mxu0 0.0
    %2463 = vmatpush1.msra.mxu0 0.0
    %2464 = vmatprep.subr.mxu0 0.0
    %2465 = vmatpush1.msra.mxu0 %v2425
    %2466 = vmatprep.subr.mxu0 0.0
    %2467 = vmatpush1.msra.mxu0 %v2424
    %2468 = vmatprep.subr.mxu0 0.0
    %2469 = vmatpush2.msra.mxu0 0.0
    %2470 = vmatprep.subr.mxu0 0.0
    %2471 = vmatpush2.msra.mxu0 0.0
    %2472 = vmatprep.subr.mxu0 0.0
    %2473 = vmatpush2.msra.mxu0 0.0
    %2474 = vmatprep.subr.mxu0 0.0
    %2475 = vmatpush2.msra.mxu0 0.0
    %2476 = vmatprep.subr.mxu0 0.0
    %2477 = vmatpush2.msra.mxu0 0.0
    %2478 = vmatprep.subr.mxu0 0.0
    %2479 = vmatpush2.msra.mxu0 0.0
    %2480 = vmatprep.subr.mxu0 0.0
    %2481 = vmatpush2.msra.mxu0 0.0
    %2482 = vmatprep.subr.mxu0 0.0
    %2483 = vmatpush2.msra.mxu0 0.0
    %2484 = vmatprep.subr.mxu0 0.0
    %2485 = vmatpush2.msra.mxu0 0.0
    %2486 = vmatprep.subr.mxu0 0.0
    %2487 = vmatpush2.msra.mxu0 0.0
    %2488 = vmatprep.subr.mxu0 0.0
    %2489 = vmatpush2.msra.mxu0 0.0
    %2490 = vmatprep.subr.mxu0 0.0
    %2491 = vmatpush2.msra.mxu0 0.0
    %2492 = vmatprep.subr.mxu0 0.0
    %2493 = vmatpush2.msra.mxu0 0.0
    %2494 = vmatprep.subr.mxu0 0.0
    %2495 = vmatpush2.msra.mxu0 0.0
    %2496 = vmatprep.subr.mxu0 0.0
    %2497 = vmatpush2.msra.mxu0 0.0
    %2498 = vmatprep.subr.mxu0 0.0
    %2499 = vmatpush2.msra.mxu0 0.0
    %2500 = vmatprep.mubr.f32.mxu0 0.0
    %2501 = vmatmul.mubr.f32.gmra.mxu0 %v2434
    %v2502 = vpop.f32.mrf.mxu0
    %v2503 = vadd.f32 %v2431, %v2502
    %v2504 = vpop.f32.mrf.mxu0
    %2505 = vdwg.mxu0
    %vm2506 = vcmask 33792
    %2507 = vst.msk [vmem:[#allocation5] sm:$0x3] %vm2506, %v2503
    %2508 = vst.msk [vmem:[#allocation7] sm:$0x3] %vm772, %v2330
    // Predicated region
    $region58: #{forward.1} parent=1 // pred_check
      _
    $region59: #{forward.1} parent=1 // pred_check_branch
      %2510 = sbr.rel (0) target = $region61
    $region60: #{forward.1} parent=1 // pred_region
      %s2512 = ssub.s32 32, 32
      %2513 = vsyncadd [#allocation6], %s2512
      %s2515 = sshll.u32 [#allocation5], 4
      %s2516 = int_to_ptr.vmem [resolvable:$true] %s2515
      %2518 = dma.vmem_to_hbm [thread:$0]  %s2516, 32, %s14, [#allocation6]
    $region61: #{forward.1} parent=1 // pred_fallthru
      _
    // Predicated region
    $region62: #{forward.1} parent=1 // pred_check
      _
    $region63: #{forward.1} parent=1 // pred_check_branch
      %2520 = sbr.rel (0) target = $region65
    $region64: #{forward.1} parent=1 // pred_region
      %s2522 = ssub.s32 32, 32
      %2523 = vsyncadd [#allocation8], %s2522
      %s2525 = sshll.u32 [#allocation7], 4
      %s2526 = int_to_ptr.vmem [resolvable:$true] %s2525
      %2528 = dma.vmem_to_hbm [thread:$0]  %s2526, 32, %s15, [#allocation8]
    $region65: #{forward.1} parent=1 // pred_fallthru
      _
    // Predicated region
    $region66: #{forward.1} parent=1 // pred_check
      _
    $region67: #{forward.1} parent=1 // pred_check_branch
      %2530 = sbr.rel (0) target = $region69
    $region68: #{forward.1} parent=1 // pred_region
      %2531 = dma.done [#allocation6], 32
    $region69: #{forward.1} parent=1 // pred_fallthru
      _
    // Predicated region
    $region70: #{forward.1} parent=1 // pred_check
      _
    $region71: #{forward.1} parent=1 // pred_check_branch
      %2533 = sbr.rel (0) target = $region73
    $region72: #{forward.1} parent=1 // pred_region
      %2534 = dma.done [#allocation8], 32
    $region73: #{forward.1} parent=1 // pred_fallthru
      _
    %2535 = vsyncpa [#allocation6], 1
    %2536 = vsyncpa [#allocation8], 1

</llo_original>
